<compile_context>
chip_gen: v7x
topology: tpu7x:2x2x1
jax: 0.10.0
libtpu: 0.0.40
codegen_flags: <defaults>
</compile_context>

<pallas_src>
import functools
import math

import jax
import jax.numpy as jnp
from jax.experimental import pallas as pl
from jax.experimental.pallas import tpu as pltpu


def _layernorm(x, gamma, beta, eps=1e-5):
    # PyTorch nn.LayerNorm: biased variance over last dim, eps=1e-5.
    mean = jnp.mean(x, axis=-1, keepdims=True)
    var = jnp.mean((x - mean) ** 2, axis=-1, keepdims=True)
    return (x - mean) * jax.lax.rsqrt(var + eps) * gamma + beta


def _seq_transformer_kernel(
    # ---- inputs (per grid step blocks) ----
    x_ref,                      # (1, n, patch_dim)      one sample (batch grid axis)
    w_emb_ref,                  # (patch_dim, dim)
    b_emb_ref,                  # (1, dim)
    c_tok_ref,                  # (1, dim)
    ln1_g_ref, ln1_b_ref,       # (1, 1, dim)            streamed per layer
    w_q_ref, w_k_ref, w_v_ref,  # (1, heads, dim, head_dim)
    w_out_ref,                  # (1, heads, head_dim, dim)
    b_out_ref,                  # (1, 1, dim)
    ln2_g_ref, ln2_b_ref,       # (1, 1, dim)
    fc1_w_ref,                  # (1, dim, fc_dim)
    fc1_b_ref,                  # (1, 1, fc_dim)
    fc2_w_ref,                  # (1, fc_dim, dim)
    fc2_b_ref,                  # (1, 1, dim)
    # ---- outputs ----
    out_ref,                    # (1, 1, dim)            class token of this sample
    # ---- scratch ----
    x_scratch,                  # (N, dim) f32, persists across the depth grid axis
    *, depth, heads, dim, n_tokens, matmul_dtype,
):
    l = pl.program_id(1)                    # layer index (inner, "arbitrary" axis)
    scale = dim ** (-0.5)                   # module scales by full dim ** -0.5
    md = matmul_dtype

    # ---- first layer step: patch embedding + class token written in place ----
    @pl.when(l == 0)
    def _embed():
        seq = x_ref[0]                                              # (n, patch_dim)
        emb = jnp.dot(seq.astype(md), w_emb_ref[...].astype(md),
                      preferred_element_type=jnp.float32) + b_emb_ref[...]
        x_scratch[0:1, :] = c_tok_ref[...]                          # class token row
        x_scratch[1:, :] = emb                                      # patch rows

    x = x_scratch[...]                                              # (N, dim)

    # ================= Residual(PreNorm(Attention)) =================
    h = _layernorm(x, ln1_g_ref[0], ln1_b_ref[0])
    hb = jnp.broadcast_to(h.astype(md)[None], (heads, n_tokens, dim))
    wq = w_q_ref[0].astype(md)                                      # (heads, dim, hd)
    wk = w_k_ref[0].astype(md)
    wv = w_v_ref[0].astype(md)

    # all heads at once: 3-D batched einsums (no per-head slicing / concat)
    q = jnp.einsum('hnd,hde->hne', hb, wq, preferred_element_type=jnp.float32)
    k = jnp.einsum('hnd,hde->hne', hb, wk, preferred_element_type=jnp.float32)
    v = jnp.einsum('hnd,hde->hne', hb, wv, preferred_element_type=jnp.float32)

    dots = jnp.einsum('hie,hje->hij', q.astype(md), k.astype(md),
                      preferred_element_type=jnp.float32) * scale   # (heads, N, N)
    m = jnp.max(dots, axis=-1, keepdims=True)
    p = jnp.exp(dots - m)
    attn = p * pl.reciprocal(jnp.sum(p, axis=-1, keepdims=True), approx=True)

    o = jnp.einsum('hij,hje->hie', attn.astype(md), v.astype(md),
                   preferred_element_type=jnp.float32)              # (heads, N, hd)

    wo = w_out_ref[0].astype(md)                                    # (heads, hd, dim)
    per_head = jnp.einsum('hie,hed->hid', o.astype(md), wo,
                          preferred_element_type=jnp.float32)       # (heads, N, dim)
    x = x + jnp.sum(per_head, axis=0) + b_out_ref[0]

    # ================= Residual(PreNorm(FeedForward)) =================
    h2 = _layernorm(x, ln2_g_ref[0], ln2_b_ref[0])
    f = jnp.dot(h2.astype(md), fc1_w_ref[0].astype(md),
                preferred_element_type=jnp.float32) + fc1_b_ref[0]
    f = jnp.maximum(f, 0.0)
    f = jnp.dot(f.astype(md), fc2_w_ref[0].astype(md),
                preferred_element_type=jnp.float32) + fc2_b_ref[0]
    x = x + f

    x_scratch[...] = x

    @pl.when(l == depth - 1)
    def _emit():
        out_ref[...] = jnp.reshape(x[0:1, :], (1, 1, dim))          # class token


def _fixed_spec(shape):
    zeros = (0,) * len(shape)
    return pl.BlockSpec(tuple(shape), lambda b, l: zeros)


def _per_layer_spec(shape):
    zeros = (0,) * (len(shape) - 1)
    return pl.BlockSpec((1,) + tuple(shape[1:]), lambda b, l: (l,) + zeros)


def seq_transformer(forward_seq, params, *, depth, heads, dim,
                    matmul_dtype=jnp.float32, vmem_limit_bytes=None):
    batch, n, patch_dim = forward_seq.shape
    assert dim % heads == 0
    n_tokens = n + 1

    kernel = functools.partial(
        _seq_transformer_kernel, depth=depth, heads=heads, dim=dim,
        n_tokens=n_tokens, matmul_dtype=matmul_dtype)

    args = (forward_seq,
            params["w_emb"], params["b_emb"], params["c_tok"],
            params["ln1_g"], params["ln1_b"],
            params["w_q"], params["w_k"], params["w_v"],
            params["w_out"], params["b_out"],
            params["ln2_g"], params["ln2_b"],
            params["fc1_w"], params["fc1_b"], params["fc2_w"], params["fc2_b"])

    in_specs = [pl.BlockSpec((1, n, patch_dim), lambda b, l: (b, 0, 0))]
    block_shapes = [(1, n, patch_dim)]
    for i, a in enumerate(args[1:]):
        if i < 3:                               # w_emb, b_emb, c_tok: resident
            in_specs.append(_fixed_spec(a.shape))
            block_shapes.append(tuple(a.shape))
        else:                                   # per-layer stacks: streamed over depth
            in_specs.append(_per_layer_spec(a.shape))
            block_shapes.append((1,) + tuple(a.shape[1:]))

    out_specs = pl.BlockSpec((1, 1, dim), lambda b, l: (b, 0, 0))

    if vmem_limit_bytes is None:
        # Size the scoped VMEM limit to the real (double-buffered) working set.
        per_step = sum(math.prod(bs) * a.dtype.itemsize
                       for bs, a in zip(block_shapes, args))
        per_step += n_tokens * dim * 4          # activation scratch
        per_step += dim * 4                     # output block
        vmem_limit_bytes = int(min(32 * 1024 * 1024,
                                   max(8 * 1024 * 1024, 4 * per_step)))

    grid_spec = pltpu.PrefetchScalarGridSpec(
        num_scalar_prefetch=0,
        grid=(batch, depth),
        in_specs=in_specs,
        out_specs=out_specs,
        scratch_shapes=[pltpu.VMEM((n_tokens, dim), jnp.float32)],
    )

    out = pl.pallas_call(
        kernel,
        out_shape=jax.ShapeDtypeStruct((batch, 1, dim), jnp.float32),
        grid_spec=grid_spec,
        compiler_params=pltpu.CompilerParams(
            dimension_semantics=("parallel", "arbitrary"),
            vmem_limit_bytes=vmem_limit_bytes),
    )(*args)
    return out[:, 0, :]


def init_params(key, *, patch_dim, dim, depth, heads, fc_dim, dtype=jnp.float32):
    """Head-major parameter layout used by the kernel.

    Mapping from the PyTorch module (per layer l, head_dim = dim // heads):
      w_q[l] = to_qkv.weight[:dim].T.reshape(dim, heads, hd).transpose(1, 0, 2)
      (same for k / v with the next dim-sized row chunks)
      w_out[l] = to_out[0].weight.T.reshape(heads, hd, dim)
      fc*_w[l] = linear.weight.T ; all biases / LN params as stored.
    """
    hd = dim // heads
    ks = jax.random.split(key, 12)
    s = 0.05
    return {
        "w_emb": (jax.random.normal(ks[0], (patch_dim, dim)) * s).astype(dtype),
        "b_emb": (jax.random.normal(ks[1], (1, dim)) * s).astype(dtype),
        "c_tok": jax.random.normal(ks[2], (1, dim)).astype(dtype),
        "ln1_g": jnp.ones((depth, 1, dim), dtype),
        "ln1_b": jnp.zeros((depth, 1, dim), dtype),
        "w_q": (jax.random.normal(ks[3], (depth, heads, dim, hd)) * s).astype(dtype),
        "w_k": (jax.random.normal(ks[4], (depth, heads, dim, hd)) * s).astype(dtype),
        "w_v": (jax.random.normal(ks[5], (depth, heads, dim, hd)) * s).astype(dtype),
        "w_out": (jax.random.normal(ks[6], (depth, heads, hd, dim)) * s).astype(dtype),
        "b_out": (jax.random.normal(ks[7], (depth, 1, dim)) * s).astype(dtype),
        "ln2_g": jnp.ones((depth, 1, dim), dtype),
        "ln2_b": jnp.zeros((depth, 1, dim), dtype),
        "fc1_w": (jax.random.normal(ks[8], (depth, dim, fc_dim)) * s).astype(dtype),
        "fc1_b": (jax.random.normal(ks[9], (depth, 1, fc_dim)) * s).astype(dtype),
        "fc2_w": (jax.random.normal(ks[10], (depth, fc_dim, dim)) * s).astype(dtype),
        "fc2_b": (jax.random.normal(ks[11], (depth, 1, dim)) * s).astype(dtype),
    }


def seq_transformer_reference(forward_seq, params, *, depth, heads, dim):
    """Pure-JAX port of the PyTorch Seq_Transformer forward (eval mode)."""
    b = forward_seq.shape[0]
    scale = dim ** (-0.5)
    x = jnp.einsum('bnp,pd->bnd', forward_seq, params["w_emb"]) + params["b_emb"][None]
    c = jnp.broadcast_to(params["c_tok"][None], (b, 1, dim))
    x = jnp.concatenate([c, x], axis=1)
    for l in range(depth):
        h = _layernorm(x, params["ln1_g"][l, 0], params["ln1_b"][l, 0])
        q = jnp.einsum('bnd,hde->bhne', h, params["w_q"][l])
        k = jnp.einsum('bnd,hde->bhne', h, params["w_k"][l])
        v = jnp.einsum('bnd,hde->bhne', h, params["w_v"][l])
        dots = jnp.einsum('bhie,bhje->bhij', q, k) * scale
        attn = jax.nn.softmax(dots, axis=-1)
        o = jnp.einsum('bhij,bhje->bhie', attn, v)
        x = x + jnp.einsum('bhie,hed->bid', o, params["w_out"][l]) + params["b_out"][l, 0]
        h2 = _layernorm(x, params["ln2_g"][l, 0], params["ln2_b"][l, 0])
        f = jnp.maximum(jnp.einsum('bnd,df->bnf', h2, params["fc1_w"][l])
                        + params["fc1_b"][l, 0], 0.0)
        f = jnp.einsum('bnf,fd->bnd', f, params["fc2_w"][l]) + params["fc2_b"][l, 0]
        x = x + f
    return x[:, 0]


if __name__ == "__main__":
    # patch_size=8, channels=2 -> patch_dim=16; dim=32, depth=2, heads=4, fc_dim=64
    patch_size, channels = 8, 2
    patch_dim = channels * patch_size
    dim, depth, heads, fc_dim = 32, 2, 4, 64
    batch, seq_len = 2, 8

    key = jax.random.PRNGKey(0)
    k_in, k_par = jax.random.split(key)
    forward_seq = jax.random.normal(k_in, (batch, seq_len, patch_dim), jnp.float32)
    params = init_params(k_par, patch_dim=patch_dim, dim=dim, depth=depth,
                         heads=heads, fc_dim=fc_dim)

    c_t = seq_transformer(forward_seq, params, depth=depth, heads=heads, dim=dim)
    c_t = jax.block_until_ready(c_t)
    assert c_t.shape == (batch, dim)
    assert bool(jnp.all(jnp.isfinite(c_t)))

    with jax.default_matmul_precision("float32"):
        ref = seq_transformer_reference(forward_seq, params,
                                        depth=depth, heads=heads, dim=dim)
    assert jnp.allclose(c_t, ref, rtol=2e-2, atol=2e-2), \
        float(jnp.max(jnp.abs(c_t - ref)))

    print("KERNEL_OK")
</pallas_src>

<mosaic_0001>
module attributes {stable_mosaic.version = 11 : i64} {
  func.func @_seq_transformer_kernel(%arg0: i32, %arg1: i32, %arg2: memref<1x8x16xf32, #tpu.memory_space<vmem>>, %arg3: memref<16x32xf32, #tpu.memory_space<vmem>>, %arg4: memref<1x32xf32, #tpu.memory_space<vmem>>, %arg5: memref<1x32xf32, #tpu.memory_space<vmem>>, %arg6: memref<1x1x32xf32, #tpu.memory_space<vmem>>, %arg7: memref<1x1x32xf32, #tpu.memory_space<vmem>>, %arg8: memref<1x4x32x8xf32, #tpu.memory_space<vmem>>, %arg9: memref<1x4x32x8xf32, #tpu.memory_space<vmem>>, %arg10: memref<1x4x32x8xf32, #tpu.memory_space<vmem>>, %arg11: memref<1x4x8x32xf32, #tpu.memory_space<vmem>>, %arg12: memref<1x1x32xf32, #tpu.memory_space<vmem>>, %arg13: memref<1x1x32xf32, #tpu.memory_space<vmem>>, %arg14: memref<1x1x32xf32, #tpu.memory_space<vmem>>, %arg15: memref<1x32x64xf32, #tpu.memory_space<vmem>>, %arg16: memref<1x1x64xf32, #tpu.memory_space<vmem>>, %arg17: memref<1x64x32xf32, #tpu.memory_space<vmem>>, %arg18: memref<1x1x32xf32, #tpu.memory_space<vmem>>, %arg19: memref<1x1x32xf32, #tpu.memory_space<vmem>>, %arg20: memref<9x32xf32, #tpu.memory_space<vmem>>) attributes {dimension_semantics = [#tpu.dimension_semantics<parallel>, #tpu.dimension_semantics<arbitrary>], iteration_bounds = array<i64: 2, 2>, scalar_prefetch = 0 : i64, scratch_operands = 1 : i64, tpu.core_type = #tpu.core_type<tc>, window_params = [{transform_indices = @transform_0, window_bounds = array<i64: 1, 8, 16>}, {pipeline_mode = #tpu.pipeline_mode<synchronous>, transform_indices = @transform_1, window_bounds = array<i64: 16, 32>}, {pipeline_mode = #tpu.pipeline_mode<synchronous>, transform_indices = @transform_2, window_bounds = array<i64: 1, 32>}, {pipeline_mode = #tpu.pipeline_mode<synchronous>, transform_indices = @transform_3, window_bounds = array<i64: 1, 32>}, {transform_indices = @transform_4, window_bounds = array<i64: 1, 1, 32>}, {transform_indices = @transform_5, window_bounds = array<i64: 1, 1, 32>}, {transform_indices = @transform_6, window_bounds = array<i64: 1, 4, 32, 8>}, {transform_indices = @transform_7, window_bounds = array<i64: 1, 4, 32, 8>}, {transform_indices = @transform_8, window_bounds = array<i64: 1, 4, 32, 8>}, {transform_indices = @transform_9, window_bounds = array<i64: 1, 4, 8, 32>}, {transform_indices = @transform_10, window_bounds = array<i64: 1, 1, 32>}, {transform_indices = @transform_11, window_bounds = array<i64: 1, 1, 32>}, {transform_indices = @transform_12, window_bounds = array<i64: 1, 1, 32>}, {transform_indices = @transform_13, window_bounds = array<i64: 1, 32, 64>}, {transform_indices = @transform_14, window_bounds = array<i64: 1, 1, 64>}, {transform_indices = @transform_15, window_bounds = array<i64: 1, 64, 32>}, {transform_indices = @transform_16, window_bounds = array<i64: 1, 1, 32>}, {transform_indices = @transform_17, window_bounds = array<i64: 1, 1, 32>}]} {
    %c0_i32 = arith.constant 0 : i32
    %0 = arith.cmpi eq, %arg1, %c0_i32 : i32
    %1 = arith.extui %0 : i1 to i32
    %c0_i32_0 = arith.constant 0 : i32
    %2 = arith.cmpi ne, %1, %c0_i32_0 : i32
    scf.if %2 {
      %c0_70 = arith.constant 0 : index
      %c0_71 = arith.constant 0 : index
      %c0_72 = arith.constant 0 : index
      %112 = vector.load %arg2[%c0_70, %c0_71, %c0_72] : memref<1x8x16xf32, #tpu.memory_space<vmem>>, vector<1x8x16xf32>
      %113 = vector.shape_cast %112 : vector<1x8x16xf32> to vector<8x16xf32>
      %c0_73 = arith.constant 0 : index
      %c0_74 = arith.constant 0 : index
      %114 = vector.load %arg3[%c0_73, %c0_74] : memref<16x32xf32, #tpu.memory_space<vmem>>, vector<16x32xf32>
      %cst_75 = arith.constant dense<0.000000e+00> : vector<8x32xf32>
      %115 = tpu.matmul %113, %114, %cst_75 {dimension_numbers = #tpu.dot_dimension_numbers<[1], [0], [0], [1], [0, 0, 1, 1], [], []>} : vector<8x16xf32>, vector<16x32xf32>, vector<8x32xf32> -> vector<8x32xf32>
      %c0_76 = arith.constant 0 : index
      %c0_77 = arith.constant 0 : index
      %116 = vector.load %arg4[%c0_76, %c0_77] : memref<1x32xf32, #tpu.memory_space<vmem>>, vector<1x32xf32>
      %117 = vector.broadcast %116 : vector<1x32xf32> to vector<8x32xf32>
      %118 = arith.addf %115, %117 : vector<8x32xf32>
      %c0_78 = arith.constant 0 : index
      %c0_79 = arith.constant 0 : index
      %119 = vector.load %arg5[%c0_78, %c0_79] : memref<1x32xf32, #tpu.memory_space<vmem>>, vector<1x32xf32>
      %c0_80 = arith.constant 0 : index
      %c0_81 = arith.constant 0 : index
      %120 = vector.load %arg20[%c0_80, %c0_81] : memref<9x32xf32, #tpu.memory_space<vmem>>, vector<1x32xf32>
      tpu.vector_store %arg20[%c0_80, %c0_81], %119 {strides = array<i32>} : memref<9x32xf32, #tpu.memory_space<vmem>>, vector<1x32xf32>,
      %c1 = arith.constant 1 : index
      %c0_82 = arith.constant 0 : index
      %121 = vector.load %arg20[%c1, %c0_82] : memref<9x32xf32, #tpu.memory_space<vmem>>, vector<8x32xf32>
      tpu.vector_store %arg20[%c1, %c0_82], %118 {strides = array<i32>} : memref<9x32xf32, #tpu.memory_space<vmem>>, vector<8x32xf32>,
    } else {
    }
    %c0 = arith.constant 0 : index
    %c0_1 = arith.constant 0 : index
    %3 = vector.load %arg20[%c0, %c0_1] : memref<9x32xf32, #tpu.memory_space<vmem>>, vector<9x32xf32>
    %c0_2 = arith.constant 0 : index
    %c0_3 = arith.constant 0 : index
    %c0_4 = arith.constant 0 : index
    %4 = vector.load %arg6[%c0_2, %c0_3, %c0_4] : memref<1x1x32xf32, #tpu.memory_space<vmem>>, vector<1x1x32xf32>
    %5 = vector.shape_cast %4 : vector<1x1x32xf32> to vector<1x32xf32>
    %c0_5 = arith.constant 0 : index
    %c0_6 = arith.constant 0 : index
    %c0_7 = arith.constant 0 : index
    %6 = vector.load %arg7[%c0_5, %c0_6, %c0_7] : memref<1x1x32xf32, #tpu.memory_space<vmem>>, vector<1x1x32xf32>
    %7 = vector.shape_cast %6 : vector<1x1x32xf32> to vector<1x32xf32>
    %cst = arith.constant dense<0.000000e+00> : vector<9xf32>
    %8 = vector.multi_reduction <add>, %3, %cst [1] : vector<9x32xf32> to vector<9xf32>
    %9 = vector.shape_cast %8 : vector<9xf32> to vector<9x1xf32>
    %cst_8 = arith.constant 3.200000e+01 : f32
    %10 = vector.broadcast %cst_8 : f32 to vector<9x1xf32>
    %11 = arith.divf %9, %10 : vector<9x1xf32>
    %12 = vector.broadcast %11 : vector<9x1xf32> to vector<9x32xf32>
    %13 = arith.subf %3, %12 : vector<9x32xf32>
    %14 = arith.mulf %13, %13 : vector<9x32xf32>
    %cst_9 = arith.constant dense<0.000000e+00> : vector<9xf32>
    %15 = vector.multi_reduction <add>, %14, %cst_9 [1] : vector<9x32xf32> to vector<9xf32>
    %16 = vector.shape_cast %15 : vector<9xf32> to vector<9x1xf32>
    %cst_10 = arith.constant 3.200000e+01 : f32
    %17 = vector.broadcast %cst_10 : f32 to vector<9x1xf32>
    %18 = arith.divf %16, %17 : vector<9x1xf32>
    %19 = vector.broadcast %11 : vector<9x1xf32> to vector<9x32xf32>
    %20 = arith.subf %3, %19 : vector<9x32xf32>
    %cst_11 = arith.constant 9.99999974E-6 : f32
    %21 = vector.broadcast %cst_11 : f32 to vector<9x1xf32>
    %22 = arith.addf %18, %21 : vector<9x1xf32>
    %23 = math.rsqrt %22 : vector<9x1xf32>
    %24 = vector.broadcast %23 : vector<9x1xf32> to vector<9x32xf32>
    %25 = arith.mulf %20, %24 : vector<9x32xf32>
    %26 = vector.broadcast %5 : vector<1x32xf32> to vector<9x32xf32>
    %27 = arith.mulf %25, %26 : vector<9x32xf32>
    %28 = vector.broadcast %7 : vector<1x32xf32> to vector<9x32xf32>
    %29 = arith.addf %27, %28 : vector<9x32xf32>
    %30 = vector.shape_cast %29 : vector<9x32xf32> to vector<1x9x32xf32>
    %31 = vector.shape_cast %30 : vector<1x9x32xf32> to vector<1x9x32xf32>
    %32 = vector.broadcast %31 : vector<1x9x32xf32> to vector<4x9x32xf32>
    %c0_12 = arith.constant 0 : index
    %c0_13 = arith.constant 0 : index
    %c0_14 = arith.constant 0 : index
    %c0_15 = arith.constant 0 : index
    %33 = vector.load %arg8[%c0_12, %c0_13, %c0_14, %c0_15] : memref<1x4x32x8xf32, #tpu.memory_space<vmem>>, vector<1x4x32x8xf32>
    %34 = vector.shape_cast %33 : vector<1x4x32x8xf32> to vector<4x32x8xf32>
    %c0_16 = arith.constant 0 : index
    %c0_17 = arith.constant 0 : index
    %c0_18 = arith.constant 0 : index
    %c0_19 = arith.constant 0 : index
    %35 = vector.load %arg9[%c0_16, %c0_17, %c0_18, %c0_19] : memref<1x4x32x8xf32, #tpu.memory_space<vmem>>, vector<1x4x32x8xf32>
    %36 = vector.shape_cast %35 : vector<1x4x32x8xf32> to vector<4x32x8xf32>
    %c0_20 = arith.constant 0 : index
    %c0_21 = arith.constant 0 : index
    %c0_22 = arith.constant 0 : index
    %c0_23 = arith.constant 0 : index
    %37 = vector.load %arg10[%c0_20, %c0_21, %c0_22, %c0_23] : memref<1x4x32x8xf32, #tpu.memory_space<vmem>>, vector<1x4x32x8xf32>
    %38 = vector.shape_cast %37 : vector<1x4x32x8xf32> to vector<4x32x8xf32>
    "tpu.trace_start"() <{level = 10 : i32, message = "hnd,hde->hne"}> : () -> ()
    %cst_24 = arith.constant dense<0.000000e+00> : vector<4x9x8xf32>
    %39 = tpu.matmul %32, %34, %cst_24 {dimension_numbers = #tpu.dot_dimension_numbers<[2], [1], [1], [2], [0, 0, 0, 1, 1, 2], [0], [0]>} : vector<4x9x32xf32>, vector<4x32x8xf32>, vector<4x9x8xf32> -> vector<4x9x8xf32>
    %cst_25 = arith.constant dense<0.000000e+00> : vector<4x9x8xf32>
    %40 = tpu.matmul %32, %36, %cst_25 {dimension_numbers = #tpu.dot_dimension_numbers<[2], [1], [1], [2], [0, 0, 0, 1, 1, 2], [0], [0]>} : vector<4x9x32xf32>, vector<4x32x8xf32>, vector<4x9x8xf32> -> vector<4x9x8xf32>
    %cst_26 = arith.constant dense<0.000000e+00> : vector<4x9x8xf32>
    %41 = tpu.matmul %32, %38, %cst_26 {dimension_numbers = #tpu.dot_dimension_numbers<[2], [1], [1], [2], [0, 0, 0, 1, 1, 2], [0], [0]>} : vector<4x9x32xf32>, vector<4x32x8xf32>, vector<4x9x8xf32> -> vector<4x9x8xf32>
    "tpu.trace_stop"() : () -> ()
    "tpu.trace_start"() <{level = 10 : i32, message = "hie,hje->hij"}> : () -> ()
    %cst_27 = arith.constant dense<0.000000e+00> : vector<4x9x9xf32>
    %42 = tpu.matmul %39, %40, %cst_27 {dimension_numbers = #tpu.dot_dimension_numbers<[2], [2], [1], [1], [0, 0, 0, 1, 1, 1], [0], [0]>} : vector<4x9x8xf32>, vector<4x9x8xf32>, vector<4x9x9xf32> -> vector<4x9x9xf32>
    "tpu.trace_stop"() : () -> ()
    %cst_28 = arith.constant 0.176776692 : f32
    %43 = vector.broadcast %cst_28 : f32 to vector<4x9x9xf32>
    %44 = arith.mulf %42, %43 : vector<4x9x9xf32>
    %cst_29 = arith.constant dense<0xFF800000> : vector<4x9xf32>
    %45 = vector.multi_reduction <maximumf>, %44, %cst_29 [2] : vector<4x9x9xf32> to vector<4x9xf32>
    %46 = vector.shape_cast %45 : vector<4x9xf32> to vector<4x9x1xf32>
    %47 = vector.broadcast %46 : vector<4x9x1xf32> to vector<4x9x9xf32>
    %48 = arith.subf %44, %47 : vector<4x9x9xf32>
    %49 = math.exp %48 : vector<4x9x9xf32>
    %cst_30 = arith.constant dense<0.000000e+00> : vector<4x9xf32>
    %50 = vector.multi_reduction <add>, %49, %cst_30 [2] : vector<4x9x9xf32> to vector<4x9xf32>
    %51 = vector.shape_cast %50 : vector<4x9xf32> to vector<4x9x1xf32>
    %52 = tpu.reciprocal %51 {approx = true} : vector<4x9x1xf32> -> vector<4x9x1xf32>
    %53 = vector.broadcast %52 : vector<4x9x1xf32> to vector<4x9x9xf32>
    %54 = arith.mulf %49, %53 : vector<4x9x9xf32>
    "tpu.trace_start"() <{level = 10 : i32, message = "hij,hje->hie"}> : () -> ()
    %cst_31 = arith.constant dense<0.000000e+00> : vector<4x9x8xf32>
    %55 = tpu.matmul %54, %41, %cst_31 {dimension_numbers = #tpu.dot_dimension_numbers<[2], [1], [1], [2], [0, 0, 0, 1, 1, 2], [0], [0]>} : vector<4x9x9xf32>, vector<4x9x8xf32>, vector<4x9x8xf32> -> vector<4x9x8xf32>
    "tpu.trace_stop"() : () -> ()
    %c0_32 = arith.constant 0 : index
    %c0_33 = arith.constant 0 : index
    %c0_34 = arith.constant 0 : index
    %c0_35 = arith.constant 0 : index
    %56 = vector.load %arg11[%c0_32, %c0_33, %c0_34, %c0_35] : memref<1x4x8x32xf32, #tpu.memory_space<vmem>>, vector<1x4x8x32xf32>
    %57 = vector.shape_cast %56 : vector<1x4x8x32xf32> to vector<4x8x32xf32>
    "tpu.trace_start"() <{level = 10 : i32, message = "hie,hed->hid"}> : () -> ()
    %cst_36 = arith.constant dense<0.000000e+00> : vector<4x9x32xf32>
    %58 = tpu.matmul %55, %57, %cst_36 {dimension_numbers = #tpu.dot_dimension_numbers<[2], [1], [1], [2], [0, 0, 0, 1, 1, 2], [0], [0]>} : vector<4x9x8xf32>, vector<4x8x32xf32>, vector<4x9x32xf32> -> vector<4x9x32xf32>
    "tpu.trace_stop"() : () -> ()
    %cst_37 = arith.constant dense<0.000000e+00> : vector<9x32xf32>
    %59 = vector.multi_reduction <add>, %58, %cst_37 [0] : vector<4x9x32xf32> to vector<9x32xf32>
    %60 = arith.addf %3, %59 : vector<9x32xf32>
    %c0_38 = arith.constant 0 : index
    %c0_39 = arith.constant 0 : index
    %c0_40 = arith.constant 0 : index
    %61 = vector.load %arg12[%c0_38, %c0_39, %c0_40] : memref<1x1x32xf32, #tpu.memory_space<vmem>>, vector<1x1x32xf32>
    %62 = vector.shape_cast %61 : vector<1x1x32xf32> to vector<1x32xf32>
    %63 = vector.broadcast %62 : vector<1x32xf32> to vector<9x32xf32>
    %64 = arith.addf %60, %63 : vector<9x32xf32>
    %c0_41 = arith.constant 0 : index
    %c0_42 = arith.constant 0 : index
    %c0_43 = arith.constant 0 : index
    %65 = vector.load %arg13[%c0_41, %c0_42, %c0_43] : memref<1x1x32xf32, #tpu.memory_space<vmem>>, vector<1x1x32xf32>
    %66 = vector.shape_cast %65 : vector<1x1x32xf32> to vector<1x32xf32>
    %c0_44 = arith.constant 0 : index
    %c0_45 = arith.constant 0 : index
    %c0_46 = arith.constant 0 : index
    %67 = vector.load %arg14[%c0_44, %c0_45, %c0_46] : memref<1x1x32xf32, #tpu.memory_space<vmem>>, vector<1x1x32xf32>
    %68 = vector.shape_cast %67 : vector<1x1x32xf32> to vector<1x32xf32>
    %cst_47 = arith.constant dense<0.000000e+00> : vector<9xf32>
    %69 = vector.multi_reduction <add>, %64, %cst_47 [1] : vector<9x32xf32> to vector<9xf32>
    %70 = vector.shape_cast %69 : vector<9xf32> to vector<9x1xf32>
    %cst_48 = arith.constant 3.200000e+01 : f32
    %71 = vector.broadcast %cst_48 : f32 to vector<9x1xf32>
    %72 = arith.divf %70, %71 : vector<9x1xf32>
    %73 = vector.broadcast %72 : vector<9x1xf32> to vector<9x32xf32>
    %74 = arith.subf %64, %73 : vector<9x32xf32>
    %75 = arith.mulf %74, %74 : vector<9x32xf32>
    %cst_49 = arith.constant dense<0.000000e+00> : vector<9xf32>
    %76 = vector.multi_reduction <add>, %75, %cst_49 [1] : vector<9x32xf32> to vector<9xf32>
    %77 = vector.shape_cast %76 : vector<9xf32> to vector<9x1xf32>
    %cst_50 = arith.constant 3.200000e+01 : f32
    %78 = vector.broadcast %cst_50 : f32 to vector<9x1xf32>
    %79 = arith.divf %77, %78 : vector<9x1xf32>
    %80 = vector.broadcast %72 : vector<9x1xf32> to vector<9x32xf32>
    %81 = arith.subf %64, %80 : vector<9x32xf32>
    %cst_51 = arith.constant 9.99999974E-6 : f32
    %82 = vector.broadcast %cst_51 : f32 to vector<9x1xf32>
    %83 = arith.addf %79, %82 : vector<9x1xf32>
    %84 = math.rsqrt %83 : vector<9x1xf32>
    %85 = vector.broadcast %84 : vector<9x1xf32> to vector<9x32xf32>
    %86 = arith.mulf %81, %85 : vector<9x32xf32>
    %87 = vector.broadcast %66 : vector<1x32xf32> to vector<9x32xf32>
    %88 = arith.mulf %86, %87 : vector<9x32xf32>
    %89 = vector.broadcast %68 : vector<1x32xf32> to vector<9x32xf32>
    %90 = arith.addf %88, %89 : vector<9x32xf32>
    %c0_52 = arith.constant 0 : index
    %c0_53 = arith.constant 0 : index
    %c0_54 = arith.constant 0 : index
    %91 = vector.load %arg15[%c0_52, %c0_53, %c0_54] : memref<1x32x64xf32, #tpu.memory_space<vmem>>, vector<1x32x64xf32>
    %92 = vector.shape_cast %91 : vector<1x32x64xf32> to vector<32x64xf32>
    %cst_55 = arith.constant dense<0.000000e+00> : vector<9x64xf32>
    %93 = tpu.matmul %90, %92, %cst_55 {dimension_numbers = #tpu.dot_dimension_numbers<[1], [0], [0], [1], [0, 0, 1, 1], [], []>} : vector<9x32xf32>, vector<32x64xf32>, vector<9x64xf32> -> vector<9x64xf32>
    %c0_56 = arith.constant 0 : index
    %c0_57 = arith.constant 0 : index
    %c0_58 = arith.constant 0 : index
    %94 = vector.load %arg16[%c0_56, %c0_57, %c0_58] : memref<1x1x64xf32, #tpu.memory_space<vmem>>, vector<1x1x64xf32>
    %95 = vector.shape_cast %94 : vector<1x1x64xf32> to vector<1x64xf32>
    %96 = vector.broadcast %95 : vector<1x64xf32> to vector<9x64xf32>
    %97 = arith.addf %93, %96 : vector<9x64xf32>
    %cst_59 = arith.constant 0.000000e+00 : f32
    %98 = vector.broadcast %cst_59 : f32 to vector<9x64xf32>
    %99 = arith.maximumf %97, %98 : vector<9x64xf32>
    %c0_60 = arith.constant 0 : index
    %c0_61 = arith.constant 0 : index
    %c0_62 = arith.constant 0 : index
    %100 = vector.load %arg17[%c0_60, %c0_61, %c0_62] : memref<1x64x32xf32, #tpu.memory_space<vmem>>, vector<1x64x32xf32>
    %101 = vector.shape_cast %100 : vector<1x64x32xf32> to vector<64x32xf32>
    %cst_63 = arith.constant dense<0.000000e+00> : vector<9x32xf32>
    %102 = tpu.matmul %99, %101, %cst_63 {dimension_numbers = #tpu.dot_dimension_numbers<[1], [0], [0], [1], [0, 0, 1, 1], [], []>} : vector<9x64xf32>, vector<64x32xf32>, vector<9x32xf32> -> vector<9x32xf32>
    %c0_64 = arith.constant 0 : index
    %c0_65 = arith.constant 0 : index
    %c0_66 = arith.constant 0 : index
    %103 = vector.load %arg18[%c0_64, %c0_65, %c0_66] : memref<1x1x32xf32, #tpu.memory_space<vmem>>, vector<1x1x32xf32>
    %104 = vector.shape_cast %103 : vector<1x1x32xf32> to vector<1x32xf32>
    %105 = vector.broadcast %104 : vector<1x32xf32> to vector<9x32xf32>
    %106 = arith.addf %102, %105 : vector<9x32xf32>
    %107 = arith.addf %64, %106 : vector<9x32xf32>
    %c0_67 = arith.constant 0 : index
    %c0_68 = arith.constant 0 : index
    %108 = vector.load %arg20[%c0_67, %c0_68] : memref<9x32xf32, #tpu.memory_space<vmem>>, vector<9x32xf32>
    tpu.vector_store %arg20[%c0_67, %c0_68], %107 {strides = array<i32>} : memref<9x32xf32, #tpu.memory_space<vmem>>, vector<9x32xf32>,
    %c1_i32 = arith.constant 1 : i32
    %109 = arith.cmpi eq, %arg1, %c1_i32 : i32
    %110 = arith.extui %109 : i1 to i32
    %c0_i32_69 = arith.constant 0 : i32
    %111 = arith.cmpi ne, %110, %c0_i32_69 : i32
    scf.if %111 {
      %112 = vector.extract_strided_slice %107 {offsets = [0, 0], sizes = [1, 32], strides = [1, 1]} : vector<9x32xf32> to vector<1x32xf32>
      %113 = vector.shape_cast %112 : vector<1x32xf32> to vector<1x1x32xf32>
      %c0_70 = arith.constant 0 : index
      %c0_71 = arith.constant 0 : index
      %c0_72 = arith.constant 0 : index
      %114 = vector.load %arg19[%c0_70, %c0_71, %c0_72] : memref<1x1x32xf32, #tpu.memory_space<vmem>>, vector<1x1x32xf32>
      tpu.vector_store %arg19[%c0_70, %c0_71, %c0_72], %113 {strides = array<i32>} : memref<1x1x32xf32, #tpu.memory_space<vmem>>, vector<1x1x32xf32>,
    } else {
    }
    return
  }
  func.func @transform_0(%arg0: i32, %arg1: i32) -> (i32, i32, i32) {
    %c0_i32 = arith.constant 0 : i32
    %c0_i32_0 = arith.constant 0 : i32
    %c0_i32_1 = arith.constant 0 : i32
    return %arg0, %c0_i32, %c0_i32_0 : i32, i32, i32
  }
  func.func @transform_1(%arg0: i32, %arg1: i32) -> (i32, i32) {
    %c0_i32 = arith.constant 0 : i32
    %c0_i32_0 = arith.constant 0 : i32
    %c0_i32_1 = arith.constant 0 : i32
    return %c0_i32, %c0_i32_0 : i32, i32
  }
  func.func @transform_2(%arg0: i32, %arg1: i32) -> (i32, i32) {
    %c0_i32 = arith.constant 0 : i32
    %c0_i32_0 = arith.constant 0 : i32
    %c0_i32_1 = arith.constant 0 : i32
    return %c0_i32, %c0_i32_0 : i32, i32
  }
  func.func @transform_3(%arg0: i32, %arg1: i32) -> (i32, i32) {
    %c0_i32 = arith.constant 0 : i32
    %c0_i32_0 = arith.constant 0 : i32
    %c0_i32_1 = arith.constant 0 : i32
    return %c0_i32, %c0_i32_0 : i32, i32
  }
  func.func @transform_4(%arg0: i32, %arg1: i32) -> (i32, i32, i32) {
    %c0_i32 = arith.constant 0 : i32
    %c0_i32_0 = arith.constant 0 : i32
    %c0_i32_1 = arith.constant 0 : i32
    return %arg1, %c0_i32, %c0_i32_0 : i32, i32, i32
  }
  func.func @transform_5(%arg0: i32, %arg1: i32) -> (i32, i32, i32) {
    %c0_i32 = arith.constant 0 : i32
    %c0_i32_0 = arith.constant 0 : i32
    %c0_i32_1 = arith.constant 0 : i32
    return %arg1, %c0_i32, %c0_i32_0 : i32, i32, i32
  }
  func.func @transform_6(%arg0: i32, %arg1: i32) -> (i32, i32, i32, i32) {
    %c0_i32 = arith.constant 0 : i32
    %c0_i32_0 = arith.constant 0 : i32
    %c0_i32_1 = arith.constant 0 : i32
    %c0_i32_2 = arith.constant 0 : i32
    return %arg1, %c0_i32, %c0_i32_0, %c0_i32_1 : i32, i32, i32, i32
  }
  func.func @transform_7(%arg0: i32, %arg1: i32) -> (i32, i32, i32, i32) {
    %c0_i32 = arith.constant 0 : i32
    %c0_i32_0 = arith.constant 0 : i32
    %c0_i32_1 = arith.constant 0 : i32
    %c0_i32_2 = arith.constant 0 : i32
    return %arg1, %c0_i32, %c0_i32_0, %c0_i32_1 : i32, i32, i32, i32
  }
  func.func @transform_8(%arg0: i32, %arg1: i32) -> (i32, i32, i32, i32) {
    %c0_i32 = arith.constant 0 : i32
    %c0_i32_0 = arith.constant 0 : i32
    %c0_i32_1 = arith.constant 0 : i32
    %c0_i32_2 = arith.constant 0 : i32
    return %arg1, %c0_i32, %c0_i32_0, %c0_i32_1 : i32, i32, i32, i32
  }
  func.func @transform_9(%arg0: i32, %arg1: i32) -> (i32, i32, i32, i32) {
    %c0_i32 = arith.constant 0 : i32
    %c0_i32_0 = arith.constant 0 : i32
    %c0_i32_1 = arith.constant 0 : i32
    %c0_i32_2 = arith.constant 0 : i32
    return %arg1, %c0_i32, %c0_i32_0, %c0_i32_1 : i32, i32, i32, i32
  }
  func.func @transform_10(%arg0: i32, %arg1: i32) -> (i32, i32, i32) {
    %c0_i32 = arith.constant 0 : i32
    %c0_i32_0 = arith.constant 0 : i32
    %c0_i32_1 = arith.constant 0 : i32
    return %arg1, %c0_i32, %c0_i32_0 : i32, i32, i32
  }
  func.func @transform_11(%arg0: i32, %arg1: i32) -> (i32, i32, i32) {
    %c0_i32 = arith.constant 0 : i32
    %c0_i32_0 = arith.constant 0 : i32
    %c0_i32_1 = arith.constant 0 : i32
    return %arg1, %c0_i32, %c0_i32_0 : i32, i32, i32
  }
  func.func @transform_12(%arg0: i32, %arg1: i32) -> (i32, i32, i32) {
    %c0_i32 = arith.constant 0 : i32
    %c0_i32_0 = arith.constant 0 : i32
    %c0_i32_1 = arith.constant 0 : i32
    return %arg1, %c0_i32, %c0_i32_0 : i32, i32, i32
  }
  func.func @transform_13(%arg0: i32, %arg1: i32) -> (i32, i32, i32) {
    %c0_i32 = arith.constant 0 : i32
    %c0_i32_0 = arith.constant 0 : i32
    %c0_i32_1 = arith.constant 0 : i32
    return %arg1, %c0_i32, %c0_i32_0 : i32, i32, i32
  }
  func.func @transform_14(%arg0: i32, %arg1: i32) -> (i32, i32, i32) {
    %c0_i32 = arith.constant 0 : i32
    %c0_i32_0 = arith.constant 0 : i32
    %c0_i32_1 = arith.constant 0 : i32
    return %arg1, %c0_i32, %c0_i32_0 : i32, i32, i32
  }
  func.func @transform_15(%arg0: i32, %arg1: i32) -> (i32, i32, i32) {
    %c0_i32 = arith.constant 0 : i32
    %c0_i32_0 = arith.constant 0 : i32
    %c0_i32_1 = arith.constant 0 : i32
    return %arg1, %c0_i32, %c0_i32_0 : i32, i32, i32
  }
  func.func @transform_16(%arg0: i32, %arg1: i32) -> (i32, i32, i32) {
    %c0_i32 = arith.constant 0 : i32
    %c0_i32_0 = arith.constant 0 : i32
    %c0_i32_1 = arith.constant 0 : i32
    return %arg1, %c0_i32, %c0_i32_0 : i32, i32, i32
  }
  func.func @transform_17(%arg0: i32, %arg1: i32) -> (i32, i32, i32) {
    %c0_i32 = arith.constant 0 : i32
    %c0_i32_0 = arith.constant 0 : i32
    %c0_i32_1 = arith.constant 0 : i32
    return %arg0, %c0_i32, %c0_i32_0 : i32, i32, i32
  }
}

</mosaic_0001>

<llo_original>
// kernel: tpu_custom_call.1
$region0: #{tpu_custom_call.1}
  #allocation0 [shape = 'u32[]', space=smem, size = 0x4, offset = 0x4, fixed_abs, tag = 'smem constant byte address 0x4 - core index']
  #allocation1 [shape = 'u32[144,128]{1,0:T(1,128)}', space=vmem, size = 0x12000, scoped, tag = 'internal scratch']
  #allocation2 [shape = 'f32[9,32]{1,0:T(8,128)}', space=vmem, size = 0x2000, scoped, tag = 'scratch operand']
  %s0 = inlined_call_operand.vmem [shape: f32[2,8,16], index: 0, kind: input, shape index: {}]
  %s1 = inlined_call_operand.vmem [shape: f32[16,32], index: 1, kind: input, shape index: {}]
  %s2 = inlined_call_operand.vmem [shape: f32[1,32], index: 2, kind: input, shape index: {}]
  %s3 = inlined_call_operand.vmem [shape: f32[1,32], index: 3, kind: input, shape index: {}]
  %s4 = inlined_call_operand.vmem [shape: f32[2,1,32], index: 4, kind: input, shape index: {}]
  %s5 = inlined_call_operand.vmem [shape: f32[2,1,32], index: 5, kind: input, shape index: {}]
  %s6 = inlined_call_operand.vmem [shape: f32[2,4,32,8], index: 6, kind: input, shape index: {}]
  %s7 = inlined_call_operand.vmem [shape: f32[2,4,32,8], index: 7, kind: input, shape index: {}]
  %s8 = inlined_call_operand.vmem [shape: f32[2,4,32,8], index: 8, kind: input, shape index: {}]
  %s9 = inlined_call_operand.vmem [shape: f32[2,4,8,32], index: 9, kind: input, shape index: {}]
  %s10 = inlined_call_operand.vmem [shape: f32[2,1,32], index: 10, kind: input, shape index: {}]
  %s11 = inlined_call_operand.vmem [shape: f32[2,1,32], index: 11, kind: input, shape index: {}]
  %s12 = inlined_call_operand.vmem [shape: f32[2,1,32], index: 12, kind: input, shape index: {}]
  %s13 = inlined_call_operand.vmem [shape: f32[2,32,64], index: 13, kind: input, shape index: {}]
  %s14 = inlined_call_operand.vmem [shape: f32[2,1,64], index: 14, kind: input, shape index: {}]
  %s15 = inlined_call_operand.vmem [shape: f32[2,64,32], index: 15, kind: input, shape index: {}]
  %s16 = inlined_call_operand.vmem [shape: f32[2,1,32], index: 16, kind: input, shape index: {}]
  %s17 = inlined_call_operand.hbm [shape: f32[2,1,32], index: 17, kind: output, shape index: {}]
  %s18 = sld [smem:[#allocation0]]
  $region109: #{tpu_custom_call.1} parent=0
    _
  %s20 = ssub.s32 1, %s18
  %s21 = scalar_select 0, %s20, %s18
  $region1: #{tpu_custom_call.1} parent=0
    #allocation3 [shape = 'u8[1024]{0}', space=vmem, size = 0x400, scoped, tag = 'output window, operand 0']
    #allocation4 [shape = 's32[2]{0}', space=sflag, size = 0x8, scoped, tag = 'scoped memory for tpu_custom_call.1']
    %22 = vsyncpa [#allocation4], 0
    %s23 = scalar_lea.sflag [#allocation4], 1
    %24 = vsyncpa %s23, 0
    loop: start=0, step=1, limit=6
    $region2: #{tpu_custom_call.1} parent=1 // loop_pre_header
      _
    $region3: #{tpu_custom_call.1} parent=1 // loop_header
      %s26 = sphi 0, %s30
      %p27 = scmp.ge.s32.totalorder %s26, 6
      %s33 = sphi 0, %s45
      %s34 = sphi 0, %s41
      %s35 = sphi 0, %s33
      %s36 = sphi 0, %s34
      %s37 = sphi 0, %s35
      %s38 = sphi 0, %s36
      %s48 = sphi 0, %s50
      %s51 = sphi 0, %s48
      %s52 = sphi 0, %s51
      %s68 = sphi 0, %s52
      %s72 = sphi 0, %s72
      %s74 = sphi 0, %s72
      %s75 = sphi 0, %s74
      %s89 = sphi 0, %s75
      %s93 = sphi 0, %s93
      %s95 = sphi 0, %s93
      %s96 = sphi 0, %s95
      %s110 = sphi 0, %s96
      %s114 = sphi 0, %s114
      %s116 = sphi 0, %s114
      %s117 = sphi 0, %s116
      %s131 = sphi 0, %s117
      %s137 = sphi 0, %s139
      %s140 = sphi 0, %s137
      %s141 = sphi 0, %s140
      %s157 = sphi 0, %s141
      %s163 = sphi 0, %s165
      %s166 = sphi 0, %s163
      %s167 = sphi 0, %s166
      %s183 = sphi 0, %s167
      %s189 = sphi 0, %s191
      %s192 = sphi 0, %s189
      %s193 = sphi 0, %s192
      %s209 = sphi 0, %s193
      %s215 = sphi 0, %s217
      %s218 = sphi 0, %s215
      %s219 = sphi 0, %s218
      %s235 = sphi 0, %s219
      %s241 = sphi 0, %s243
      %s244 = sphi 0, %s241
      %s245 = sphi 0, %s244
      %s261 = sphi 0, %s245
      %s267 = sphi 0, %s269
      %s270 = sphi 0, %s267
      %s271 = sphi 0, %s270
      %s287 = sphi 0, %s271
      %s293 = sphi 0, %s295
      %s296 = sphi 0, %s293
      %s297 = sphi 0, %s296
      %s313 = sphi 0, %s297
      %s319 = sphi 0, %s321
      %s322 = sphi 0, %s319
      %s323 = sphi 0, %s322
      %s339 = sphi 0, %s323
      %s345 = sphi 0, %s347
      %s348 = sphi 0, %s345
      %s349 = sphi 0, %s348
      %s365 = sphi 0, %s349
      %s371 = sphi 0, %s373
      %s374 = sphi 0, %s371
      %s375 = sphi 0, %s374
      %s391 = sphi 0, %s375
      %s397 = sphi 0, %s399
      %s400 = sphi 0, %s397
      %s401 = sphi 0, %s400
      %s417 = sphi 0, %s401
      %s423 = sphi 0, %s425
      %s426 = sphi 0, %s423
      %s427 = sphi 0, %s426
      %s443 = sphi 0, %s427
      %s449 = sphi 0, %s451
      %s452 = sphi 0, %s449
      %s453 = sphi 0, %s452
      %s469 = sphi 0, %s453
      %s475 = sphi 0, %s477
      %s478 = sphi 0, %s475
      %s479 = sphi 0, %s478
      %s495 = sphi 0, %s479
    $region4: #{tpu_custom_call.1} parent=1 // loop_header_branch
      %29 = sbr.rel (%p27) target = $region8
    $region5: #{tpu_custom_call.1} parent=1 // loop_body
      %s31 = ssub.s32 %s26, 1
      %s32 = ssub.s32 %s26, 2
      %s39 = sadd.s32 1, %s34
      %p40 = scmp.ge.s32.totalorder %s39, 2
      %s41 = scalar_select %p40, 0, %s39
      %s42 = sadd.s32 1, %s33
      %s43 = scalar_select %p40, %s42, %s33
      %p44 = scmp.ge.s32.totalorder %s43, 2
      %s45 = scalar_select %p44, 0, %s43
      %s46 = ssub.s32 %s33, %s45
      %p47 = scmp.eq.s32.totalorder %s46, 0
      %s49 = sadd.s32 %s48, 1
      %s50 = scalar_select %p47, %s48, %s49
      %p53 = pneg %p47
      %p54 = scmp.eq.s32.totalorder %s26, 3
      %p55 = por %p53, %p54
      %p56 = scmp.ne.s32.totalorder %s48, %s51
      %p57 = scmp.eq.s32.totalorder %s26, 0
      %p58 = por %p56, %p57
      %p59 = scmp.ne.s32.totalorder %s48, %s51
      %p60 = scmp.eq.s32.totalorder %s31, 3
      %p61 = por %p59, %p60
      %p62 = scmp.ne.s32.totalorder %s51, %s52
      %p63 = scmp.eq.s32.totalorder %s31, 0
      %p64 = por %p62, %p63
      %p65 = scmp.ne.s32.totalorder %s51, %s52
      %p66 = scmp.eq.s32.totalorder %s32, 3
      %p67 = por %p65, %p66
      %p69 = scmp.ne.s32.totalorder %s52, %s68
      %p70 = scmp.eq.s32.totalorder %s32, 0
      %p71 = por %p69, %p70
      %s73 = sadd.s32 %s72, 1
      %p76 = scmp.eq.s32.totalorder %s26, 3
      %p77 = scmp.ne.s32.totalorder %s72, %s74
      %p78 = scmp.eq.s32.totalorder %s26, 0
      %p79 = por %p77, %p78
      %p80 = scmp.ne.s32.totalorder %s72, %s74
      %p81 = scmp.eq.s32.totalorder %s31, 3
      %p82 = por %p80, %p81
      %p83 = scmp.ne.s32.totalorder %s74, %s75
      %p84 = scmp.eq.s32.totalorder %s31, 0
      %p85 = por %p83, %p84
      %p86 = scmp.ne.s32.totalorder %s74, %s75
      %p87 = scmp.eq.s32.totalorder %s32, 3
      %p88 = por %p86, %p87
      %p90 = scmp.ne.s32.totalorder %s75, %s89
      %p91 = scmp.eq.s32.totalorder %s32, 0
      %p92 = por %p90, %p91
      %s94 = sadd.s32 %s93, 1
      %p97 = scmp.eq.s32.totalorder %s26, 3
      %p98 = scmp.ne.s32.totalorder %s93, %s95
      %p99 = scmp.eq.s32.totalorder %s26, 0
      %p100 = por %p98, %p99
      %p101 = scmp.ne.s32.totalorder %s93, %s95
      %p102 = scmp.eq.s32.totalorder %s31, 3
      %p103 = por %p101, %p102
      %p104 = scmp.ne.s32.totalorder %s95, %s96
      %p105 = scmp.eq.s32.totalorder %s31, 0
      %p106 = por %p104, %p105
      %p107 = scmp.ne.s32.totalorder %s95, %s96
      %p108 = scmp.eq.s32.totalorder %s32, 3
      %p109 = por %p107, %p108
      %p111 = scmp.ne.s32.totalorder %s96, %s110
      %p112 = scmp.eq.s32.totalorder %s32, 0
      %p113 = por %p111, %p112
      %s115 = sadd.s32 %s114, 1
      %p118 = scmp.eq.s32.totalorder %s26, 3
      %p119 = scmp.ne.s32.totalorder %s114, %s116
      %p120 = scmp.eq.s32.totalorder %s26, 0
      %p121 = por %p119, %p120
      %p122 = scmp.ne.s32.totalorder %s114, %s116
      %p123 = scmp.eq.s32.totalorder %s31, 3
      %p124 = por %p122, %p123
      %p125 = scmp.ne.s32.totalorder %s116, %s117
      %p126 = scmp.eq.s32.totalorder %s31, 0
      %p127 = por %p125, %p126
      %p128 = scmp.ne.s32.totalorder %s116, %s117
      %p129 = scmp.eq.s32.totalorder %s32, 3
      %p130 = por %p128, %p129
      %p132 = scmp.ne.s32.totalorder %s117, %s131
      %p133 = scmp.eq.s32.totalorder %s32, 0
      %p134 = por %p132, %p133
      %s135 = ssub.s32 %s34, %s41
      %p136 = scmp.eq.s32.totalorder %s135, 0
      %s138 = sadd.s32 %s137, 1
      %s139 = scalar_select %p136, %s137, %s138
      %p142 = pneg %p136
      %p143 = scmp.eq.s32.totalorder %s26, 3
      %p144 = por %p142, %p143
      %p145 = scmp.ne.s32.totalorder %s137, %s140
      %p146 = scmp.eq.s32.totalorder %s26, 0
      %p147 = por %p145, %p146
      %p148 = scmp.ne.s32.totalorder %s137, %s140
      %p149 = scmp.eq.s32.totalorder %s31, 3
      %p150 = por %p148, %p149
      %p151 = scmp.ne.s32.totalorder %s140, %s141
      %p152 = scmp.eq.s32.totalorder %s31, 0
      %p153 = por %p151, %p152
      %p154 = scmp.ne.s32.totalorder %s140, %s141
      %p155 = scmp.eq.s32.totalorder %s32, 3
      %p156 = por %p154, %p155
      %p158 = scmp.ne.s32.totalorder %s141, %s157
      %p159 = scmp.eq.s32.totalorder %s32, 0
      %p160 = por %p158, %p159
      %s161 = ssub.s32 %s34, %s41
      %p162 = scmp.eq.s32.totalorder %s161, 0
      %s164 = sadd.s32 %s163, 1
      %s165 = scalar_select %p162, %s163, %s164
      %p168 = pneg %p162
      %p169 = scmp.eq.s32.totalorder %s26, 3
      %p170 = por %p168, %p169
      %p171 = scmp.ne.s32.totalorder %s163, %s166
      %p172 = scmp.eq.s32.totalorder %s26, 0
      %p173 = por %p171, %p172
      %p174 = scmp.ne.s32.totalorder %s163, %s166
      %p175 = scmp.eq.s32.totalorder %s31, 3
      %p176 = por %p174, %p175
      %p177 = scmp.ne.s32.totalorder %s166, %s167
      %p178 = scmp.eq.s32.totalorder %s31, 0
      %p179 = por %p177, %p178
      %p180 = scmp.ne.s32.totalorder %s166, %s167
      %p181 = scmp.eq.s32.totalorder %s32, 3
      %p182 = por %p180, %p181
      %p184 = scmp.ne.s32.totalorder %s167, %s183
      %p185 = scmp.eq.s32.totalorder %s32, 0
      %p186 = por %p184, %p185
      %s187 = ssub.s32 %s34, %s41
      %p188 = scmp.eq.s32.totalorder %s187, 0
      %s190 = sadd.s32 %s189, 1
      %s191 = scalar_select %p188, %s189, %s190
      %p194 = pneg %p188
      %p195 = scmp.eq.s32.totalorder %s26, 3
      %p196 = por %p194, %p195
      %p197 = scmp.ne.s32.totalorder %s189, %s192
      %p198 = scmp.eq.s32.totalorder %s26, 0
      %p199 = por %p197, %p198
      %p200 = scmp.ne.s32.totalorder %s189, %s192
      %p201 = scmp.eq.s32.totalorder %s31, 3
      %p202 = por %p200, %p201
      %p203 = scmp.ne.s32.totalorder %s192, %s193
      %p204 = scmp.eq.s32.totalorder %s31, 0
      %p205 = por %p203, %p204
      %p206 = scmp.ne.s32.totalorder %s192, %s193
      %p207 = scmp.eq.s32.totalorder %s32, 3
      %p208 = por %p206, %p207
      %p210 = scmp.ne.s32.totalorder %s193, %s209
      %p211 = scmp.eq.s32.totalorder %s32, 0
      %p212 = por %p210, %p211
      %s213 = ssub.s32 %s34, %s41
      %p214 = scmp.eq.s32.totalorder %s213, 0
      %s216 = sadd.s32 %s215, 1
      %s217 = scalar_select %p214, %s215, %s216
      %p220 = pneg %p214
      %p221 = scmp.eq.s32.totalorder %s26, 3
      %p222 = por %p220, %p221
      %p223 = scmp.ne.s32.totalorder %s215, %s218
      %p224 = scmp.eq.s32.totalorder %s26, 0
      %p225 = por %p223, %p224
      %p226 = scmp.ne.s32.totalorder %s215, %s218
      %p227 = scmp.eq.s32.totalorder %s31, 3
      %p228 = por %p226, %p227
      %p229 = scmp.ne.s32.totalorder %s218, %s219
      %p230 = scmp.eq.s32.totalorder %s31, 0
      %p231 = por %p229, %p230
      %p232 = scmp.ne.s32.totalorder %s218, %s219
      %p233 = scmp.eq.s32.totalorder %s32, 3
      %p234 = por %p232, %p233
      %p236 = scmp.ne.s32.totalorder %s219, %s235
      %p237 = scmp.eq.s32.totalorder %s32, 0
      %p238 = por %p236, %p237
      %s239 = ssub.s32 %s34, %s41
      %p240 = scmp.eq.s32.totalorder %s239, 0
      %s242 = sadd.s32 %s241, 1
      %s243 = scalar_select %p240, %s241, %s242
      %p246 = pneg %p240
      %p247 = scmp.eq.s32.totalorder %s26, 3
      %p248 = por %p246, %p247
      %p249 = scmp.ne.s32.totalorder %s241, %s244
      %p250 = scmp.eq.s32.totalorder %s26, 0
      %p251 = por %p249, %p250
      %p252 = scmp.ne.s32.totalorder %s241, %s244
      %p253 = scmp.eq.s32.totalorder %s31, 3
      %p254 = por %p252, %p253
      %p255 = scmp.ne.s32.totalorder %s244, %s245
      %p256 = scmp.eq.s32.totalorder %s31, 0
      %p257 = por %p255, %p256
      %p258 = scmp.ne.s32.totalorder %s244, %s245
      %p259 = scmp.eq.s32.totalorder %s32, 3
      %p260 = por %p258, %p259
      %p262 = scmp.ne.s32.totalorder %s245, %s261
      %p263 = scmp.eq.s32.totalorder %s32, 0
      %p264 = por %p262, %p263
      %s265 = ssub.s32 %s34, %s41
      %p266 = scmp.eq.s32.totalorder %s265, 0
      %s268 = sadd.s32 %s267, 1
      %s269 = scalar_select %p266, %s267, %s268
      %p272 = pneg %p266
      %p273 = scmp.eq.s32.totalorder %s26, 3
      %p274 = por %p272, %p273
      %p275 = scmp.ne.s32.totalorder %s267, %s270
      %p276 = scmp.eq.s32.totalorder %s26, 0
      %p277 = por %p275, %p276
      %p278 = scmp.ne.s32.totalorder %s267, %s270
      %p279 = scmp.eq.s32.totalorder %s31, 3
      %p280 = por %p278, %p279
      %p281 = scmp.ne.s32.totalorder %s270, %s271
      %p282 = scmp.eq.s32.totalorder %s31, 0
      %p283 = por %p281, %p282
      %p284 = scmp.ne.s32.totalorder %s270, %s271
      %p285 = scmp.eq.s32.totalorder %s32, 3
      %p286 = por %p284, %p285
      %p288 = scmp.ne.s32.totalorder %s271, %s287
      %p289 = scmp.eq.s32.totalorder %s32, 0
      %p290 = por %p288, %p289
      %s291 = ssub.s32 %s34, %s41
      %p292 = scmp.eq.s32.totalorder %s291, 0
      %s294 = sadd.s32 %s293, 1
      %s295 = scalar_select %p292, %s293, %s294
      %p298 = pneg %p292
      %p299 = scmp.eq.s32.totalorder %s26, 3
      %p300 = por %p298, %p299
      %p301 = scmp.ne.s32.totalorder %s293, %s296
      %p302 = scmp.eq.s32.totalorder %s26, 0
      %p303 = por %p301, %p302
      %p304 = scmp.ne.s32.totalorder %s293, %s296
      %p305 = scmp.eq.s32.totalorder %s31, 3
      %p306 = por %p304, %p305
      %p307 = scmp.ne.s32.totalorder %s296, %s297
      %p308 = scmp.eq.s32.totalorder %s31, 0
      %p309 = por %p307, %p308
      %p310 = scmp.ne.s32.totalorder %s296, %s297
      %p311 = scmp.eq.s32.totalorder %s32, 3
      %p312 = por %p310, %p311
      %p314 = scmp.ne.s32.totalorder %s297, %s313
      %p315 = scmp.eq.s32.totalorder %s32, 0
      %p316 = por %p314, %p315
      %s317 = ssub.s32 %s34, %s41
      %p318 = scmp.eq.s32.totalorder %s317, 0
      %s320 = sadd.s32 %s319, 1
      %s321 = scalar_select %p318, %s319, %s320
      %p324 = pneg %p318
      %p325 = scmp.eq.s32.totalorder %s26, 3
      %p326 = por %p324, %p325
      %p327 = scmp.ne.s32.totalorder %s319, %s322
      %p328 = scmp.eq.s32.totalorder %s26, 0
      %p329 = por %p327, %p328
      %p330 = scmp.ne.s32.totalorder %s319, %s322
      %p331 = scmp.eq.s32.totalorder %s31, 3
      %p332 = por %p330, %p331
      %p333 = scmp.ne.s32.totalorder %s322, %s323
      %p334 = scmp.eq.s32.totalorder %s31, 0
      %p335 = por %p333, %p334
      %p336 = scmp.ne.s32.totalorder %s322, %s323
      %p337 = scmp.eq.s32.totalorder %s32, 3
      %p338 = por %p336, %p337
      %p340 = scmp.ne.s32.totalorder %s323, %s339
      %p341 = scmp.eq.s32.totalorder %s32, 0
      %p342 = por %p340, %p341
      %s343 = ssub.s32 %s34, %s41
      %p344 = scmp.eq.s32.totalorder %s343, 0
      %s346 = sadd.s32 %s345, 1
      %s347 = scalar_select %p344, %s345, %s346
      %p350 = pneg %p344
      %p351 = scmp.eq.s32.totalorder %s26, 3
      %p352 = por %p350, %p351
      %p353 = scmp.ne.s32.totalorder %s345, %s348
      %p354 = scmp.eq.s32.totalorder %s26, 0
      %p355 = por %p353, %p354
      %p356 = scmp.ne.s32.totalorder %s345, %s348
      %p357 = scmp.eq.s32.totalorder %s31, 3
      %p358 = por %p356, %p357
      %p359 = scmp.ne.s32.totalorder %s348, %s349
      %p360 = scmp.eq.s32.totalorder %s31, 0
      %p361 = por %p359, %p360
      %p362 = scmp.ne.s32.totalorder %s348, %s349
      %p363 = scmp.eq.s32.totalorder %s32, 3
      %p364 = por %p362, %p363
      %p366 = scmp.ne.s32.totalorder %s349, %s365
      %p367 = scmp.eq.s32.totalorder %s32, 0
      %p368 = por %p366, %p367
      %s369 = ssub.s32 %s34, %s41
      %p370 = scmp.eq.s32.totalorder %s369, 0
      %s372 = sadd.s32 %s371, 1
      %s373 = scalar_select %p370, %s371, %s372
      %p376 = pneg %p370
      %p377 = scmp.eq.s32.totalorder %s26, 3
      %p378 = por %p376, %p377
      %p379 = scmp.ne.s32.totalorder %s371, %s374
      %p380 = scmp.eq.s32.totalorder %s26, 0
      %p381 = por %p379, %p380
      %p382 = scmp.ne.s32.totalorder %s371, %s374
      %p383 = scmp.eq.s32.totalorder %s31, 3
      %p384 = por %p382, %p383
      %p385 = scmp.ne.s32.totalorder %s374, %s375
      %p386 = scmp.eq.s32.totalorder %s31, 0
      %p387 = por %p385, %p386
      %p388 = scmp.ne.s32.totalorder %s374, %s375
      %p389 = scmp.eq.s32.totalorder %s32, 3
      %p390 = por %p388, %p389
      %p392 = scmp.ne.s32.totalorder %s375, %s391
      %p393 = scmp.eq.s32.totalorder %s32, 0
      %p394 = por %p392, %p393
      %s395 = ssub.s32 %s34, %s41
      %p396 = scmp.eq.s32.totalorder %s395, 0
      %s398 = sadd.s32 %s397, 1
      %s399 = scalar_select %p396, %s397, %s398
      %p402 = pneg %p396
      %p403 = scmp.eq.s32.totalorder %s26, 3
      %p404 = por %p402, %p403
      %p405 = scmp.ne.s32.totalorder %s397, %s400
      %p406 = scmp.eq.s32.totalorder %s26, 0
      %p407 = por %p405, %p406
      %p408 = scmp.ne.s32.totalorder %s397, %s400
      %p409 = scmp.eq.s32.totalorder %s31, 3
      %p410 = por %p408, %p409
      %p411 = scmp.ne.s32.totalorder %s400, %s401
      %p412 = scmp.eq.s32.totalorder %s31, 0
      %p413 = por %p411, %p412
      %p414 = scmp.ne.s32.totalorder %s400, %s401
      %p415 = scmp.eq.s32.totalorder %s32, 3
      %p416 = por %p414, %p415
      %p418 = scmp.ne.s32.totalorder %s401, %s417
      %p419 = scmp.eq.s32.totalorder %s32, 0
      %p420 = por %p418, %p419
      %s421 = ssub.s32 %s34, %s41
      %p422 = scmp.eq.s32.totalorder %s421, 0
      %s424 = sadd.s32 %s423, 1
      %s425 = scalar_select %p422, %s423, %s424
      %p428 = pneg %p422
      %p429 = scmp.eq.s32.totalorder %s26, 3
      %p430 = por %p428, %p429
      %p431 = scmp.ne.s32.totalorder %s423, %s426
      %p432 = scmp.eq.s32.totalorder %s26, 0
      %p433 = por %p431, %p432
      %p434 = scmp.ne.s32.totalorder %s423, %s426
      %p435 = scmp.eq.s32.totalorder %s31, 3
      %p436 = por %p434, %p435
      %p437 = scmp.ne.s32.totalorder %s426, %s427
      %p438 = scmp.eq.s32.totalorder %s31, 0
      %p439 = por %p437, %p438
      %p440 = scmp.ne.s32.totalorder %s426, %s427
      %p441 = scmp.eq.s32.totalorder %s32, 3
      %p442 = por %p440, %p441
      %p444 = scmp.ne.s32.totalorder %s427, %s443
      %p445 = scmp.eq.s32.totalorder %s32, 0
      %p446 = por %p444, %p445
      %s447 = ssub.s32 %s34, %s41
      %p448 = scmp.eq.s32.totalorder %s447, 0
      %s450 = sadd.s32 %s449, 1
      %s451 = scalar_select %p448, %s449, %s450
      %p454 = pneg %p448
      %p455 = scmp.eq.s32.totalorder %s26, 3
      %p456 = por %p454, %p455
      %p457 = scmp.ne.s32.totalorder %s449, %s452
      %p458 = scmp.eq.s32.totalorder %s26, 0
      %p459 = por %p457, %p458
      %p460 = scmp.ne.s32.totalorder %s449, %s452
      %p461 = scmp.eq.s32.totalorder %s31, 3
      %p462 = por %p460, %p461
      %p463 = scmp.ne.s32.totalorder %s452, %s453
      %p464 = scmp.eq.s32.totalorder %s31, 0
      %p465 = por %p463, %p464
      %p466 = scmp.ne.s32.totalorder %s452, %s453
      %p467 = scmp.eq.s32.totalorder %s32, 3
      %p468 = por %p466, %p467
      %p470 = scmp.ne.s32.totalorder %s453, %s469
      %p471 = scmp.eq.s32.totalorder %s32, 0
      %p472 = por %p470, %p471
      %s473 = ssub.s32 %s33, %s45
      %p474 = scmp.eq.s32.totalorder %s473, 0
      %s476 = sadd.s32 %s475, 1
      %s477 = scalar_select %p474, %s475, %s476
      %p480 = pneg %p474
      %p481 = scmp.eq.s32.totalorder %s26, 3
      %p482 = por %p480, %p481
      %p483 = scmp.ne.s32.totalorder %s475, %s478
      %p484 = scmp.eq.s32.totalorder %s26, 0
      %p485 = por %p483, %p484
      %p486 = scmp.ne.s32.totalorder %s475, %s478
      %p487 = scmp.eq.s32.totalorder %s31, 3
      %p488 = por %p486, %p487
      %p489 = scmp.ne.s32.totalorder %s478, %s479
      %p490 = scmp.eq.s32.totalorder %s31, 0
      %p491 = por %p489, %p490
      %p492 = scmp.ne.s32.totalorder %s478, %s479
      %p493 = scmp.eq.s32.totalorder %s32, 3
      %p494 = por %p492, %p493
      %p496 = scmp.ne.s32.totalorder %s479, %s495
      %p497 = scmp.eq.s32.totalorder %s32, 0
      %p498 = por %p496, %p497
      %p499 = scmp.le.s32.totalorder 1, %s26
      %p500 = scmp.lt.s32.totalorder %s26, 5
      %p501 = pnand %p499, %p500
      %p502 = pneg %p501
      // Predicated region
      $region9: #{tpu_custom_call.1} parent=5 // pred_check
        _
      $region10: #{tpu_custom_call.1} parent=5 // pred_check_branch
        %504 = sbr.rel (%p501) target = $region12
      $region11: #{tpu_custom_call.1} parent=5 // pred_region
        %s505 = ssub.s32 %s26, 1
        // Predicated region
        $region13: #{tpu_custom_call.1} parent=11 // pred_check
          %p506 = pneg %p85
        $region14: #{tpu_custom_call.1} parent=11 // pred_check_branch
          %508 = sbr.rel (%p506) target = $region16
        $region15: #{tpu_custom_call.1} parent=11 // pred_region
          _
        $region16: #{tpu_custom_call.1} parent=11 // pred_fallthru
          _
        // Predicated region
        $region17: #{tpu_custom_call.1} parent=11 // pred_check
          %p509 = pneg %p106
        $region18: #{tpu_custom_call.1} parent=11 // pred_check_branch
          %511 = sbr.rel (%p509) target = $region20
        $region19: #{tpu_custom_call.1} parent=11 // pred_region
          _
        $region20: #{tpu_custom_call.1} parent=11 // pred_fallthru
          _
        // Predicated region
        $region21: #{tpu_custom_call.1} parent=11 // pred_check
          %p512 = pneg %p127
        $region22: #{tpu_custom_call.1} parent=11 // pred_check_branch
          %514 = sbr.rel (%p512) target = $region24
        $region23: #{tpu_custom_call.1} parent=11 // pred_region
          _
        $region24: #{tpu_custom_call.1} parent=11 // pred_fallthru
          _
      $region12: #{tpu_custom_call.1} parent=5 // pred_fallthru
        _
      %p515 = scmp.lt.s32.totalorder %s26, 4
      // Predicated region
      $region25: #{tpu_custom_call.1} parent=5 // pred_check
        %p516 = pneg %p515
      $region26: #{tpu_custom_call.1} parent=5 // pred_check_branch
        %518 = sbr.rel (%p516) target = $region28
      $region27: #{tpu_custom_call.1} parent=5 // pred_region
        // Predicated region
        $region29: #{tpu_custom_call.1} parent=27 // pred_check
          %p519 = pneg %p58
        $region30: #{tpu_custom_call.1} parent=27 // pred_check_branch
          %521 = sbr.rel (%p519) target = $region32
        $region31: #{tpu_custom_call.1} parent=27 // pred_region
          %p522 = scmp.lt.s32.totalorder %s33, 1
          %s523 = scalar_select %p522, %s33, 1
          %s524 = smul.addr %s523, 8
          %s525 = scalar_lea.vmem %s0, %s524
        $region32: #{tpu_custom_call.1} parent=27 // pred_fallthru
          _
        // Predicated region
        $region33: #{tpu_custom_call.1} parent=27 // pred_check
          %p526 = pneg %p147
        $region34: #{tpu_custom_call.1} parent=27 // pred_check_branch
          %528 = sbr.rel (%p526) target = $region36
        $region35: #{tpu_custom_call.1} parent=27 // pred_region
          %p529 = scmp.lt.s32.totalorder %s34, 1
          %s530 = scalar_select %p529, %s34, 1
          %s531 = scalar_lea.vmem %s4, %s530
        $region36: #{tpu_custom_call.1} parent=27 // pred_fallthru
          _
        // Predicated region
        $region37: #{tpu_custom_call.1} parent=27 // pred_check
          %p532 = pneg %p173
        $region38: #{tpu_custom_call.1} parent=27 // pred_check_branch
          %534 = sbr.rel (%p532) target = $region40
        $region39: #{tpu_custom_call.1} parent=27 // pred_region
          %p535 = scmp.lt.s32.totalorder %s34, 1
          %s536 = scalar_select %p535, %s34, 1
          %s537 = scalar_lea.vmem %s5, %s536
        $region40: #{tpu_custom_call.1} parent=27 // pred_fallthru
          _
        // Predicated region
        $region41: #{tpu_custom_call.1} parent=27 // pred_check
          %p538 = pneg %p199
        $region42: #{tpu_custom_call.1} parent=27 // pred_check_branch
          %540 = sbr.rel (%p538) target = $region44
        $region43: #{tpu_custom_call.1} parent=27 // pred_region
          %p541 = scmp.lt.s32.totalorder %s34, 1
          %s542 = scalar_select %p541, %s34, 1
          %s543 = smul.addr %s542, 16
          %s544 = smul.addr %s543, 8
          %s545 = scalar_lea.vmem %s6, %s544
        $region44: #{tpu_custom_call.1} parent=27 // pred_fallthru
          _
        // Predicated region
        $region45: #{tpu_custom_call.1} parent=27 // pred_check
          %p546 = pneg %p225
        $region46: #{tpu_custom_call.1} parent=27 // pred_check_branch
          %548 = sbr.rel (%p546) target = $region48
        $region47: #{tpu_custom_call.1} parent=27 // pred_region
          %p549 = scmp.lt.s32.totalorder %s34, 1
          %s550 = scalar_select %p549, %s34, 1
          %s551 = smul.addr %s550, 16
          %s552 = smul.addr %s551, 8
          %s553 = scalar_lea.vmem %s7, %s552
        $region48: #{tpu_custom_call.1} parent=27 // pred_fallthru
          _
        // Predicated region
        $region49: #{tpu_custom_call.1} parent=27 // pred_check
          %p554 = pneg %p251
        $region50: #{tpu_custom_call.1} parent=27 // pred_check_branch
          %556 = sbr.rel (%p554) target = $region52
        $region51: #{tpu_custom_call.1} parent=27 // pred_region
          %p557 = scmp.lt.s32.totalorder %s34, 1
          %s558 = scalar_select %p557, %s34, 1
          %s559 = smul.addr %s558, 16
          %s560 = smul.addr %s559, 8
          %s561 = scalar_lea.vmem %s8, %s560
        $region52: #{tpu_custom_call.1} parent=27 // pred_fallthru
          _
        // Predicated region
        $region53: #{tpu_custom_call.1} parent=27 // pred_check
          %p562 = pneg %p277
        $region54: #{tpu_custom_call.1} parent=27 // pred_check_branch
          %564 = sbr.rel (%p562) target = $region56
        $region55: #{tpu_custom_call.1} parent=27 // pred_region
          %p565 = scmp.lt.s32.totalorder %s34, 1
          %s566 = scalar_select %p565, %s34, 1
          %s567 = smul.addr %s566, 4
          %s568 = smul.addr %s567, 8
          %s569 = scalar_lea.vmem %s9, %s568
        $region56: #{tpu_custom_call.1} parent=27 // pred_fallthru
          _
        // Predicated region
        $region57: #{tpu_custom_call.1} parent=27 // pred_check
          %p570 = pneg %p303
        $region58: #{tpu_custom_call.1} parent=27 // pred_check_branch
          %572 = sbr.rel (%p570) target = $region60
        $region59: #{tpu_custom_call.1} parent=27 // pred_region
          %p573 = scmp.lt.s32.totalorder %s34, 1
          %s574 = scalar_select %p573, %s34, 1
          %s575 = scalar_lea.vmem %s10, %s574
        $region60: #{tpu_custom_call.1} parent=27 // pred_fallthru
          _
        // Predicated region
        $region61: #{tpu_custom_call.1} parent=27 // pred_check
          %p576 = pneg %p329
        $region62: #{tpu_custom_call.1} parent=27 // pred_check_branch
          %578 = sbr.rel (%p576) target = $region64
        $region63: #{tpu_custom_call.1} parent=27 // pred_region
          %p579 = scmp.lt.s32.totalorder %s34, 1
          %s580 = scalar_select %p579, %s34, 1
          %s581 = scalar_lea.vmem %s11, %s580
        $region64: #{tpu_custom_call.1} parent=27 // pred_fallthru
          _
        // Predicated region
        $region65: #{tpu_custom_call.1} parent=27 // pred_check
          %p582 = pneg %p355
        $region66: #{tpu_custom_call.1} parent=27 // pred_check_branch
          %584 = sbr.rel (%p582) target = $region68
        $region67: #{tpu_custom_call.1} parent=27 // pred_region
          %p585 = scmp.lt.s32.totalorder %s34, 1
          %s586 = scalar_select %p585, %s34, 1
          %s587 = scalar_lea.vmem %s12, %s586
        $region68: #{tpu_custom_call.1} parent=27 // pred_fallthru
          _
        // Predicated region
        $region69: #{tpu_custom_call.1} parent=27 // pred_check
          %p588 = pneg %p381
        $region70: #{tpu_custom_call.1} parent=27 // pred_check_branch
          %590 = sbr.rel (%p588) target = $region72
        $region71: #{tpu_custom_call.1} parent=27 // pred_region
          %p591 = scmp.lt.s32.totalorder %s34, 1
          %s592 = scalar_select %p591, %s34, 1
          %s593 = smul.addr %s592, 4
          %s594 = smul.addr %s593, 8
          %s595 = scalar_lea.vmem %s13, %s594
        $region72: #{tpu_custom_call.1} parent=27 // pred_fallthru
          _
        // Predicated region
        $region73: #{tpu_custom_call.1} parent=27 // pred_check
          %p596 = pneg %p407
        $region74: #{tpu_custom_call.1} parent=27 // pred_check_branch
          %598 = sbr.rel (%p596) target = $region76
        $region75: #{tpu_custom_call.1} parent=27 // pred_region
          %p599 = scmp.lt.s32.totalorder %s34, 1
          %s600 = scalar_select %p599, %s34, 1
          %s601 = scalar_lea.vmem %s14, %s600
        $region76: #{tpu_custom_call.1} parent=27 // pred_fallthru
          _
        // Predicated region
        $region77: #{tpu_custom_call.1} parent=27 // pred_check
          %p602 = pneg %p433
        $region78: #{tpu_custom_call.1} parent=27 // pred_check_branch
          %604 = sbr.rel (%p602) target = $region80
        $region79: #{tpu_custom_call.1} parent=27 // pred_region
          %p605 = scmp.lt.s32.totalorder %s34, 1
          %s606 = scalar_select %p605, %s34, 1
          %s607 = smul.addr %s606, 8
          %s608 = smul.addr %s607, 8
          %s609 = scalar_lea.vmem %s15, %s608
        $region80: #{tpu_custom_call.1} parent=27 // pred_fallthru
          _
        // Predicated region
        $region81: #{tpu_custom_call.1} parent=27 // pred_check
          %p610 = pneg %p459
        $region82: #{tpu_custom_call.1} parent=27 // pred_check_branch
          %612 = sbr.rel (%p610) target = $region84
        $region83: #{tpu_custom_call.1} parent=27 // pred_region
          %p613 = scmp.lt.s32.totalorder %s34, 1
          %s614 = scalar_select %p613, %s34, 1
          %s615 = scalar_lea.vmem %s16, %s614
        $region84: #{tpu_custom_call.1} parent=27 // pred_fallthru
          _
      $region28: #{tpu_custom_call.1} parent=5 // pred_fallthru
        _
      %p616 = scmp.le.s32.totalorder 1, %s26
      %p617 = scmp.lt.s32.totalorder %s26, 5
      %p618 = pnand %p616, %p617
      %p619 = pneg %p618
      // Predicated region
      $region85: #{tpu_custom_call.1} parent=5 // pred_check
        _
      $region86: #{tpu_custom_call.1} parent=5 // pred_check_branch
        %621 = sbr.rel (%p618) target = $region88
      $region87: #{tpu_custom_call.1} parent=5 // pred_region
        %s622 = ssub.s32 %s26, 1
        %p623 = scmp.lt.s32.totalorder %s35, 1
        %s624 = scalar_select %p623, %s35, 1
        %s625 = smul.addr %s624, 8
        %s626 = scalar_lea.vmem %s0, %s625
        %p627 = pneg %p64
        %p628 = pneg %p61
        %p629 = pneg %p85
        %p630 = pneg %p82
        %p631 = pneg %p106
        %p632 = pneg %p103
        %p633 = pneg %p127
        %p634 = pneg %p124
        %p635 = scmp.lt.s32.totalorder %s36, 1
        %s636 = scalar_select %p635, %s36, 1
        %s637 = scalar_lea.vmem %s4, %s636
        %p638 = pneg %p153
        %p639 = pneg %p150
        %p640 = scmp.lt.s32.totalorder %s36, 1
        %s641 = scalar_select %p640, %s36, 1
        %s642 = scalar_lea.vmem %s5, %s641
        %p643 = pneg %p179
        %p644 = pneg %p176
        %p645 = scmp.lt.s32.totalorder %s36, 1
        %s646 = scalar_select %p645, %s36, 1
        %s647 = smul.addr %s646, 16
        %s648 = smul.addr %s647, 8
        %s649 = scalar_lea.vmem %s6, %s648
        %p650 = pneg %p205
        %p651 = pneg %p202
        %p652 = scmp.lt.s32.totalorder %s36, 1
        %s653 = scalar_select %p652, %s36, 1
        %s654 = smul.addr %s653, 16
        %s655 = smul.addr %s654, 8
        %s656 = scalar_lea.vmem %s7, %s655
        %p657 = pneg %p231
        %p658 = pneg %p228
        %p659 = scmp.lt.s32.totalorder %s36, 1
        %s660 = scalar_select %p659, %s36, 1
        %s661 = smul.addr %s660, 16
        %s662 = smul.addr %s661, 8
        %s663 = scalar_lea.vmem %s8, %s662
        %p664 = pneg %p257
        %p665 = pneg %p254
        %p666 = scmp.lt.s32.totalorder %s36, 1
        %s667 = scalar_select %p666, %s36, 1
        %s668 = smul.addr %s667, 4
        %s669 = smul.addr %s668, 8
        %s670 = scalar_lea.vmem %s9, %s669
        %p671 = pneg %p283
        %p672 = pneg %p280
        %p673 = scmp.lt.s32.totalorder %s36, 1
        %s674 = scalar_select %p673, %s36, 1
        %s675 = scalar_lea.vmem %s10, %s674
        %p676 = pneg %p309
        %p677 = pneg %p306
        %p678 = scmp.lt.s32.totalorder %s36, 1
        %s679 = scalar_select %p678, %s36, 1
        %s680 = scalar_lea.vmem %s11, %s679
        %p681 = pneg %p335
        %p682 = pneg %p332
        %p683 = scmp.lt.s32.totalorder %s36, 1
        %s684 = scalar_select %p683, %s36, 1
        %s685 = scalar_lea.vmem %s12, %s684
        %p686 = pneg %p361
        %p687 = pneg %p358
        %p688 = scmp.lt.s32.totalorder %s36, 1
        %s689 = scalar_select %p688, %s36, 1
        %s690 = smul.addr %s689, 4
        %s691 = smul.addr %s690, 8
        %s692 = scalar_lea.vmem %s13, %s691
        %p693 = pneg %p387
        %p694 = pneg %p384
        %p695 = scmp.lt.s32.totalorder %s36, 1
        %s696 = scalar_select %p695, %s36, 1
        %s697 = scalar_lea.vmem %s14, %s696
        %p698 = pneg %p413
        %p699 = pneg %p410
        %p700 = scmp.lt.s32.totalorder %s36, 1
        %s701 = scalar_select %p700, %s36, 1
        %s702 = smul.addr %s701, 8
        %s703 = smul.addr %s702, 8
        %s704 = scalar_lea.vmem %s15, %s703
        %p705 = pneg %p439
        %p706 = pneg %p436
        %p707 = scmp.lt.s32.totalorder %s36, 1
        %s708 = scalar_select %p707, %s36, 1
        %s709 = scalar_lea.vmem %s16, %s708
        %p710 = pneg %p465
        %p711 = pneg %p462
        %p712 = pneg %p491
        %p713 = pneg %p488
        %s714 = sand.u32 %s478, 1
        %s715 = scalar_lea.sflag [#allocation4], %s714
        %s716 = sand.u32 %s478, 1
        %s717 = scalar_lea.vmem [#allocation3], %s716
        %p718 = scmp.lt.s32.totalorder %s35, 1
        %s719 = scalar_select %p718, %s35, 1
        %s720 = smul.addr %s719, 8
        %s721 = scalar_lea.vmem %s0, %s720
        %p722 = scmp.lt.s32.totalorder %s36, 1
        %s723 = scalar_select %p722, %s36, 1
        %s724 = scalar_lea.vmem %s4, %s723
        %p725 = scmp.lt.s32.totalorder %s36, 1
        %s726 = scalar_select %p725, %s36, 1
        %s727 = scalar_lea.vmem %s5, %s726
        %p728 = scmp.lt.s32.totalorder %s36, 1
        %s729 = scalar_select %p728, %s36, 1
        %s730 = smul.addr %s729, 16
        %s731 = smul.addr %s730, 8
        %s732 = scalar_lea.vmem %s6, %s731
        %p733 = scmp.lt.s32.totalorder %s36, 1
        %s734 = scalar_select %p733, %s36, 1
        %s735 = smul.addr %s734, 16
        %s736 = smul.addr %s735, 8
        %s737 = scalar_lea.vmem %s7, %s736
        %p738 = scmp.lt.s32.totalorder %s36, 1
        %s739 = scalar_select %p738, %s36, 1
        %s740 = smul.addr %s739, 16
        %s741 = smul.addr %s740, 8
        %s742 = scalar_lea.vmem %s8, %s741
        %p743 = scmp.lt.s32.totalorder %s36, 1
        %s744 = scalar_select %p743, %s36, 1
        %s745 = smul.addr %s744, 4
        %s746 = smul.addr %s745, 8
        %s747 = scalar_lea.vmem %s9, %s746
        %p748 = scmp.lt.s32.totalorder %s36, 1
        %s749 = scalar_select %p748, %s36, 1
        %s750 = scalar_lea.vmem %s10, %s749
        %p751 = scmp.lt.s32.totalorder %s36, 1
        %s752 = scalar_select %p751, %s36, 1
        %s753 = scalar_lea.vmem %s11, %s752
        %p754 = scmp.lt.s32.totalorder %s36, 1
        %s755 = scalar_select %p754, %s36, 1
        %s756 = scalar_lea.vmem %s12, %s755
        %p757 = scmp.lt.s32.totalorder %s36, 1
        %s758 = scalar_select %p757, %s36, 1
        %s759 = smul.addr %s758, 4
        %s760 = smul.addr %s759, 8
        %s761 = scalar_lea.vmem %s13, %s760
        %p762 = scmp.lt.s32.totalorder %s36, 1
        %s763 = scalar_select %p762, %s36, 1
        %s764 = scalar_lea.vmem %s14, %s763
        %p765 = scmp.lt.s32.totalorder %s36, 1
        %s766 = scalar_select %p765, %s36, 1
        %s767 = smul.addr %s766, 8
        %s768 = smul.addr %s767, 8
        %s769 = scalar_lea.vmem %s15, %s768
        %p770 = scmp.lt.s32.totalorder %s36, 1
        %s771 = scalar_select %p770, %s36, 1
        %s772 = scalar_lea.vmem %s16, %s771
        %p773 = scmp.eq.s32.totalorder %s36, 0
        // Predicated region
        $region89: #{tpu_custom_call.1} parent=87 // pred_check
          %p774 = pneg %p773
        $region90: #{tpu_custom_call.1} parent=87 // pred_check_branch
          %776 = sbr.rel (%p774) target = $region92
        $region91: #{tpu_custom_call.1} parent=87 // pred_region
          %v777 = vld [vmem:[%s721] sm:$0xff]
          %v778 = vld [vmem:[%s1] sm:$0xff]
          %v779 = vld [vmem:[%s1 + $0x8] sm:$0xff]
          %v780 = vld [vmem:[%s2] sm:$0x1]
          %v782 = vlaneseq
          %v783 = vshrl.u32 %v782, 7
          %v784 = vsub.s32 0, %v783
          %v785 = vrot.slane %v780, %v784
          %vm787 = vcmask 130048
          %v789 = vsel %vm787, %v777, 0
          %791 = vmatprep.subr.mxu0 0.0
          %792 = vmatpush1.msra.mxu0 %v778
          %793 = vmatprep.subr.mxu0 0.0
          %794 = vmatpush1.msra.mxu0 %v779
          %795 = vmatprep.subr.mxu0 0.0
          %796 = vmatpush1.msra.mxu0 0.0
          %797 = vmatprep.subr.mxu0 0.0
          %798 = vmatpush1.msra.mxu0 0.0
          %799 = vmatprep.subr.mxu0 0.0
          %800 = vmatpush1.msra.mxu0 0.0
          %801 = vmatprep.subr.mxu0 0.0
          %802 = vmatpush1.msra.mxu0 0.0
          %803 = vmatprep.subr.mxu0 0.0
          %804 = vmatpush1.msra.mxu0 0.0
          %805 = vmatprep.subr.mxu0 0.0
          %806 = vmatpush1.msra.mxu0 0.0
          %807 = vmatprep.subr.mxu0 0.0
          %808 = vmatpush1.msra.mxu0 0.0
          %809 = vmatprep.subr.mxu0 0.0
          %810 = vmatpush1.msra.mxu0 0.0
          %811 = vmatprep.subr.mxu0 0.0
          %812 = vmatpush1.msra.mxu0 0.0
          %813 = vmatprep.subr.mxu0 0.0
          %814 = vmatpush1.msra.mxu0 0.0
          %815 = vmatprep.subr.mxu0 0.0
          %816 = vmatpush1.msra.mxu0 0.0
          %817 = vmatprep.subr.mxu0 0.0
          %818 = vmatpush1.msra.mxu0 0.0
          %819 = vmatprep.subr.mxu0 0.0
          %820 = vmatpush1.msra.mxu0 0.0
          %821 = vmatprep.subr.mxu0 0.0
          %822 = vmatpush1.msra.mxu0 0.0
          %823 = vmatprep.subr.mxu0 0.0
          %824 = vmatpush1.msra.mxu0 0.0
          %825 = vmatprep.subr.mxu0 0.0
          %826 = vmatpush1.msra.mxu0 0.0
          %827 = vmatprep.subr.mxu0 0.0
          %828 = vmatpush1.msra.mxu0 0.0
          %829 = vmatprep.subr.mxu0 0.0
          %830 = vmatpush1.msra.mxu0 0.0
          %831 = vmatprep.subr.mxu0 0.0
          %832 = vmatpush1.msra.mxu0 0.0
          %833 = vmatprep.subr.mxu0 0.0
          %834 = vmatpush1.msra.mxu0 0.0
          %835 = vmatprep.subr.mxu0 0.0
          %836 = vmatpush1.msra.mxu0 0.0
          %837 = vmatprep.subr.mxu0 0.0
          %838 = vmatpush1.msra.mxu0 0.0
          %839 = vmatprep.subr.mxu0 0.0
          %840 = vmatpush1.msra.mxu0 0.0
          %841 = vmatprep.subr.mxu0 0.0
          %842 = vmatpush1.msra.mxu0 0.0
          %843 = vmatprep.subr.mxu0 0.0
          %844 = vmatpush1.msra.mxu0 0.0
          %845 = vmatprep.subr.mxu0 0.0
          %846 = vmatpush1.msra.mxu0 0.0
          %847 = vmatprep.subr.mxu0 0.0
          %848 = vmatpush1.msra.mxu0 0.0
          %849 = vmatprep.subr.mxu0 0.0
          %850 = vmatpush1.msra.mxu0 0.0
          %851 = vmatprep.subr.mxu0 0.0
          %852 = vmatpush1.msra.mxu0 0.0
          %853 = vmatprep.subr.mxu0 0.0
          %854 = vmatpush1.msra.mxu0 0.0
          %855 = vmatprep.mubr.f32.mxu0 0.0
          %856 = vmatmul.mubr.f32.gmra.mrb[0].mxu0 %v789
          %v857 = vpop.f32.mrb[0].mxu0
          %v858 = vadd.f32 %v785, %v857
          %v859 = vpop.f32.mrb[0].mxu0
          %860 = vdwg.mxu0
          %v861 = vld [vmem:[%s3] sm:$0x1]
          %vm862 = vcmask 253952
          %863 = vst.msk [vmem:[#allocation2] sm:$0x1] %vm862, %v861
          %vm864 = vcmask 261120
          %865 = vst.msk [vmem:[#allocation2 + $0x1] sm:$0xff] %vm864, %v858
        $region92: #{tpu_custom_call.1} parent=87 // pred_fallthru
          _
        %v866 = vld [vmem:[#allocation2] sm:$0xff]
        %v867 = vld [vmem:[#allocation2 + $0x8] sm:$0x1]
        %v868 = vld [vmem:[%s724] sm:$0x1]
        %v869 = vld [vmem:[%s727] sm:$0x1]
        %vm870 = vcmask 261120
        %v871 = vsel %vm870, %v866, 0.0
        %872 = vadd.xlane.f32.xlu0 %v871
        %v873 = vpop.xlane.xlu0 %872
        %vm874 = vcmask 253952
        %v875 = vsel %vm874, %v867, 0.0
        %876 = vadd.xlane.f32.xlu0 %v875
        %v877 = vpop.xlane.xlu0 %876
        %v878 = vrcp.pop 32.0
        %v879 = vmul.f32 %v873, %v878
        %v880 = vmul.f32 %v877, %v878
        %v881 = vsub.f32 %v866, %v879
        %v882 = vsub.f32 %v867, %v880
        %v883 = vmul.f32 %v881, %v881
        %v884 = vmul.f32 %v882, %v882
        %v885 = vsel %vm870, %v883, 0.0
        %886 = vadd.xlane.f32.xlu0 %v885
        %v887 = vpop.xlane.xlu0 %886
        %v888 = vsel %vm874, %v884, 0.0
        %889 = vadd.xlane.f32.xlu0 %v888
        %v890 = vpop.xlane.xlu0 %889
        %v891 = vmul.f32 %v887, %v878
        %v892 = vmul.f32 %v890, %v878
        %v893 = vadd.f32 %v891, 1e-05
        %v894 = vadd.f32 %v892, 1e-05
        %v895 = vrsqrt.pop %v893
        %v896 = vrsqrt.pop %v894
        %v897 = vmul.f32 %v881, %v895
        %v898 = vmul.f32 %v882, %v896
        %v900 = vlaneseq
        %v901 = vshrl.u32 %v900, 7
        %v902 = vsub.s32 0, %v901
        %v903 = vrot.slane %v868, %v902
        %v905 = vmul.f32 %v897, %v903
        %v906 = vmul.f32 %v898, %v903
        %v908 = vlaneseq
        %v909 = vshrl.u32 %v908, 7
        %v910 = vsub.s32 0, %v909
        %v911 = vrot.slane %v869, %v910
        %v913 = vadd.f32 %v905, %v911
        %v914 = vadd.f32 %v906, %v911
        %v915 = vld [vmem:[%s732] sm:$0xff]
        %v916 = vld [vmem:[%s732 + $0x8] sm:$0xff]
        %v917 = vld [vmem:[%s732 + $0x10] sm:$0xff]
        %v918 = vld [vmem:[%s732 + $0x18] sm:$0xff]
        %v919 = vld [vmem:[%s732 + $0x20] sm:$0xff]
        %v920 = vld [vmem:[%s732 + $0x28] sm:$0xff]
        %v921 = vld [vmem:[%s732 + $0x30] sm:$0xff]
        %v922 = vld [vmem:[%s732 + $0x38] sm:$0xff]
        %v923 = vld [vmem:[%s732 + $0x40] sm:$0xff]
        %v924 = vld [vmem:[%s732 + $0x48] sm:$0xff]
        %v925 = vld [vmem:[%s732 + $0x50] sm:$0xff]
        %v926 = vld [vmem:[%s732 + $0x58] sm:$0xff]
        %v927 = vld [vmem:[%s732 + $0x60] sm:$0xff]
        %v928 = vld [vmem:[%s732 + $0x68] sm:$0xff]
        %v929 = vld [vmem:[%s732 + $0x70] sm:$0xff]
        %v930 = vld [vmem:[%s732 + $0x78] sm:$0xff]
        %v931 = vld [vmem:[%s737] sm:$0xff]
        %v932 = vld [vmem:[%s737 + $0x8] sm:$0xff]
        %v933 = vld [vmem:[%s737 + $0x10] sm:$0xff]
        %v934 = vld [vmem:[%s737 + $0x18] sm:$0xff]
        %v935 = vld [vmem:[%s737 + $0x20] sm:$0xff]
        %v936 = vld [vmem:[%s737 + $0x28] sm:$0xff]
        %v937 = vld [vmem:[%s737 + $0x30] sm:$0xff]
        %v938 = vld [vmem:[%s737 + $0x38] sm:$0xff]
        %v939 = vld [vmem:[%s737 + $0x40] sm:$0xff]
        %v940 = vld [vmem:[%s737 + $0x48] sm:$0xff]
        %v941 = vld [vmem:[%s737 + $0x50] sm:$0xff]
        %v942 = vld [vmem:[%s737 + $0x58] sm:$0xff]
        %v943 = vld [vmem:[%s737 + $0x60] sm:$0xff]
        %v944 = vld [vmem:[%s737 + $0x68] sm:$0xff]
        %v945 = vld [vmem:[%s737 + $0x70] sm:$0xff]
        %v946 = vld [vmem:[%s737 + $0x78] sm:$0xff]
        %v947 = vld [vmem:[%s742] sm:$0xff]
        %v948 = vld [vmem:[%s742 + $0x8] sm:$0xff]
        %v949 = vld [vmem:[%s742 + $0x10] sm:$0xff]
        %v950 = vld [vmem:[%s742 + $0x18] sm:$0xff]
        %v951 = vld [vmem:[%s742 + $0x20] sm:$0xff]
        %v952 = vld [vmem:[%s742 + $0x28] sm:$0xff]
        %v953 = vld [vmem:[%s742 + $0x30] sm:$0xff]
        %v954 = vld [vmem:[%s742 + $0x38] sm:$0xff]
        %v955 = vld [vmem:[%s742 + $0x40] sm:$0xff]
        %v956 = vld [vmem:[%s742 + $0x48] sm:$0xff]
        %v957 = vld [vmem:[%s742 + $0x50] sm:$0xff]
        %v958 = vld [vmem:[%s742 + $0x58] sm:$0xff]
        %v959 = vld [vmem:[%s742 + $0x60] sm:$0xff]
        %v960 = vld [vmem:[%s742 + $0x68] sm:$0xff]
        %v961 = vld [vmem:[%s742 + $0x70] sm:$0xff]
        %v962 = vld [vmem:[%s742 + $0x78] sm:$0xff]
        %v964 = vsel %vm870, %v913, 0
        %v967 = vsel %vm870, %v914, 0
        %969 = vmatprep.subr.mxu0 0.0
        %970 = vmatpush1.msra.mxu0 %v915
        %971 = vmatprep.subr.mxu0 0.0
        %972 = vmatpush1.msra.mxu0 %v916
        %973 = vmatprep.subr.mxu0 0.0
        %974 = vmatpush1.msra.mxu0 %v917
        %975 = vmatprep.subr.mxu0 0.0
        %976 = vmatpush1.msra.mxu0 %v918
        %977 = vmatprep.subr.mxu0 0.0
        %978 = vmatpush1.msra.mxu0 0.0
        %979 = vmatprep.subr.mxu0 0.0
        %980 = vmatpush1.msra.mxu0 0.0
        %981 = vmatprep.subr.mxu0 0.0
        %982 = vmatpush1.msra.mxu0 0.0
        %983 = vmatprep.subr.mxu0 0.0
        %984 = vmatpush1.msra.mxu0 0.0
        %985 = vmatprep.subr.mxu0 0.0
        %986 = vmatpush1.msra.mxu0 0.0
        %987 = vmatprep.subr.mxu0 0.0
        %988 = vmatpush1.msra.mxu0 0.0
        %989 = vmatprep.subr.mxu0 0.0
        %990 = vmatpush1.msra.mxu0 0.0
        %991 = vmatprep.subr.mxu0 0.0
        %992 = vmatpush1.msra.mxu0 0.0
        %993 = vmatprep.subr.mxu0 0.0
        %994 = vmatpush1.msra.mxu0 0.0
        %995 = vmatprep.subr.mxu0 0.0
        %996 = vmatpush1.msra.mxu0 0.0
        %997 = vmatprep.subr.mxu0 0.0
        %998 = vmatpush1.msra.mxu0 0.0
        %999 = vmatprep.subr.mxu0 0.0
        %1000 = vmatpush1.msra.mxu0 0.0
        %1001 = vmatprep.subr.mxu0 0.0
        %1002 = vmatpush1.msra.mxu0 0.0
        %1003 = vmatprep.subr.mxu0 0.0
        %1004 = vmatpush1.msra.mxu0 0.0
        %1005 = vmatprep.subr.mxu0 0.0
        %1006 = vmatpush1.msra.mxu0 0.0
        %1007 = vmatprep.subr.mxu0 0.0
        %1008 = vmatpush1.msra.mxu0 0.0
        %1009 = vmatprep.subr.mxu0 0.0
        %1010 = vmatpush1.msra.mxu0 0.0
        %1011 = vmatprep.subr.mxu0 0.0
        %1012 = vmatpush1.msra.mxu0 0.0
        %1013 = vmatprep.subr.mxu0 0.0
        %1014 = vmatpush1.msra.mxu0 0.0
        %1015 = vmatprep.subr.mxu0 0.0
        %1016 = vmatpush1.msra.mxu0 0.0
        %1017 = vmatprep.subr.mxu0 0.0
        %1018 = vmatpush1.msra.mxu0 0.0
        %1019 = vmatprep.subr.mxu0 0.0
        %1020 = vmatpush1.msra.mxu0 0.0
        %1021 = vmatprep.subr.mxu0 0.0
        %1022 = vmatpush1.msra.mxu0 0.0
        %1023 = vmatprep.subr.mxu0 0.0
        %1024 = vmatpush1.msra.mxu0 0.0
        %1025 = vmatprep.subr.mxu0 0.0
        %1026 = vmatpush1.msra.mxu0 0.0
        %1027 = vmatprep.subr.mxu0 0.0
        %1028 = vmatpush1.msra.mxu0 0.0
        %1029 = vmatprep.subr.mxu0 0.0
        %1030 = vmatpush1.msra.mxu0 0.0
        %1031 = vmatprep.subr.mxu0 0.0
        %1032 = vmatpush1.msra.mxu0 0.0
        %1033 = vmatprep.mubr.f32.mxu0 0.0
        %1034 = vmatmul.mubr.f32.gmra.mrb[0].mxu0 %v964
        %v1035 = vpop.f32.mrb[0].mxu0
        %v1036 = vadd.f32 0.0, %v1035
        %v1037 = vpop.f32.mrb[0].mxu0
        %1038 = vmatprep.mubr.f32.mxu0 0.0
        %1039 = vmatmul.mubr.f32.gmra.mrb[0].mxu0 %v967
        %v1040 = vpop.f32.mrb[0].mxu0
        %v1041 = vadd.f32 0.0, %v1040
        %v1042 = vpop.f32.mrb[0].mxu0
        %1043 = vdwg.mxu0
        %1044 = vmatprep.subr.mxu0 0.0
        %1045 = vmatpush1.msra.mxu0 %v919
        %1046 = vmatprep.subr.mxu0 0.0
        %1047 = vmatpush1.msra.mxu0 %v920
        %1048 = vmatprep.subr.mxu0 0.0
        %1049 = vmatpush1.msra.mxu0 %v921
        %1050 = vmatprep.subr.mxu0 0.0
        %1051 = vmatpush1.msra.mxu0 %v922
        %1052 = vmatprep.subr.mxu0 0.0
        %1053 = vmatpush1.msra.mxu0 0.0
        %1054 = vmatprep.subr.mxu0 0.0
        %1055 = vmatpush1.msra.mxu0 0.0
        %1056 = vmatprep.subr.mxu0 0.0
        %1057 = vmatpush1.msra.mxu0 0.0
        %1058 = vmatprep.subr.mxu0 0.0
        %1059 = vmatpush1.msra.mxu0 0.0
        %1060 = vmatprep.subr.mxu0 0.0
        %1061 = vmatpush1.msra.mxu0 0.0
        %1062 = vmatprep.subr.mxu0 0.0
        %1063 = vmatpush1.msra.mxu0 0.0
        %1064 = vmatprep.subr.mxu0 0.0
        %1065 = vmatpush1.msra.mxu0 0.0
        %1066 = vmatprep.subr.mxu0 0.0
        %1067 = vmatpush1.msra.mxu0 0.0
        %1068 = vmatprep.subr.mxu0 0.0
        %1069 = vmatpush1.msra.mxu0 0.0
        %1070 = vmatprep.subr.mxu0 0.0
        %1071 = vmatpush1.msra.mxu0 0.0
        %1072 = vmatprep.subr.mxu0 0.0
        %1073 = vmatpush1.msra.mxu0 0.0
        %1074 = vmatprep.subr.mxu0 0.0
        %1075 = vmatpush1.msra.mxu0 0.0
        %1076 = vmatprep.subr.mxu0 0.0
        %1077 = vmatpush1.msra.mxu0 0.0
        %1078 = vmatprep.subr.mxu0 0.0
        %1079 = vmatpush1.msra.mxu0 0.0
        %1080 = vmatprep.subr.mxu0 0.0
        %1081 = vmatpush1.msra.mxu0 0.0
        %1082 = vmatprep.subr.mxu0 0.0
        %1083 = vmatpush1.msra.mxu0 0.0
        %1084 = vmatprep.subr.mxu0 0.0
        %1085 = vmatpush1.msra.mxu0 0.0
        %1086 = vmatprep.subr.mxu0 0.0
        %1087 = vmatpush1.msra.mxu0 0.0
        %1088 = vmatprep.subr.mxu0 0.0
        %1089 = vmatpush1.msra.mxu0 0.0
        %1090 = vmatprep.subr.mxu0 0.0
        %1091 = vmatpush1.msra.mxu0 0.0
        %1092 = vmatprep.subr.mxu0 0.0
        %1093 = vmatpush1.msra.mxu0 0.0
        %1094 = vmatprep.subr.mxu0 0.0
        %1095 = vmatpush1.msra.mxu0 0.0
        %1096 = vmatprep.subr.mxu0 0.0
        %1097 = vmatpush1.msra.mxu0 0.0
        %1098 = vmatprep.subr.mxu0 0.0
        %1099 = vmatpush1.msra.mxu0 0.0
        %1100 = vmatprep.subr.mxu0 0.0
        %1101 = vmatpush1.msra.mxu0 0.0
        %1102 = vmatprep.subr.mxu0 0.0
        %1103 = vmatpush1.msra.mxu0 0.0
        %1104 = vmatprep.subr.mxu0 0.0
        %1105 = vmatpush1.msra.mxu0 0.0
        %1106 = vmatprep.subr.mxu0 0.0
        %1107 = vmatpush1.msra.mxu0 0.0
        %1108 = vmatprep.mubr.f32.mxu0 0.0
        %1109 = vmatmul.mubr.f32.gmra.mrb[0].mxu0 %v964
        %v1110 = vpop.f32.mrb[0].mxu0
        %v1111 = vadd.f32 0.0, %v1110
        %v1112 = vpop.f32.mrb[0].mxu0
        %1113 = vmatprep.mubr.f32.mxu0 0.0
        %1114 = vmatmul.mubr.f32.gmra.mrb[0].mxu0 %v967
        %v1115 = vpop.f32.mrb[0].mxu0
        %v1116 = vadd.f32 0.0, %v1115
        %v1117 = vpop.f32.mrb[0].mxu0
        %1118 = vdwg.mxu0
        %1119 = vmatprep.subr.mxu0 0.0
        %1120 = vmatpush1.msra.mxu0 %v923
        %1121 = vmatprep.subr.mxu0 0.0
        %1122 = vmatpush1.msra.mxu0 %v924
        %1123 = vmatprep.subr.mxu0 0.0
        %1124 = vmatpush1.msra.mxu0 %v925
        %1125 = vmatprep.subr.mxu0 0.0
        %1126 = vmatpush1.msra.mxu0 %v926
        %1127 = vmatprep.subr.mxu0 0.0
        %1128 = vmatpush1.msra.mxu0 0.0
        %1129 = vmatprep.subr.mxu0 0.0
        %1130 = vmatpush1.msra.mxu0 0.0
        %1131 = vmatprep.subr.mxu0 0.0
        %1132 = vmatpush1.msra.mxu0 0.0
        %1133 = vmatprep.subr.mxu0 0.0
        %1134 = vmatpush1.msra.mxu0 0.0
        %1135 = vmatprep.subr.mxu0 0.0
        %1136 = vmatpush1.msra.mxu0 0.0
        %1137 = vmatprep.subr.mxu0 0.0
        %1138 = vmatpush1.msra.mxu0 0.0
        %1139 = vmatprep.subr.mxu0 0.0
        %1140 = vmatpush1.msra.mxu0 0.0
        %1141 = vmatprep.subr.mxu0 0.0
        %1142 = vmatpush1.msra.mxu0 0.0
        %1143 = vmatprep.subr.mxu0 0.0
        %1144 = vmatpush1.msra.mxu0 0.0
        %1145 = vmatprep.subr.mxu0 0.0
        %1146 = vmatpush1.msra.mxu0 0.0
        %1147 = vmatprep.subr.mxu0 0.0
        %1148 = vmatpush1.msra.mxu0 0.0
        %1149 = vmatprep.subr.mxu0 0.0
        %1150 = vmatpush1.msra.mxu0 0.0
        %1151 = vmatprep.subr.mxu0 0.0
        %1152 = vmatpush1.msra.mxu0 0.0
        %1153 = vmatprep.subr.mxu0 0.0
        %1154 = vmatpush1.msra.mxu0 0.0
        %1155 = vmatprep.subr.mxu0 0.0
        %1156 = vmatpush1.msra.mxu0 0.0
        %1157 = vmatprep.subr.mxu0 0.0
        %1158 = vmatpush1.msra.mxu0 0.0
        %1159 = vmatprep.subr.mxu0 0.0
        %1160 = vmatpush1.msra.mxu0 0.0
        %1161 = vmatprep.subr.mxu0 0.0
        %1162 = vmatpush1.msra.mxu0 0.0
        %1163 = vmatprep.subr.mxu0 0.0
        %1164 = vmatpush1.msra.mxu0 0.0
        %1165 = vmatprep.subr.mxu0 0.0
        %1166 = vmatpush1.msra.mxu0 0.0
        %1167 = vmatprep.subr.mxu0 0.0
        %1168 = vmatpush1.msra.mxu0 0.0
        %1169 = vmatprep.subr.mxu0 0.0
        %1170 = vmatpush1.msra.mxu0 0.0
        %1171 = vmatprep.subr.mxu0 0.0
        %1172 = vmatpush1.msra.mxu0 0.0
        %1173 = vmatprep.subr.mxu0 0.0
        %1174 = vmatpush1.msra.mxu0 0.0
        %1175 = vmatprep.subr.mxu0 0.0
        %1176 = vmatpush1.msra.mxu0 0.0
        %1177 = vmatprep.subr.mxu0 0.0
        %1178 = vmatpush1.msra.mxu0 0.0
        %1179 = vmatprep.subr.mxu0 0.0
        %1180 = vmatpush1.msra.mxu0 0.0
        %1181 = vmatprep.subr.mxu0 0.0
        %1182 = vmatpush1.msra.mxu0 0.0
        %1183 = vmatprep.mubr.f32.mxu0 0.0
        %1184 = vmatmul.mubr.f32.gmra.mrb[0].mxu0 %v964
        %v1185 = vpop.f32.mrb[0].mxu0
        %v1186 = vadd.f32 0.0, %v1185
        %v1187 = vpop.f32.mrb[0].mxu0
        %1188 = vmatprep.mubr.f32.mxu0 0.0
        %1189 = vmatmul.mubr.f32.gmra.mrb[0].mxu0 %v967
        %v1190 = vpop.f32.mrb[0].mxu0
        %v1191 = vadd.f32 0.0, %v1190
        %v1192 = vpop.f32.mrb[0].mxu0
        %1193 = vdwg.mxu0
        %1194 = vmatprep.subr.mxu0 0.0
        %1195 = vmatpush1.msra.mxu0 %v927
        %1196 = vmatprep.subr.mxu0 0.0
        %1197 = vmatpush1.msra.mxu0 %v928
        %1198 = vmatprep.subr.mxu0 0.0
        %1199 = vmatpush1.msra.mxu0 %v929
        %1200 = vmatprep.subr.mxu0 0.0
        %1201 = vmatpush1.msra.mxu0 %v930
        %1202 = vmatprep.subr.mxu0 0.0
        %1203 = vmatpush1.msra.mxu0 0.0
        %1204 = vmatprep.subr.mxu0 0.0
        %1205 = vmatpush1.msra.mxu0 0.0
        %1206 = vmatprep.subr.mxu0 0.0
        %1207 = vmatpush1.msra.mxu0 0.0
        %1208 = vmatprep.subr.mxu0 0.0
        %1209 = vmatpush1.msra.mxu0 0.0
        %1210 = vmatprep.subr.mxu0 0.0
        %1211 = vmatpush1.msra.mxu0 0.0
        %1212 = vmatprep.subr.mxu0 0.0
        %1213 = vmatpush1.msra.mxu0 0.0
        %1214 = vmatprep.subr.mxu0 0.0
        %1215 = vmatpush1.msra.mxu0 0.0
        %1216 = vmatprep.subr.mxu0 0.0
        %1217 = vmatpush1.msra.mxu0 0.0
        %1218 = vmatprep.subr.mxu0 0.0
        %1219 = vmatpush1.msra.mxu0 0.0
        %1220 = vmatprep.subr.mxu0 0.0
        %1221 = vmatpush1.msra.mxu0 0.0
        %1222 = vmatprep.subr.mxu0 0.0
        %1223 = vmatpush1.msra.mxu0 0.0
        %1224 = vmatprep.subr.mxu0 0.0
        %1225 = vmatpush1.msra.mxu0 0.0
        %1226 = vmatprep.subr.mxu0 0.0
        %1227 = vmatpush1.msra.mxu0 0.0
        %1228 = vmatprep.subr.mxu0 0.0
        %1229 = vmatpush1.msra.mxu0 0.0
        %1230 = vmatprep.subr.mxu0 0.0
        %1231 = vmatpush1.msra.mxu0 0.0
        %1232 = vmatprep.subr.mxu0 0.0
        %1233 = vmatpush1.msra.mxu0 0.0
        %1234 = vmatprep.subr.mxu0 0.0
        %1235 = vmatpush1.msra.mxu0 0.0
        %1236 = vmatprep.subr.mxu0 0.0
        %1237 = vmatpush1.msra.mxu0 0.0
        %1238 = vmatprep.subr.mxu0 0.0
        %1239 = vmatpush1.msra.mxu0 0.0
        %1240 = vmatprep.subr.mxu0 0.0
        %1241 = vmatpush1.msra.mxu0 0.0
        %1242 = vmatprep.subr.mxu0 0.0
        %1243 = vmatpush1.msra.mxu0 0.0
        %1244 = vmatprep.subr.mxu0 0.0
        %1245 = vmatpush1.msra.mxu0 0.0
        %1246 = vmatprep.subr.mxu0 0.0
        %1247 = vmatpush1.msra.mxu0 0.0
        %1248 = vmatprep.subr.mxu0 0.0
        %1249 = vmatpush1.msra.mxu0 0.0
        %1250 = vmatprep.subr.mxu0 0.0
        %1251 = vmatpush1.msra.mxu0 0.0
        %1252 = vmatprep.subr.mxu0 0.0
        %1253 = vmatpush1.msra.mxu0 0.0
        %1254 = vmatprep.subr.mxu0 0.0
        %1255 = vmatpush1.msra.mxu0 0.0
        %1256 = vmatprep.subr.mxu0 0.0
        %1257 = vmatpush1.msra.mxu0 0.0
        %1258 = vmatprep.mubr.f32.mxu0 0.0
        %1259 = vmatmul.mubr.f32.gmra.mrb[0].mxu0 %v964
        %v1260 = vpop.f32.mrb[0].mxu0
        %v1261 = vadd.f32 0.0, %v1260
        %v1262 = vpop.f32.mrb[0].mxu0
        %1263 = vmatprep.mubr.f32.mxu0 0.0
        %1264 = vmatmul.mubr.f32.gmra.mrb[0].mxu0 %v967
        %v1265 = vpop.f32.mrb[0].mxu0
        %v1266 = vadd.f32 0.0, %v1265
        %v1267 = vpop.f32.mrb[0].mxu0
        %1268 = vdwg.mxu0
        %1269 = vmatprep.subr.mxu0 0.0
        %1270 = vmatpush1.msra.mxu0 %v931
        %1271 = vmatprep.subr.mxu0 0.0
        %1272 = vmatpush1.msra.mxu0 %v932
        %1273 = vmatprep.subr.mxu0 0.0
        %1274 = vmatpush1.msra.mxu0 %v933
        %1275 = vmatprep.subr.mxu0 0.0
        %1276 = vmatpush1.msra.mxu0 %v934
        %1277 = vmatprep.subr.mxu0 0.0
        %1278 = vmatpush1.msra.mxu0 0.0
        %1279 = vmatprep.subr.mxu0 0.0
        %1280 = vmatpush1.msra.mxu0 0.0
        %1281 = vmatprep.subr.mxu0 0.0
        %1282 = vmatpush1.msra.mxu0 0.0
        %1283 = vmatprep.subr.mxu0 0.0
        %1284 = vmatpush1.msra.mxu0 0.0
        %1285 = vmatprep.subr.mxu0 0.0
        %1286 = vmatpush1.msra.mxu0 0.0
        %1287 = vmatprep.subr.mxu0 0.0
        %1288 = vmatpush1.msra.mxu0 0.0
        %1289 = vmatprep.subr.mxu0 0.0
        %1290 = vmatpush1.msra.mxu0 0.0
        %1291 = vmatprep.subr.mxu0 0.0
        %1292 = vmatpush1.msra.mxu0 0.0
        %1293 = vmatprep.subr.mxu0 0.0
        %1294 = vmatpush1.msra.mxu0 0.0
        %1295 = vmatprep.subr.mxu0 0.0
        %1296 = vmatpush1.msra.mxu0 0.0
        %1297 = vmatprep.subr.mxu0 0.0
        %1298 = vmatpush1.msra.mxu0 0.0
        %1299 = vmatprep.subr.mxu0 0.0
        %1300 = vmatpush1.msra.mxu0 0.0
        %1301 = vmatprep.subr.mxu0 0.0
        %1302 = vmatpush1.msra.mxu0 0.0
        %1303 = vmatprep.subr.mxu0 0.0
        %1304 = vmatpush1.msra.mxu0 0.0
        %1305 = vmatprep.subr.mxu0 0.0
        %1306 = vmatpush1.msra.mxu0 0.0
        %1307 = vmatprep.subr.mxu0 0.0
        %1308 = vmatpush1.msra.mxu0 0.0
        %1309 = vmatprep.subr.mxu0 0.0
        %1310 = vmatpush1.msra.mxu0 0.0
        %1311 = vmatprep.subr.mxu0 0.0
        %1312 = vmatpush1.msra.mxu0 0.0
        %1313 = vmatprep.subr.mxu0 0.0
        %1314 = vmatpush1.msra.mxu0 0.0
        %1315 = vmatprep.subr.mxu0 0.0
        %1316 = vmatpush1.msra.mxu0 0.0
        %1317 = vmatprep.subr.mxu0 0.0
        %1318 = vmatpush1.msra.mxu0 0.0
        %1319 = vmatprep.subr.mxu0 0.0
        %1320 = vmatpush1.msra.mxu0 0.0
        %1321 = vmatprep.subr.mxu0 0.0
        %1322 = vmatpush1.msra.mxu0 0.0
        %1323 = vmatprep.subr.mxu0 0.0
        %1324 = vmatpush1.msra.mxu0 0.0
        %1325 = vmatprep.subr.mxu0 0.0
        %1326 = vmatpush1.msra.mxu0 0.0
        %1327 = vmatprep.subr.mxu0 0.0
        %1328 = vmatpush1.msra.mxu0 0.0
        %1329 = vmatprep.subr.mxu0 0.0
        %1330 = vmatpush1.msra.mxu0 0.0
        %1331 = vmatprep.subr.mxu0 0.0
        %1332 = vmatpush1.msra.mxu0 0.0
        %1333 = vmatprep.mubr.f32.mxu0 0.0
        %1334 = vmatmul.mubr.f32.gmra.mrb[0].mxu0 %v964
        %v1335 = vpop.f32.mrb[0].mxu0
        %v1336 = vadd.f32 0.0, %v1335
        %v1337 = vpop.f32.mrb[0].mxu0
        %1338 = vmatprep.mubr.f32.mxu0 0.0
        %1339 = vmatmul.mubr.f32.gmra.mrb[0].mxu0 %v967
        %v1340 = vpop.f32.mrb[0].mxu0
        %v1341 = vadd.f32 0.0, %v1340
        %v1342 = vpop.f32.mrb[0].mxu0
        %1343 = vdwg.mxu0
        %1344 = vmatprep.subr.mxu0 0.0
        %1345 = vmatpush1.msra.mxu0 %v935
        %1346 = vmatprep.subr.mxu0 0.0
        %1347 = vmatpush1.msra.mxu0 %v936
        %1348 = vmatprep.subr.mxu0 0.0
        %1349 = vmatpush1.msra.mxu0 %v937
        %1350 = vmatprep.subr.mxu0 0.0
        %1351 = vmatpush1.msra.mxu0 %v938
        %1352 = vmatprep.subr.mxu0 0.0
        %1353 = vmatpush1.msra.mxu0 0.0
        %1354 = vmatprep.subr.mxu0 0.0
        %1355 = vmatpush1.msra.mxu0 0.0
        %1356 = vmatprep.subr.mxu0 0.0
        %1357 = vmatpush1.msra.mxu0 0.0
        %1358 = vmatprep.subr.mxu0 0.0
        %1359 = vmatpush1.msra.mxu0 0.0
        %1360 = vmatprep.subr.mxu0 0.0
        %1361 = vmatpush1.msra.mxu0 0.0
        %1362 = vmatprep.subr.mxu0 0.0
        %1363 = vmatpush1.msra.mxu0 0.0
        %1364 = vmatprep.subr.mxu0 0.0
        %1365 = vmatpush1.msra.mxu0 0.0
        %1366 = vmatprep.subr.mxu0 0.0
        %1367 = vmatpush1.msra.mxu0 0.0
        %1368 = vmatprep.subr.mxu0 0.0
        %1369 = vmatpush1.msra.mxu0 0.0
        %1370 = vmatprep.subr.mxu0 0.0
        %1371 = vmatpush1.msra.mxu0 0.0
        %1372 = vmatprep.subr.mxu0 0.0
        %1373 = vmatpush1.msra.mxu0 0.0
        %1374 = vmatprep.subr.mxu0 0.0
        %1375 = vmatpush1.msra.mxu0 0.0
        %1376 = vmatprep.subr.mxu0 0.0
        %1377 = vmatpush1.msra.mxu0 0.0
        %1378 = vmatprep.subr.mxu0 0.0
        %1379 = vmatpush1.msra.mxu0 0.0
        %1380 = vmatprep.subr.mxu0 0.0
        %1381 = vmatpush1.msra.mxu0 0.0
        %1382 = vmatprep.subr.mxu0 0.0
        %1383 = vmatpush1.msra.mxu0 0.0
        %1384 = vmatprep.subr.mxu0 0.0
        %1385 = vmatpush1.msra.mxu0 0.0
        %1386 = vmatprep.subr.mxu0 0.0
        %1387 = vmatpush1.msra.mxu0 0.0
        %1388 = vmatprep.subr.mxu0 0.0
        %1389 = vmatpush1.msra.mxu0 0.0
        %1390 = vmatprep.subr.mxu0 0.0
        %1391 = vmatpush1.msra.mxu0 0.0
        %1392 = vmatprep.subr.mxu0 0.0
        %1393 = vmatpush1.msra.mxu0 0.0
        %1394 = vmatprep.subr.mxu0 0.0
        %1395 = vmatpush1.msra.mxu0 0.0
        %1396 = vmatprep.subr.mxu0 0.0
        %1397 = vmatpush1.msra.mxu0 0.0
        %1398 = vmatprep.subr.mxu0 0.0
        %1399 = vmatpush1.msra.mxu0 0.0
        %1400 = vmatprep.subr.mxu0 0.0
        %1401 = vmatpush1.msra.mxu0 0.0
        %1402 = vmatprep.subr.mxu0 0.0
        %1403 = vmatpush1.msra.mxu0 0.0
        %1404 = vmatprep.subr.mxu0 0.0
        %1405 = vmatpush1.msra.mxu0 0.0
        %1406 = vmatprep.subr.mxu0 0.0
        %1407 = vmatpush1.msra.mxu0 0.0
        %1408 = vmatprep.mubr.f32.mxu0 0.0
        %1409 = vmatmul.mubr.f32.gmra.mrb[0].mxu0 %v964
        %v1410 = vpop.f32.mrb[0].mxu0
        %v1411 = vadd.f32 0.0, %v1410
        %v1412 = vpop.f32.mrb[0].mxu0
        %1413 = vmatprep.mubr.f32.mxu0 0.0
        %1414 = vmatmul.mubr.f32.gmra.mrb[0].mxu0 %v967
        %v1415 = vpop.f32.mrb[0].mxu0
        %v1416 = vadd.f32 0.0, %v1415
        %v1417 = vpop.f32.mrb[0].mxu0
        %1418 = vdwg.mxu0
        %1419 = vmatprep.subr.mxu0 0.0
        %1420 = vmatpush1.msra.mxu0 %v939
        %1421 = vmatprep.subr.mxu0 0.0
        %1422 = vmatpush1.msra.mxu0 %v940
        %1423 = vmatprep.subr.mxu0 0.0
        %1424 = vmatpush1.msra.mxu0 %v941
        %1425 = vmatprep.subr.mxu0 0.0
        %1426 = vmatpush1.msra.mxu0 %v942
        %1427 = vmatprep.subr.mxu0 0.0
        %1428 = vmatpush1.msra.mxu0 0.0
        %1429 = vmatprep.subr.mxu0 0.0
        %1430 = vmatpush1.msra.mxu0 0.0
        %1431 = vmatprep.subr.mxu0 0.0
        %1432 = vmatpush1.msra.mxu0 0.0
        %1433 = vmatprep.subr.mxu0 0.0
        %1434 = vmatpush1.msra.mxu0 0.0
        %1435 = vmatprep.subr.mxu0 0.0
        %1436 = vmatpush1.msra.mxu0 0.0
        %1437 = vmatprep.subr.mxu0 0.0
        %1438 = vmatpush1.msra.mxu0 0.0
        %1439 = vmatprep.subr.mxu0 0.0
        %1440 = vmatpush1.msra.mxu0 0.0
        %1441 = vmatprep.subr.mxu0 0.0
        %1442 = vmatpush1.msra.mxu0 0.0
        %1443 = vmatprep.subr.mxu0 0.0
        %1444 = vmatpush1.msra.mxu0 0.0
        %1445 = vmatprep.subr.mxu0 0.0
        %1446 = vmatpush1.msra.mxu0 0.0
        %1447 = vmatprep.subr.mxu0 0.0
        %1448 = vmatpush1.msra.mxu0 0.0
        %1449 = vmatprep.subr.mxu0 0.0
        %1450 = vmatpush1.msra.mxu0 0.0
        %1451 = vmatprep.subr.mxu0 0.0
        %1452 = vmatpush1.msra.mxu0 0.0
        %1453 = vmatprep.subr.mxu0 0.0
        %1454 = vmatpush1.msra.mxu0 0.0
        %1455 = vmatprep.subr.mxu0 0.0
        %1456 = vmatpush1.msra.mxu0 0.0
        %1457 = vmatprep.subr.mxu0 0.0
        %1458 = vmatpush1.msra.mxu0 0.0
        %1459 = vmatprep.subr.mxu0 0.0
        %1460 = vmatpush1.msra.mxu0 0.0
        %1461 = vmatprep.subr.mxu0 0.0
        %1462 = vmatpush1.msra.mxu0 0.0
        %1463 = vmatprep.subr.mxu0 0.0
        %1464 = vmatpush1.msra.mxu0 0.0
        %1465 = vmatprep.subr.mxu0 0.0
        %1466 = vmatpush1.msra.mxu0 0.0
        %1467 = vmatprep.subr.mxu0 0.0
        %1468 = vmatpush1.msra.mxu0 0.0
        %1469 = vmatprep.subr.mxu0 0.0
        %1470 = vmatpush1.msra.mxu0 0.0
        %1471 = vmatprep.subr.mxu0 0.0
        %1472 = vmatpush1.msra.mxu0 0.0
        %1473 = vmatprep.subr.mxu0 0.0
        %1474 = vmatpush1.msra.mxu0 0.0
        %1475 = vmatprep.subr.mxu0 0.0
        %1476 = vmatpush1.msra.mxu0 0.0
        %1477 = vmatprep.subr.mxu0 0.0
        %1478 = vmatpush1.msra.mxu0 0.0
        %1479 = vmatprep.subr.mxu0 0.0
        %1480 = vmatpush1.msra.mxu0 0.0
        %1481 = vmatprep.subr.mxu0 0.0
        %1482 = vmatpush1.msra.mxu0 0.0
        %1483 = vmatprep.mubr.f32.mxu0 0.0
        %1484 = vmatmul.mubr.f32.gmra.mrb[0].mxu0 %v964
        %v1485 = vpop.f32.mrb[0].mxu0
        %v1486 = vadd.f32 0.0, %v1485
        %v1487 = vpop.f32.mrb[0].mxu0
        %1488 = vmatprep.mubr.f32.mxu0 0.0
        %1489 = vmatmul.mubr.f32.gmra.mrb[0].mxu0 %v967
        %v1490 = vpop.f32.mrb[0].mxu0
        %v1491 = vadd.f32 0.0, %v1490
        %v1492 = vpop.f32.mrb[0].mxu0
        %1493 = vdwg.mxu0
        %1494 = vmatprep.subr.mxu0 0.0
        %1495 = vmatpush1.msra.mxu0 %v943
        %1496 = vmatprep.subr.mxu0 0.0
        %1497 = vmatpush1.msra.mxu0 %v944
        %1498 = vmatprep.subr.mxu0 0.0
        %1499 = vmatpush1.msra.mxu0 %v945
        %1500 = vmatprep.subr.mxu0 0.0
        %1501 = vmatpush1.msra.mxu0 %v946
        %1502 = vmatprep.subr.mxu0 0.0
        %1503 = vmatpush1.msra.mxu0 0.0
        %1504 = vmatprep.subr.mxu0 0.0
        %1505 = vmatpush1.msra.mxu0 0.0
        %1506 = vmatprep.subr.mxu0 0.0
        %1507 = vmatpush1.msra.mxu0 0.0
        %1508 = vmatprep.subr.mxu0 0.0
        %1509 = vmatpush1.msra.mxu0 0.0
        %1510 = vmatprep.subr.mxu0 0.0
        %1511 = vmatpush1.msra.mxu0 0.0
        %1512 = vmatprep.subr.mxu0 0.0
        %1513 = vmatpush1.msra.mxu0 0.0
        %1514 = vmatprep.subr.mxu0 0.0
        %1515 = vmatpush1.msra.mxu0 0.0
        %1516 = vmatprep.subr.mxu0 0.0
        %1517 = vmatpush1.msra.mxu0 0.0
        %1518 = vmatprep.subr.mxu0 0.0
        %1519 = vmatpush1.msra.mxu0 0.0
        %1520 = vmatprep.subr.mxu0 0.0
        %1521 = vmatpush1.msra.mxu0 0.0
        %1522 = vmatprep.subr.mxu0 0.0
        %1523 = vmatpush1.msra.mxu0 0.0
        %1524 = vmatprep.subr.mxu0 0.0
        %1525 = vmatpush1.msra.mxu0 0.0
        %1526 = vmatprep.subr.mxu0 0.0
        %1527 = vmatpush1.msra.mxu0 0.0
        %1528 = vmatprep.subr.mxu0 0.0
        %1529 = vmatpush1.msra.mxu0 0.0
        %1530 = vmatprep.subr.mxu0 0.0
        %1531 = vmatpush1.msra.mxu0 0.0
        %1532 = vmatprep.subr.mxu0 0.0
        %1533 = vmatpush1.msra.mxu0 0.0
        %1534 = vmatprep.subr.mxu0 0.0
        %1535 = vmatpush1.msra.mxu0 0.0
        %1536 = vmatprep.subr.mxu0 0.0
        %1537 = vmatpush1.msra.mxu0 0.0
        %1538 = vmatprep.subr.mxu0 0.0
        %1539 = vmatpush1.msra.mxu0 0.0
        %1540 = vmatprep.subr.mxu0 0.0
        %1541 = vmatpush1.msra.mxu0 0.0
        %1542 = vmatprep.subr.mxu0 0.0
        %1543 = vmatpush1.msra.mxu0 0.0
        %1544 = vmatprep.subr.mxu0 0.0
        %1545 = vmatpush1.msra.mxu0 0.0
        %1546 = vmatprep.subr.mxu0 0.0
        %1547 = vmatpush1.msra.mxu0 0.0
        %1548 = vmatprep.subr.mxu0 0.0
        %1549 = vmatpush1.msra.mxu0 0.0
        %1550 = vmatprep.subr.mxu0 0.0
        %1551 = vmatpush1.msra.mxu0 0.0
        %1552 = vmatprep.subr.mxu0 0.0
        %1553 = vmatpush1.msra.mxu0 0.0
        %1554 = vmatprep.subr.mxu0 0.0
        %1555 = vmatpush1.msra.mxu0 0.0
        %1556 = vmatprep.subr.mxu0 0.0
        %1557 = vmatpush1.msra.mxu0 0.0
        %1558 = vmatprep.mubr.f32.mxu0 0.0
        %1559 = vmatmul.mubr.f32.gmra.mrb[0].mxu0 %v964
        %v1560 = vpop.f32.mrb[0].mxu0
        %v1561 = vadd.f32 0.0, %v1560
        %v1562 = vpop.f32.mrb[0].mxu0
        %1563 = vmatprep.mubr.f32.mxu0 0.0
        %1564 = vmatmul.mubr.f32.gmra.mrb[0].mxu0 %v967
        %v1565 = vpop.f32.mrb[0].mxu0
        %v1566 = vadd.f32 0.0, %v1565
        %v1567 = vpop.f32.mrb[0].mxu0
        %1568 = vdwg.mxu0
        %1569 = vmatprep.subr.mxu0 0.0
        %1570 = vmatpush1.msra.mxu0 %v947
        %1571 = vmatprep.subr.mxu0 0.0
        %1572 = vmatpush1.msra.mxu0 %v948
        %1573 = vmatprep.subr.mxu0 0.0
        %1574 = vmatpush1.msra.mxu0 %v949
        %1575 = vmatprep.subr.mxu0 0.0
        %1576 = vmatpush1.msra.mxu0 %v950
        %1577 = vmatprep.subr.mxu0 0.0
        %1578 = vmatpush1.msra.mxu0 0.0
        %1579 = vmatprep.subr.mxu0 0.0
        %1580 = vmatpush1.msra.mxu0 0.0
        %1581 = vmatprep.subr.mxu0 0.0
        %1582 = vmatpush1.msra.mxu0 0.0
        %1583 = vmatprep.subr.mxu0 0.0
        %1584 = vmatpush1.msra.mxu0 0.0
        %1585 = vmatprep.subr.mxu0 0.0
        %1586 = vmatpush1.msra.mxu0 0.0
        %1587 = vmatprep.subr.mxu0 0.0
        %1588 = vmatpush1.msra.mxu0 0.0
        %1589 = vmatprep.subr.mxu0 0.0
        %1590 = vmatpush1.msra.mxu0 0.0
        %1591 = vmatprep.subr.mxu0 0.0
        %1592 = vmatpush1.msra.mxu0 0.0
        %1593 = vmatprep.subr.mxu0 0.0
        %1594 = vmatpush1.msra.mxu0 0.0
        %1595 = vmatprep.subr.mxu0 0.0
        %1596 = vmatpush1.msra.mxu0 0.0
        %1597 = vmatprep.subr.mxu0 0.0
        %1598 = vmatpush1.msra.mxu0 0.0
        %1599 = vmatprep.subr.mxu0 0.0
        %1600 = vmatpush1.msra.mxu0 0.0
        %1601 = vmatprep.subr.mxu0 0.0
        %1602 = vmatpush1.msra.mxu0 0.0
        %1603 = vmatprep.subr.mxu0 0.0
        %1604 = vmatpush1.msra.mxu0 0.0
        %1605 = vmatprep.subr.mxu0 0.0
        %1606 = vmatpush1.msra.mxu0 0.0
        %1607 = vmatprep.subr.mxu0 0.0
        %1608 = vmatpush1.msra.mxu0 0.0
        %1609 = vmatprep.subr.mxu0 0.0
        %1610 = vmatpush1.msra.mxu0 0.0
        %1611 = vmatprep.subr.mxu0 0.0
        %1612 = vmatpush1.msra.mxu0 0.0
        %1613 = vmatprep.subr.mxu0 0.0
        %1614 = vmatpush1.msra.mxu0 0.0
        %1615 = vmatprep.subr.mxu0 0.0
        %1616 = vmatpush1.msra.mxu0 0.0
        %1617 = vmatprep.subr.mxu0 0.0
        %1618 = vmatpush1.msra.mxu0 0.0
        %1619 = vmatprep.subr.mxu0 0.0
        %1620 = vmatpush1.msra.mxu0 0.0
        %1621 = vmatprep.subr.mxu0 0.0
        %1622 = vmatpush1.msra.mxu0 0.0
        %1623 = vmatprep.subr.mxu0 0.0
        %1624 = vmatpush1.msra.mxu0 0.0
        %1625 = vmatprep.subr.mxu0 0.0
        %1626 = vmatpush1.msra.mxu0 0.0
        %1627 = vmatprep.subr.mxu0 0.0
        %1628 = vmatpush1.msra.mxu0 0.0
        %1629 = vmatprep.subr.mxu0 0.0
        %1630 = vmatpush1.msra.mxu0 0.0
        %1631 = vmatprep.subr.mxu0 0.0
        %1632 = vmatpush1.msra.mxu0 0.0
        %1633 = vmatprep.mubr.f32.mxu0 0.0
        %1634 = vmatmul.mubr.f32.gmra.mrb[0].mxu0 %v964
        %v1635 = vpop.f32.mrb[0].mxu0
        %v1636 = vadd.f32 0.0, %v1635
        %v1637 = vpop.f32.mrb[0].mxu0
        %1638 = vmatprep.mubr.f32.mxu0 0.0
        %1639 = vmatmul.mubr.f32.gmra.mrb[0].mxu0 %v967
        %v1640 = vpop.f32.mrb[0].mxu0
        %v1641 = vadd.f32 0.0, %v1640
        %v1642 = vpop.f32.mrb[0].mxu0
        %1643 = vdwg.mxu0
        %1644 = vmatprep.subr.mxu0 0.0
        %1645 = vmatpush1.msra.mxu0 %v951
        %1646 = vmatprep.subr.mxu0 0.0
        %1647 = vmatpush1.msra.mxu0 %v952
        %1648 = vmatprep.subr.mxu0 0.0
        %1649 = vmatpush1.msra.mxu0 %v953
        %1650 = vmatprep.subr.mxu0 0.0
        %1651 = vmatpush1.msra.mxu0 %v954
        %1652 = vmatprep.subr.mxu0 0.0
        %1653 = vmatpush1.msra.mxu0 0.0
        %1654 = vmatprep.subr.mxu0 0.0
        %1655 = vmatpush1.msra.mxu0 0.0
        %1656 = vmatprep.subr.mxu0 0.0
        %1657 = vmatpush1.msra.mxu0 0.0
        %1658 = vmatprep.subr.mxu0 0.0
        %1659 = vmatpush1.msra.mxu0 0.0
        %1660 = vmatprep.subr.mxu0 0.0
        %1661 = vmatpush1.msra.mxu0 0.0
        %1662 = vmatprep.subr.mxu0 0.0
        %1663 = vmatpush1.msra.mxu0 0.0
        %1664 = vmatprep.subr.mxu0 0.0
        %1665 = vmatpush1.msra.mxu0 0.0
        %1666 = vmatprep.subr.mxu0 0.0
        %1667 = vmatpush1.msra.mxu0 0.0
        %1668 = vmatprep.subr.mxu0 0.0
        %1669 = vmatpush1.msra.mxu0 0.0
        %1670 = vmatprep.subr.mxu0 0.0
        %1671 = vmatpush1.msra.mxu0 0.0
        %1672 = vmatprep.subr.mxu0 0.0
        %1673 = vmatpush1.msra.mxu0 0.0
        %1674 = vmatprep.subr.mxu0 0.0
        %1675 = vmatpush1.msra.mxu0 0.0
        %1676 = vmatprep.subr.mxu0 0.0
        %1677 = vmatpush1.msra.mxu0 0.0
        %1678 = vmatprep.subr.mxu0 0.0
        %1679 = vmatpush1.msra.mxu0 0.0
        %1680 = vmatprep.subr.mxu0 0.0
        %1681 = vmatpush1.msra.mxu0 0.0
        %1682 = vmatprep.subr.mxu0 0.0
        %1683 = vmatpush1.msra.mxu0 0.0
        %1684 = vmatprep.subr.mxu0 0.0
        %1685 = vmatpush1.msra.mxu0 0.0
        %1686 = vmatprep.subr.mxu0 0.0
        %1687 = vmatpush1.msra.mxu0 0.0
        %1688 = vmatprep.subr.mxu0 0.0
        %1689 = vmatpush1.msra.mxu0 0.0
        %1690 = vmatprep.subr.mxu0 0.0
        %1691 = vmatpush1.msra.mxu0 0.0
        %1692 = vmatprep.subr.mxu0 0.0
        %1693 = vmatpush1.msra.mxu0 0.0
        %1694 = vmatprep.subr.mxu0 0.0
        %1695 = vmatpush1.msra.mxu0 0.0
        %1696 = vmatprep.subr.mxu0 0.0
        %1697 = vmatpush1.msra.mxu0 0.0
        %1698 = vmatprep.subr.mxu0 0.0
        %1699 = vmatpush1.msra.mxu0 0.0
        %1700 = vmatprep.subr.mxu0 0.0
        %1701 = vmatpush1.msra.mxu0 0.0
        %1702 = vmatprep.subr.mxu0 0.0
        %1703 = vmatpush1.msra.mxu0 0.0
        %1704 = vmatprep.subr.mxu0 0.0
        %1705 = vmatpush1.msra.mxu0 0.0
        %1706 = vmatprep.subr.mxu0 0.0
        %1707 = vmatpush1.msra.mxu0 0.0
        %1708 = vmatprep.mubr.f32.mxu0 0.0
        %1709 = vmatmul.mubr.f32.gmra.mrb[0].mxu0 %v964
        %v1710 = vpop.f32.mrb[0].mxu0
        %v1711 = vadd.f32 0.0, %v1710
        %v1712 = vpop.f32.mrb[0].mxu0
        %1713 = vmatprep.mubr.f32.mxu0 0.0
        %1714 = vmatmul.mubr.f32.gmra.mrb[0].mxu0 %v967
        %v1715 = vpop.f32.mrb[0].mxu0
        %v1716 = vadd.f32 0.0, %v1715
        %v1717 = vpop.f32.mrb[0].mxu0
        %1718 = vdwg.mxu0
        %1719 = vmatprep.subr.mxu0 0.0
        %1720 = vmatpush1.msra.mxu0 %v955
        %1721 = vmatprep.subr.mxu0 0.0
        %1722 = vmatpush1.msra.mxu0 %v956
        %1723 = vmatprep.subr.mxu0 0.0
        %1724 = vmatpush1.msra.mxu0 %v957
        %1725 = vmatprep.subr.mxu0 0.0
        %1726 = vmatpush1.msra.mxu0 %v958
        %1727 = vmatprep.subr.mxu0 0.0
        %1728 = vmatpush1.msra.mxu0 0.0
        %1729 = vmatprep.subr.mxu0 0.0
        %1730 = vmatpush1.msra.mxu0 0.0
        %1731 = vmatprep.subr.mxu0 0.0
        %1732 = vmatpush1.msra.mxu0 0.0
        %1733 = vmatprep.subr.mxu0 0.0
        %1734 = vmatpush1.msra.mxu0 0.0
        %1735 = vmatprep.subr.mxu0 0.0
        %1736 = vmatpush1.msra.mxu0 0.0
        %1737 = vmatprep.subr.mxu0 0.0
        %1738 = vmatpush1.msra.mxu0 0.0
        %1739 = vmatprep.subr.mxu0 0.0
        %1740 = vmatpush1.msra.mxu0 0.0
        %1741 = vmatprep.subr.mxu0 0.0
        %1742 = vmatpush1.msra.mxu0 0.0
        %1743 = vmatprep.subr.mxu0 0.0
        %1744 = vmatpush1.msra.mxu0 0.0
        %1745 = vmatprep.subr.mxu0 0.0
        %1746 = vmatpush1.msra.mxu0 0.0
        %1747 = vmatprep.subr.mxu0 0.0
        %1748 = vmatpush1.msra.mxu0 0.0
        %1749 = vmatprep.subr.mxu0 0.0
        %1750 = vmatpush1.msra.mxu0 0.0
        %1751 = vmatprep.subr.mxu0 0.0
        %1752 = vmatpush1.msra.mxu0 0.0
        %1753 = vmatprep.subr.mxu0 0.0
        %1754 = vmatpush1.msra.mxu0 0.0
        %1755 = vmatprep.subr.mxu0 0.0
        %1756 = vmatpush1.msra.mxu0 0.0
        %1757 = vmatprep.subr.mxu0 0.0
        %1758 = vmatpush1.msra.mxu0 0.0
        %1759 = vmatprep.subr.mxu0 0.0
        %1760 = vmatpush1.msra.mxu0 0.0
        %1761 = vmatprep.subr.mxu0 0.0
        %1762 = vmatpush1.msra.mxu0 0.0
        %1763 = vmatprep.subr.mxu0 0.0
        %1764 = vmatpush1.msra.mxu0 0.0
        %1765 = vmatprep.subr.mxu0 0.0
        %1766 = vmatpush1.msra.mxu0 0.0
        %1767 = vmatprep.subr.mxu0 0.0
        %1768 = vmatpush1.msra.mxu0 0.0
        %1769 = vmatprep.subr.mxu0 0.0
        %1770 = vmatpush1.msra.mxu0 0.0
        %1771 = vmatprep.subr.mxu0 0.0
        %1772 = vmatpush1.msra.mxu0 0.0
        %1773 = vmatprep.subr.mxu0 0.0
        %1774 = vmatpush1.msra.mxu0 0.0
        %1775 = vmatprep.subr.mxu0 0.0
        %1776 = vmatpush1.msra.mxu0 0.0
        %1777 = vmatprep.subr.mxu0 0.0
        %1778 = vmatpush1.msra.mxu0 0.0
        %1779 = vmatprep.subr.mxu0 0.0
        %1780 = vmatpush1.msra.mxu0 0.0
        %1781 = vmatprep.subr.mxu0 0.0
        %1782 = vmatpush1.msra.mxu0 0.0
        %1783 = vmatprep.mubr.f32.mxu0 0.0
        %1784 = vmatmul.mubr.f32.gmra.mrb[0].mxu0 %v964
        %v1785 = vpop.f32.mrb[0].mxu0
        %v1786 = vadd.f32 0.0, %v1785
        %v1787 = vpop.f32.mrb[0].mxu0
        %1788 = vmatprep.mubr.f32.mxu0 0.0
        %1789 = vmatmul.mubr.f32.gmra.mrb[0].mxu0 %v967
        %v1790 = vpop.f32.mrb[0].mxu0
        %v1791 = vadd.f32 0.0, %v1790
        %v1792 = vpop.f32.mrb[0].mxu0
        %1793 = vdwg.mxu0
        %1794 = vmatprep.subr.mxu0 0.0
        %1795 = vmatpush1.msra.mxu0 %v959
        %1796 = vmatprep.subr.mxu0 0.0
        %1797 = vmatpush1.msra.mxu0 %v960
        %1798 = vmatprep.subr.mxu0 0.0
        %1799 = vmatpush1.msra.mxu0 %v961
        %1800 = vmatprep.subr.mxu0 0.0
        %1801 = vmatpush1.msra.mxu0 %v962
        %1802 = vmatprep.subr.mxu0 0.0
        %1803 = vmatpush1.msra.mxu0 0.0
        %1804 = vmatprep.subr.mxu0 0.0
        %1805 = vmatpush1.msra.mxu0 0.0
        %1806 = vmatprep.subr.mxu0 0.0
        %1807 = vmatpush1.msra.mxu0 0.0
        %1808 = vmatprep.subr.mxu0 0.0
        %1809 = vmatpush1.msra.mxu0 0.0
        %1810 = vmatprep.subr.mxu0 0.0
        %1811 = vmatpush1.msra.mxu0 0.0
        %1812 = vmatprep.subr.mxu0 0.0
        %1813 = vmatpush1.msra.mxu0 0.0
        %1814 = vmatprep.subr.mxu0 0.0
        %1815 = vmatpush1.msra.mxu0 0.0
        %1816 = vmatprep.subr.mxu0 0.0
        %1817 = vmatpush1.msra.mxu0 0.0
        %1818 = vmatprep.subr.mxu0 0.0
        %1819 = vmatpush1.msra.mxu0 0.0
        %1820 = vmatprep.subr.mxu0 0.0
        %1821 = vmatpush1.msra.mxu0 0.0
        %1822 = vmatprep.subr.mxu0 0.0
        %1823 = vmatpush1.msra.mxu0 0.0
        %1824 = vmatprep.subr.mxu0 0.0
        %1825 = vmatpush1.msra.mxu0 0.0
        %1826 = vmatprep.subr.mxu0 0.0
        %1827 = vmatpush1.msra.mxu0 0.0
        %1828 = vmatprep.subr.mxu0 0.0
        %1829 = vmatpush1.msra.mxu0 0.0
        %1830 = vmatprep.subr.mxu0 0.0
        %1831 = vmatpush1.msra.mxu0 0.0
        %1832 = vmatprep.subr.mxu0 0.0
        %1833 = vmatpush1.msra.mxu0 0.0
        %1834 = vmatprep.subr.mxu0 0.0
        %1835 = vmatpush1.msra.mxu0 0.0
        %1836 = vmatprep.subr.mxu0 0.0
        %1837 = vmatpush1.msra.mxu0 0.0
        %1838 = vmatprep.subr.mxu0 0.0
        %1839 = vmatpush1.msra.mxu0 0.0
        %1840 = vmatprep.subr.mxu0 0.0
        %1841 = vmatpush1.msra.mxu0 0.0
        %1842 = vmatprep.subr.mxu0 0.0
        %1843 = vmatpush1.msra.mxu0 0.0
        %1844 = vmatprep.subr.mxu0 0.0
        %1845 = vmatpush1.msra.mxu0 0.0
        %1846 = vmatprep.subr.mxu0 0.0
        %1847 = vmatpush1.msra.mxu0 0.0
        %1848 = vmatprep.subr.mxu0 0.0
        %1849 = vmatpush1.msra.mxu0 0.0
        %1850 = vmatprep.subr.mxu0 0.0
        %1851 = vmatpush1.msra.mxu0 0.0
        %1852 = vmatprep.subr.mxu0 0.0
        %1853 = vmatpush1.msra.mxu0 0.0
        %1854 = vmatprep.subr.mxu0 0.0
        %1855 = vmatpush1.msra.mxu0 0.0
        %1856 = vmatprep.subr.mxu0 0.0
        %1857 = vmatpush1.msra.mxu0 0.0
        %1858 = vmatprep.mubr.f32.mxu0 0.0
        %1859 = vmatmul.mubr.f32.gmra.mrb[0].mxu0 %v964
        %v1860 = vpop.f32.mrb[0].mxu0
        %v1861 = vadd.f32 0.0, %v1860
        %v1862 = vpop.f32.mrb[0].mxu0
        %1863 = vmatprep.mubr.f32.mxu0 0.0
        %1864 = vmatmul.mubr.f32.gmra.mrb[0].mxu0 %v967
        %v1865 = vpop.f32.mrb[0].mxu0
        %v1866 = vadd.f32 0.0, %v1865
        %v1867 = vpop.f32.mrb[0].mxu0
        %1868 = vdwg.mxu0
        %vm1869 = vcmask 64512
        %v1871 = vsel %vm1869, %v1036, 0
        %v1874 = vsel %vm1869, %v1041, 0
        %v1877 = vsel %vm1869, %v1336, 0
        %v1880 = vsel %vm1869, %v1341, 0
        %1882 = vmatprep.subr.mxu0 0.0
        %1883 = vmatpush1.xpose.msra.mxu0 %v1877
        %1884 = vmatprep.subr.mxu0 0.0
        %1885 = vmatpush1.xpose.msra.mxu0 %v1880
        %1886 = vmatprep.subr.mxu0 0.0
        %1887 = vmatpush1.xpose.msra.mxu0 0.0
        %1888 = vmatprep.subr.mxu0 0.0
        %1889 = vmatpush1.xpose.msra.mxu0 0.0
        %1890 = vmatprep.subr.mxu0 0.0
        %1891 = vmatpush1.xpose.msra.mxu0 0.0
        %1892 = vmatprep.subr.mxu0 0.0
        %1893 = vmatpush1.xpose.msra.mxu0 0.0
        %1894 = vmatprep.subr.mxu0 0.0
        %1895 = vmatpush1.xpose.msra.mxu0 0.0
        %1896 = vmatprep.subr.mxu0 0.0
        %1897 = vmatpush1.xpose.msra.mxu0 0.0
        %1898 = vmatprep.subr.mxu0 0.0
        %1899 = vmatpush1.xpose.msra.mxu0 0.0
        %1900 = vmatprep.subr.mxu0 0.0
        %1901 = vmatpush1.xpose.msra.mxu0 0.0
        %1902 = vmatprep.subr.mxu0 0.0
        %1903 = vmatpush1.xpose.msra.mxu0 0.0
        %1904 = vmatprep.subr.mxu0 0.0
        %1905 = vmatpush1.xpose.msra.mxu0 0.0
        %1906 = vmatprep.subr.mxu0 0.0
        %1907 = vmatpush1.xpose.msra.mxu0 0.0
        %1908 = vmatprep.subr.mxu0 0.0
        %1909 = vmatpush1.xpose.msra.mxu0 0.0
        %1910 = vmatprep.subr.mxu0 0.0
        %1911 = vmatpush1.xpose.msra.mxu0 0.0
        %1912 = vmatprep.subr.mxu0 0.0
        %1913 = vmatpush1.xpose.msra.mxu0 0.0
        %1914 = vmatprep.subr.mxu0 0.0
        %1915 = vmatpush1.xpose.msra.mxu0 0.0
        %1916 = vmatprep.subr.mxu0 0.0
        %1917 = vmatpush1.xpose.msra.mxu0 0.0
        %1918 = vmatprep.subr.mxu0 0.0
        %1919 = vmatpush1.xpose.msra.mxu0 0.0
        %1920 = vmatprep.subr.mxu0 0.0
        %1921 = vmatpush1.xpose.msra.mxu0 0.0
        %1922 = vmatprep.subr.mxu0 0.0
        %1923 = vmatpush1.xpose.msra.mxu0 0.0
        %1924 = vmatprep.subr.mxu0 0.0
        %1925 = vmatpush1.xpose.msra.mxu0 0.0
        %1926 = vmatprep.subr.mxu0 0.0
        %1927 = vmatpush1.xpose.msra.mxu0 0.0
        %1928 = vmatprep.subr.mxu0 0.0
        %1929 = vmatpush1.xpose.msra.mxu0 0.0
        %1930 = vmatprep.subr.mxu0 0.0
        %1931 = vmatpush1.xpose.msra.mxu0 0.0
        %1932 = vmatprep.subr.mxu0 0.0
        %1933 = vmatpush1.xpose.msra.mxu0 0.0
        %1934 = vmatprep.subr.mxu0 0.0
        %1935 = vmatpush1.xpose.msra.mxu0 0.0
        %1936 = vmatprep.subr.mxu0 0.0
        %1937 = vmatpush1.xpose.msra.mxu0 0.0
        %1938 = vmatprep.subr.mxu0 0.0
        %1939 = vmatpush1.xpose.msra.mxu0 0.0
        %1940 = vmatprep.subr.mxu0 0.0
        %1941 = vmatpush1.xpose.msra.mxu0 0.0
        %1942 = vmatprep.subr.mxu0 0.0
        %1943 = vmatpush1.xpose.msra.mxu0 0.0
        %1944 = vmatprep.subr.mxu0 0.0
        %1945 = vmatpush1.xpose.msra.mxu0 0.0
        %1946 = vmatprep.mubr.f32.mxu0 0.0
        %1947 = vmatmul.mubr.f32.gmra.mrb[0].mxu0 %v1871
        %v1948 = vpop.f32.mrb[0].mxu0
        %v1949 = vadd.f32 0.0, %v1948
        %v1950 = vpop.f32.mrb[0].mxu0
        %1951 = vmatprep.mubr.f32.mxu0 0.0
        %1952 = vmatmul.mubr.f32.gmra.mrb[0].mxu0 %v1874
        %v1953 = vpop.f32.mrb[0].mxu0
        %v1954 = vadd.f32 0.0, %v1953
        %v1955 = vpop.f32.mrb[0].mxu0
        %1956 = vdwg.mxu0
        %v1958 = vsel %vm1869, %v1111, 0
        %v1961 = vsel %vm1869, %v1116, 0
        %v1964 = vsel %vm1869, %v1411, 0
        %v1967 = vsel %vm1869, %v1416, 0
        %1969 = vmatprep.subr.mxu0 0.0
        %1970 = vmatpush1.xpose.msra.mxu0 %v1964
        %1971 = vmatprep.subr.mxu0 0.0
        %1972 = vmatpush1.xpose.msra.mxu0 %v1967
        %1973 = vmatprep.subr.mxu0 0.0
        %1974 = vmatpush1.xpose.msra.mxu0 0.0
        %1975 = vmatprep.subr.mxu0 0.0
        %1976 = vmatpush1.xpose.msra.mxu0 0.0
        %1977 = vmatprep.subr.mxu0 0.0
        %1978 = vmatpush1.xpose.msra.mxu0 0.0
        %1979 = vmatprep.subr.mxu0 0.0
        %1980 = vmatpush1.xpose.msra.mxu0 0.0
        %1981 = vmatprep.subr.mxu0 0.0
        %1982 = vmatpush1.xpose.msra.mxu0 0.0
        %1983 = vmatprep.subr.mxu0 0.0
        %1984 = vmatpush1.xpose.msra.mxu0 0.0
        %1985 = vmatprep.subr.mxu0 0.0
        %1986 = vmatpush1.xpose.msra.mxu0 0.0
        %1987 = vmatprep.subr.mxu0 0.0
        %1988 = vmatpush1.xpose.msra.mxu0 0.0
        %1989 = vmatprep.subr.mxu0 0.0
        %1990 = vmatpush1.xpose.msra.mxu0 0.0
        %1991 = vmatprep.subr.mxu0 0.0
        %1992 = vmatpush1.xpose.msra.mxu0 0.0
        %1993 = vmatprep.subr.mxu0 0.0
        %1994 = vmatpush1.xpose.msra.mxu0 0.0
        %1995 = vmatprep.subr.mxu0 0.0
        %1996 = vmatpush1.xpose.msra.mxu0 0.0
        %1997 = vmatprep.subr.mxu0 0.0
        %1998 = vmatpush1.xpose.msra.mxu0 0.0
        %1999 = vmatprep.subr.mxu0 0.0
        %2000 = vmatpush1.xpose.msra.mxu0 0.0
        %2001 = vmatprep.subr.mxu0 0.0
        %2002 = vmatpush1.xpose.msra.mxu0 0.0
        %2003 = vmatprep.subr.mxu0 0.0
        %2004 = vmatpush1.xpose.msra.mxu0 0.0
        %2005 = vmatprep.subr.mxu0 0.0
        %2006 = vmatpush1.xpose.msra.mxu0 0.0
        %2007 = vmatprep.subr.mxu0 0.0
        %2008 = vmatpush1.xpose.msra.mxu0 0.0
        %2009 = vmatprep.subr.mxu0 0.0
        %2010 = vmatpush1.xpose.msra.mxu0 0.0
        %2011 = vmatprep.subr.mxu0 0.0
        %2012 = vmatpush1.xpose.msra.mxu0 0.0
        %2013 = vmatprep.subr.mxu0 0.0
        %2014 = vmatpush1.xpose.msra.mxu0 0.0
        %2015 = vmatprep.subr.mxu0 0.0
        %2016 = vmatpush1.xpose.msra.mxu0 0.0
        %2017 = vmatprep.subr.mxu0 0.0
        %2018 = vmatpush1.xpose.msra.mxu0 0.0
        %2019 = vmatprep.subr.mxu0 0.0
        %2020 = vmatpush1.xpose.msra.mxu0 0.0
        %2021 = vmatprep.subr.mxu0 0.0
        %2022 = vmatpush1.xpose.msra.mxu0 0.0
        %2023 = vmatprep.subr.mxu0 0.0
        %2024 = vmatpush1.xpose.msra.mxu0 0.0
        %2025 = vmatprep.subr.mxu0 0.0
        %2026 = vmatpush1.xpose.msra.mxu0 0.0
        %2027 = vmatprep.subr.mxu0 0.0
        %2028 = vmatpush1.xpose.msra.mxu0 0.0
        %2029 = vmatprep.subr.mxu0 0.0
        %2030 = vmatpush1.xpose.msra.mxu0 0.0
        %2031 = vmatprep.subr.mxu0 0.0
        %2032 = vmatpush1.xpose.msra.mxu0 0.0
        %2033 = vmatprep.mubr.f32.mxu0 0.0
        %2034 = vmatmul.mubr.f32.gmra.mrb[0].mxu0 %v1958
        %v2035 = vpop.f32.mrb[0].mxu0
        %v2036 = vadd.f32 0.0, %v2035
        %v2037 = vpop.f32.mrb[0].mxu0
        %2038 = vmatprep.mubr.f32.mxu0 0.0
        %2039 = vmatmul.mubr.f32.gmra.mrb[0].mxu0 %v1961
        %v2040 = vpop.f32.mrb[0].mxu0
        %v2041 = vadd.f32 0.0, %v2040
        %v2042 = vpop.f32.mrb[0].mxu0
        %2043 = vdwg.mxu0
        %v2045 = vsel %vm1869, %v1186, 0
        %v2048 = vsel %vm1869, %v1191, 0
        %v2051 = vsel %vm1869, %v1486, 0
        %v2054 = vsel %vm1869, %v1491, 0
        %2056 = vmatprep.subr.mxu0 0.0
        %2057 = vmatpush1.xpose.msra.mxu0 %v2051
        %2058 = vmatprep.subr.mxu0 0.0
        %2059 = vmatpush1.xpose.msra.mxu0 %v2054
        %2060 = vmatprep.subr.mxu0 0.0
        %2061 = vmatpush1.xpose.msra.mxu0 0.0
        %2062 = vmatprep.subr.mxu0 0.0
        %2063 = vmatpush1.xpose.msra.mxu0 0.0
        %2064 = vmatprep.subr.mxu0 0.0
        %2065 = vmatpush1.xpose.msra.mxu0 0.0
        %2066 = vmatprep.subr.mxu0 0.0
        %2067 = vmatpush1.xpose.msra.mxu0 0.0
        %2068 = vmatprep.subr.mxu0 0.0
        %2069 = vmatpush1.xpose.msra.mxu0 0.0
        %2070 = vmatprep.subr.mxu0 0.0
        %2071 = vmatpush1.xpose.msra.mxu0 0.0
        %2072 = vmatprep.subr.mxu0 0.0
        %2073 = vmatpush1.xpose.msra.mxu0 0.0
        %2074 = vmatprep.subr.mxu0 0.0
        %2075 = vmatpush1.xpose.msra.mxu0 0.0
        %2076 = vmatprep.subr.mxu0 0.0
        %2077 = vmatpush1.xpose.msra.mxu0 0.0
        %2078 = vmatprep.subr.mxu0 0.0
        %2079 = vmatpush1.xpose.msra.mxu0 0.0
        %2080 = vmatprep.subr.mxu0 0.0
        %2081 = vmatpush1.xpose.msra.mxu0 0.0
        %2082 = vmatprep.subr.mxu0 0.0
        %2083 = vmatpush1.xpose.msra.mxu0 0.0
        %2084 = vmatprep.subr.mxu0 0.0
        %2085 = vmatpush1.xpose.msra.mxu0 0.0
        %2086 = vmatprep.subr.mxu0 0.0
        %2087 = vmatpush1.xpose.msra.mxu0 0.0
        %2088 = vmatprep.subr.mxu0 0.0
        %2089 = vmatpush1.xpose.msra.mxu0 0.0
        %2090 = vmatprep.subr.mxu0 0.0
        %2091 = vmatpush1.xpose.msra.mxu0 0.0
        %2092 = vmatprep.subr.mxu0 0.0
        %2093 = vmatpush1.xpose.msra.mxu0 0.0
        %2094 = vmatprep.subr.mxu0 0.0
        %2095 = vmatpush1.xpose.msra.mxu0 0.0
        %2096 = vmatprep.subr.mxu0 0.0
        %2097 = vmatpush1.xpose.msra.mxu0 0.0
        %2098 = vmatprep.subr.mxu0 0.0
        %2099 = vmatpush1.xpose.msra.mxu0 0.0
        %2100 = vmatprep.subr.mxu0 0.0
        %2101 = vmatpush1.xpose.msra.mxu0 0.0
        %2102 = vmatprep.subr.mxu0 0.0
        %2103 = vmatpush1.xpose.msra.mxu0 0.0
        %2104 = vmatprep.subr.mxu0 0.0
        %2105 = vmatpush1.xpose.msra.mxu0 0.0
        %2106 = vmatprep.subr.mxu0 0.0
        %2107 = vmatpush1.xpose.msra.mxu0 0.0
        %2108 = vmatprep.subr.mxu0 0.0
        %2109 = vmatpush1.xpose.msra.mxu0 0.0
        %2110 = vmatprep.subr.mxu0 0.0
        %2111 = vmatpush1.xpose.msra.mxu0 0.0
        %2112 = vmatprep.subr.mxu0 0.0
        %2113 = vmatpush1.xpose.msra.mxu0 0.0
        %2114 = vmatprep.subr.mxu0 0.0
        %2115 = vmatpush1.xpose.msra.mxu0 0.0
        %2116 = vmatprep.subr.mxu0 0.0
        %2117 = vmatpush1.xpose.msra.mxu0 0.0
        %2118 = vmatprep.subr.mxu0 0.0
        %2119 = vmatpush1.xpose.msra.mxu0 0.0
        %2120 = vmatprep.mubr.f32.mxu0 0.0
        %2121 = vmatmul.mubr.f32.gmra.mrb[0].mxu0 %v2045
        %v2122 = vpop.f32.mrb[0].mxu0
        %v2123 = vadd.f32 0.0, %v2122
        %v2124 = vpop.f32.mrb[0].mxu0
        %2125 = vmatprep.mubr.f32.mxu0 0.0
        %2126 = vmatmul.mubr.f32.gmra.mrb[0].mxu0 %v2048
        %v2127 = vpop.f32.mrb[0].mxu0
        %v2128 = vadd.f32 0.0, %v2127
        %v2129 = vpop.f32.mrb[0].mxu0
        %2130 = vdwg.mxu0
        %v2132 = vsel %vm1869, %v1261, 0
        %v2135 = vsel %vm1869, %v1266, 0
        %v2138 = vsel %vm1869, %v1561, 0
        %v2141 = vsel %vm1869, %v1566, 0
        %2143 = vmatprep.subr.mxu0 0.0
        %2144 = vmatpush1.xpose.msra.mxu0 %v2138
        %2145 = vmatprep.subr.mxu0 0.0
        %2146 = vmatpush1.xpose.msra.mxu0 %v2141
        %2147 = vmatprep.subr.mxu0 0.0
        %2148 = vmatpush1.xpose.msra.mxu0 0.0
        %2149 = vmatprep.subr.mxu0 0.0
        %2150 = vmatpush1.xpose.msra.mxu0 0.0
        %2151 = vmatprep.subr.mxu0 0.0
        %2152 = vmatpush1.xpose.msra.mxu0 0.0
        %2153 = vmatprep.subr.mxu0 0.0
        %2154 = vmatpush1.xpose.msra.mxu0 0.0
        %2155 = vmatprep.subr.mxu0 0.0
        %2156 = vmatpush1.xpose.msra.mxu0 0.0
        %2157 = vmatprep.subr.mxu0 0.0
        %2158 = vmatpush1.xpose.msra.mxu0 0.0
        %2159 = vmatprep.subr.mxu0 0.0
        %2160 = vmatpush1.xpose.msra.mxu0 0.0
        %2161 = vmatprep.subr.mxu0 0.0
        %2162 = vmatpush1.xpose.msra.mxu0 0.0
        %2163 = vmatprep.subr.mxu0 0.0
        %2164 = vmatpush1.xpose.msra.mxu0 0.0
        %2165 = vmatprep.subr.mxu0 0.0
        %2166 = vmatpush1.xpose.msra.mxu0 0.0
        %2167 = vmatprep.subr.mxu0 0.0
        %2168 = vmatpush1.xpose.msra.mxu0 0.0
        %2169 = vmatprep.subr.mxu0 0.0
        %2170 = vmatpush1.xpose.msra.mxu0 0.0
        %2171 = vmatprep.subr.mxu0 0.0
        %2172 = vmatpush1.xpose.msra.mxu0 0.0
        %2173 = vmatprep.subr.mxu0 0.0
        %2174 = vmatpush1.xpose.msra.mxu0 0.0
        %2175 = vmatprep.subr.mxu0 0.0
        %2176 = vmatpush1.xpose.msra.mxu0 0.0
        %2177 = vmatprep.subr.mxu0 0.0
        %2178 = vmatpush1.xpose.msra.mxu0 0.0
        %2179 = vmatprep.subr.mxu0 0.0
        %2180 = vmatpush1.xpose.msra.mxu0 0.0
        %2181 = vmatprep.subr.mxu0 0.0
        %2182 = vmatpush1.xpose.msra.mxu0 0.0
        %2183 = vmatprep.subr.mxu0 0.0
        %2184 = vmatpush1.xpose.msra.mxu0 0.0
        %2185 = vmatprep.subr.mxu0 0.0
        %2186 = vmatpush1.xpose.msra.mxu0 0.0
        %2187 = vmatprep.subr.mxu0 0.0
        %2188 = vmatpush1.xpose.msra.mxu0 0.0
        %2189 = vmatprep.subr.mxu0 0.0
        %2190 = vmatpush1.xpose.msra.mxu0 0.0
        %2191 = vmatprep.subr.mxu0 0.0
        %2192 = vmatpush1.xpose.msra.mxu0 0.0
        %2193 = vmatprep.subr.mxu0 0.0
        %2194 = vmatpush1.xpose.msra.mxu0 0.0
        %2195 = vmatprep.subr.mxu0 0.0
        %2196 = vmatpush1.xpose.msra.mxu0 0.0
        %2197 = vmatprep.subr.mxu0 0.0
        %2198 = vmatpush1.xpose.msra.mxu0 0.0
        %2199 = vmatprep.subr.mxu0 0.0
        %2200 = vmatpush1.xpose.msra.mxu0 0.0
        %2201 = vmatprep.subr.mxu0 0.0
        %2202 = vmatpush1.xpose.msra.mxu0 0.0
        %2203 = vmatprep.subr.mxu0 0.0
        %2204 = vmatpush1.xpose.msra.mxu0 0.0
        %2205 = vmatprep.subr.mxu0 0.0
        %2206 = vmatpush1.xpose.msra.mxu0 0.0
        %2207 = vmatprep.mubr.f32.mxu0 0.0
        %2208 = vmatmul.mubr.f32.gmra.mrb[0].mxu0 %v2132
        %v2209 = vpop.f32.mrb[0].mxu0
        %v2210 = vadd.f32 0.0, %v2209
        %v2211 = vpop.f32.mrb[0].mxu0
        %2212 = vmatprep.mubr.f32.mxu0 0.0
        %2213 = vmatmul.mubr.f32.gmra.mrb[0].mxu0 %v2135
        %v2214 = vpop.f32.mrb[0].mxu0
        %v2215 = vadd.f32 0.0, %v2214
        %v2216 = vpop.f32.mrb[0].mxu0
        %2217 = vdwg.mxu0
        %v2218 = vmul.f32 %v1949, 0.17677669
        %v2219 = vmul.f32 %v1954, 0.17677669
        %v2220 = vmul.f32 %v2036, 0.17677669
        %v2221 = vmul.f32 %v2041, 0.17677669
        %v2222 = vmul.f32 %v2123, 0.17677669
        %v2223 = vmul.f32 %v2128, 0.17677669
        %v2224 = vmul.f32 %v2210, 0.17677669
        %v2225 = vmul.f32 %v2215, 0.17677669
        %vm2226 = vcmask 72704
        %v2227 = vsel %vm2226, %v2218, -inf
        %2228 = vmax.xlane.f32.xlu0 %v2227
        %v2229 = vpop.xlane.xlu0 %2228
        %vm2230 = vcmask 65536
        %v2231 = vsel %vm2230, %v2219, -inf
        %2232 = vmax.xlane.f32.xlu0 %v2231
        %v2233 = vpop.xlane.xlu0 %2232
        %v2234 = vsel %vm2226, %v2220, -inf
        %2235 = vmax.xlane.f32.xlu0 %v2234
        %v2236 = vpop.xlane.xlu0 %2235
        %v2237 = vsel %vm2230, %v2221, -inf
        %2238 = vmax.xlane.f32.xlu0 %v2237
        %v2239 = vpop.xlane.xlu0 %2238
        %v2240 = vsel %vm2226, %v2222, -inf
        %2241 = vmax.xlane.f32.xlu0 %v2240
        %v2242 = vpop.xlane.xlu0 %2241
        %v2243 = vsel %vm2230, %v2223, -inf
        %2244 = vmax.xlane.f32.xlu0 %v2243
        %v2245 = vpop.xlane.xlu0 %2244
        %v2246 = vsel %vm2226, %v2224, -inf
        %2247 = vmax.xlane.f32.xlu0 %v2246
        %v2248 = vpop.xlane.xlu0 %2247
        %v2249 = vsel %vm2230, %v2225, -inf
        %2250 = vmax.xlane.f32.xlu0 %v2249
        %v2251 = vpop.xlane.xlu0 %2250
        %v2252 = vsub.f32 %v2218, %v2229
        %v2253 = vsub.f32 %v2219, %v2233
        %v2254 = vsub.f32 %v2220, %v2236
        %v2255 = vsub.f32 %v2221, %v2239
        %v2256 = vsub.f32 %v2222, %v2242
        %v2257 = vsub.f32 %v2223, %v2245
        %v2258 = vsub.f32 %v2224, %v2248
        %v2259 = vsub.f32 %v2225, %v2251
        %v2260 = vmul.f32 %v2252, 1.442695
        %v2261 = vpow.pop %v2260
        %v2262 = vmul.f32 %v2253, 1.442695
        %v2263 = vpow.pop %v2262
        %v2264 = vmul.f32 %v2254, 1.442695
        %v2265 = vpow.pop %v2264
        %v2266 = vmul.f32 %v2255, 1.442695
        %v2267 = vpow.pop %v2266
        %v2268 = vmul.f32 %v2256, 1.442695
        %v2269 = vpow.pop %v2268
        %v2270 = vmul.f32 %v2257, 1.442695
        %v2271 = vpow.pop %v2270
        %v2272 = vmul.f32 %v2258, 1.442695
        %v2273 = vpow.pop %v2272
        %v2274 = vmul.f32 %v2259, 1.442695
        %v2275 = vpow.pop %v2274
        %v2276 = vsel %vm2226, %v2261, 0.0
        %2277 = vadd.xlane.f32.xlu0 %v2276
        %v2278 = vpop.xlane.xlu0 %2277
        %v2279 = vsel %vm2230, %v2263, 0.0
        %2280 = vadd.xlane.f32.xlu0 %v2279
        %v2281 = vpop.xlane.xlu0 %2280
        %v2282 = vsel %vm2226, %v2265, 0.0
        %2283 = vadd.xlane.f32.xlu0 %v2282
        %v2284 = vpop.xlane.xlu0 %2283
        %v2285 = vsel %vm2230, %v2267, 0.0
        %2286 = vadd.xlane.f32.xlu0 %v2285
        %v2287 = vpop.xlane.xlu0 %2286
        %v2288 = vsel %vm2226, %v2269, 0.0
        %2289 = vadd.xlane.f32.xlu0 %v2288
        %v2290 = vpop.xlane.xlu0 %2289
        %v2291 = vsel %vm2230, %v2271, 0.0
        %2292 = vadd.xlane.f32.xlu0 %v2291
        %v2293 = vpop.xlane.xlu0 %2292
        %v2294 = vsel %vm2226, %v2273, 0.0
        %2295 = vadd.xlane.f32.xlu0 %v2294
        %v2296 = vpop.xlane.xlu0 %2295
        %v2297 = vsel %vm2230, %v2275, 0.0
        %2298 = vadd.xlane.f32.xlu0 %v2297
        %v2299 = vpop.xlane.xlu0 %2298
        %v2300 = vrcp.pop %v2278
        %v2301 = vrcp.pop %v2281
        %v2302 = vrcp.pop %v2284
        %v2303 = vrcp.pop %v2287
        %v2304 = vrcp.pop %v2290
        %v2305 = vrcp.pop %v2293
        %v2306 = vrcp.pop %v2296
        %v2307 = vrcp.pop %v2299
        %v2308 = vmul.f32 %v2261, %v2300
        %v2309 = vmul.f32 %v2263, %v2301
        %v2310 = vmul.f32 %v2265, %v2302
        %v2311 = vmul.f32 %v2267, %v2303
        %v2312 = vmul.f32 %v2269, %v2304
        %v2313 = vmul.f32 %v2271, %v2305
        %v2314 = vmul.f32 %v2273, %v2306
        %v2315 = vmul.f32 %v2275, %v2307
        %v2317 = vsel %vm2226, %v2308, 0
        %v2320 = vsel %vm2226, %v2309, 0
        %vm2322 = vcmask 1040384
        %v2324 = vsel %vm2322, %v1641, 0
        %2326 = vmatprep.subr.mxu0 0.0
        %2327 = vmatpush1.msra.mxu0 %v1636
        %2328 = vmatprep.subr.mxu0 0.0
        %2329 = vmatpush1.msra.mxu0 %v2324
        %2330 = vmatprep.subr.mxu0 0.0
        %2331 = vmatpush1.msra.mxu0 0.0
        %2332 = vmatprep.subr.mxu0 0.0
        %2333 = vmatpush1.msra.mxu0 0.0
        %2334 = vmatprep.subr.mxu0 0.0
        %2335 = vmatpush1.msra.mxu0 0.0
        %2336 = vmatprep.subr.mxu0 0.0
        %2337 = vmatpush1.msra.mxu0 0.0
        %2338 = vmatprep.subr.mxu0 0.0
        %2339 = vmatpush1.msra.mxu0 0.0
        %2340 = vmatprep.subr.mxu0 0.0
        %2341 = vmatpush1.msra.mxu0 0.0
        %2342 = vmatprep.subr.mxu0 0.0
        %2343 = vmatpush1.msra.mxu0 0.0
        %2344 = vmatprep.subr.mxu0 0.0
        %2345 = vmatpush1.msra.mxu0 0.0
        %2346 = vmatprep.subr.mxu0 0.0
        %2347 = vmatpush1.msra.mxu0 0.0
        %2348 = vmatprep.subr.mxu0 0.0
        %2349 = vmatpush1.msra.mxu0 0.0
        %2350 = vmatprep.subr.mxu0 0.0
        %2351 = vmatpush1.msra.mxu0 0.0
        %2352 = vmatprep.subr.mxu0 0.0
        %2353 = vmatpush1.msra.mxu0 0.0
        %2354 = vmatprep.subr.mxu0 0.0
        %2355 = vmatpush1.msra.mxu0 0.0
        %2356 = vmatprep.subr.mxu0 0.0
        %2357 = vmatpush1.msra.mxu0 0.0
        %2358 = vmatprep.subr.mxu0 0.0
        %2359 = vmatpush1.msra.mxu0 0.0
        %2360 = vmatprep.subr.mxu0 0.0
        %2361 = vmatpush1.msra.mxu0 0.0
        %2362 = vmatprep.subr.mxu0 0.0
        %2363 = vmatpush1.msra.mxu0 0.0
        %2364 = vmatprep.subr.mxu0 0.0
        %2365 = vmatpush1.msra.mxu0 0.0
        %2366 = vmatprep.subr.mxu0 0.0
        %2367 = vmatpush1.msra.mxu0 0.0
        %2368 = vmatprep.subr.mxu0 0.0
        %2369 = vmatpush1.msra.mxu0 0.0
        %2370 = vmatprep.subr.mxu0 0.0
        %2371 = vmatpush1.msra.mxu0 0.0
        %2372 = vmatprep.subr.mxu0 0.0
        %2373 = vmatpush1.msra.mxu0 0.0
        %2374 = vmatprep.subr.mxu0 0.0
        %2375 = vmatpush1.msra.mxu0 0.0
        %2376 = vmatprep.subr.mxu0 0.0
        %2377 = vmatpush1.msra.mxu0 0.0
        %2378 = vmatprep.subr.mxu0 0.0
        %2379 = vmatpush1.msra.mxu0 0.0
        %2380 = vmatprep.subr.mxu0 0.0
        %2381 = vmatpush1.msra.mxu0 0.0
        %2382 = vmatprep.subr.mxu0 0.0
        %2383 = vmatpush1.msra.mxu0 0.0
        %2384 = vmatprep.subr.mxu0 0.0
        %2385 = vmatpush1.msra.mxu0 0.0
        %2386 = vmatprep.subr.mxu0 0.0
        %2387 = vmatpush1.msra.mxu0 0.0
        %2388 = vmatprep.subr.mxu0 0.0
        %2389 = vmatpush1.msra.mxu0 0.0
        %2390 = vmatprep.mubr.f32.mxu0 0.0
        %2391 = vmatmul.mubr.f32.gmra.mrb[0].mxu0 %v2317
        %v2392 = vpop.f32.mrb[0].mxu0
        %v2393 = vadd.f32 0.0, %v2392
        %v2394 = vpop.f32.mrb[0].mxu0
        %2395 = vmatprep.mubr.f32.mxu0 0.0
        %2396 = vmatmul.mubr.f32.gmra.mrb[0].mxu0 %v2320
        %v2397 = vpop.f32.mrb[0].mxu0
        %v2398 = vadd.f32 0.0, %v2397
        %v2399 = vpop.f32.mrb[0].mxu0
        %2400 = vdwg.mxu0
        %v2402 = vsel %vm2226, %v2310, 0
        %v2405 = vsel %vm2226, %v2311, 0
        %v2408 = vsel %vm2322, %v1716, 0
        %2410 = vmatprep.subr.mxu0 0.0
        %2411 = vmatpush1.msra.mxu0 %v1711
        %2412 = vmatprep.subr.mxu0 0.0
        %2413 = vmatpush1.msra.mxu0 %v2408
        %2414 = vmatprep.subr.mxu0 0.0
        %2415 = vmatpush1.msra.mxu0 0.0
        %2416 = vmatprep.subr.mxu0 0.0
        %2417 = vmatpush1.msra.mxu0 0.0
        %2418 = vmatprep.subr.mxu0 0.0
        %2419 = vmatpush1.msra.mxu0 0.0
        %2420 = vmatprep.subr.mxu0 0.0
        %2421 = vmatpush1.msra.mxu0 0.0
        %2422 = vmatprep.subr.mxu0 0.0
        %2423 = vmatpush1.msra.mxu0 0.0
        %2424 = vmatprep.subr.mxu0 0.0
        %2425 = vmatpush1.msra.mxu0 0.0
        %2426 = vmatprep.subr.mxu0 0.0
        %2427 = vmatpush1.msra.mxu0 0.0
        %2428 = vmatprep.subr.mxu0 0.0
        %2429 = vmatpush1.msra.mxu0 0.0
        %2430 = vmatprep.subr.mxu0 0.0
        %2431 = vmatpush1.msra.mxu0 0.0
        %2432 = vmatprep.subr.mxu0 0.0
        %2433 = vmatpush1.msra.mxu0 0.0
        %2434 = vmatprep.subr.mxu0 0.0
        %2435 = vmatpush1.msra.mxu0 0.0
        %2436 = vmatprep.subr.mxu0 0.0
        %2437 = vmatpush1.msra.mxu0 0.0
        %2438 = vmatprep.subr.mxu0 0.0
        %2439 = vmatpush1.msra.mxu0 0.0
        %2440 = vmatprep.subr.mxu0 0.0
        %2441 = vmatpush1.msra.mxu0 0.0
        %2442 = vmatprep.subr.mxu0 0.0
        %2443 = vmatpush1.msra.mxu0 0.0
        %2444 = vmatprep.subr.mxu0 0.0
        %2445 = vmatpush1.msra.mxu0 0.0
        %2446 = vmatprep.subr.mxu0 0.0
        %2447 = vmatpush1.msra.mxu0 0.0
        %2448 = vmatprep.subr.mxu0 0.0
        %2449 = vmatpush1.msra.mxu0 0.0
        %2450 = vmatprep.subr.mxu0 0.0
        %2451 = vmatpush1.msra.mxu0 0.0
        %2452 = vmatprep.subr.mxu0 0.0
        %2453 = vmatpush1.msra.mxu0 0.0
        %2454 = vmatprep.subr.mxu0 0.0
        %2455 = vmatpush1.msra.mxu0 0.0
        %2456 = vmatprep.subr.mxu0 0.0
        %2457 = vmatpush1.msra.mxu0 0.0
        %2458 = vmatprep.subr.mxu0 0.0
        %2459 = vmatpush1.msra.mxu0 0.0
        %2460 = vmatprep.subr.mxu0 0.0
        %2461 = vmatpush1.msra.mxu0 0.0
        %2462 = vmatprep.subr.mxu0 0.0
        %2463 = vmatpush1.msra.mxu0 0.0
        %2464 = vmatprep.subr.mxu0 0.0
        %2465 = vmatpush1.msra.mxu0 0.0
        %2466 = vmatprep.subr.mxu0 0.0
        %2467 = vmatpush1.msra.mxu0 0.0
        %2468 = vmatprep.subr.mxu0 0.0
        %2469 = vmatpush1.msra.mxu0 0.0
        %2470 = vmatprep.subr.mxu0 0.0
        %2471 = vmatpush1.msra.mxu0 0.0
        %2472 = vmatprep.subr.mxu0 0.0
        %2473 = vmatpush1.msra.mxu0 0.0
        %2474 = vmatprep.mubr.f32.mxu0 0.0
        %2475 = vmatmul.mubr.f32.gmra.mrb[0].mxu0 %v2402
        %v2476 = vpop.f32.mrb[0].mxu0
        %v2477 = vadd.f32 0.0, %v2476
        %v2478 = vpop.f32.mrb[0].mxu0
        %2479 = vmatprep.mubr.f32.mxu0 0.0
        %2480 = vmatmul.mubr.f32.gmra.mrb[0].mxu0 %v2405
        %v2481 = vpop.f32.mrb[0].mxu0
        %v2482 = vadd.f32 0.0, %v2481
        %v2483 = vpop.f32.mrb[0].mxu0
        %2484 = vdwg.mxu0
        %v2486 = vsel %vm2226, %v2312, 0
        %v2489 = vsel %vm2226, %v2313, 0
        %v2492 = vsel %vm2322, %v1791, 0
        %2494 = vmatprep.subr.mxu0 0.0
        %2495 = vmatpush1.msra.mxu0 %v1786
        %2496 = vmatprep.subr.mxu0 0.0
        %2497 = vmatpush1.msra.mxu0 %v2492
        %2498 = vmatprep.subr.mxu0 0.0
        %2499 = vmatpush1.msra.mxu0 0.0
        %2500 = vmatprep.subr.mxu0 0.0
        %2501 = vmatpush1.msra.mxu0 0.0
        %2502 = vmatprep.subr.mxu0 0.0
        %2503 = vmatpush1.msra.mxu0 0.0
        %2504 = vmatprep.subr.mxu0 0.0
        %2505 = vmatpush1.msra.mxu0 0.0
        %2506 = vmatprep.subr.mxu0 0.0
        %2507 = vmatpush1.msra.mxu0 0.0
        %2508 = vmatprep.subr.mxu0 0.0
        %2509 = vmatpush1.msra.mxu0 0.0
        %2510 = vmatprep.subr.mxu0 0.0
        %2511 = vmatpush1.msra.mxu0 0.0
        %2512 = vmatprep.subr.mxu0 0.0
        %2513 = vmatpush1.msra.mxu0 0.0
        %2514 = vmatprep.subr.mxu0 0.0
        %2515 = vmatpush1.msra.mxu0 0.0
        %2516 = vmatprep.subr.mxu0 0.0
        %2517 = vmatpush1.msra.mxu0 0.0
        %2518 = vmatprep.subr.mxu0 0.0
        %2519 = vmatpush1.msra.mxu0 0.0
        %2520 = vmatprep.subr.mxu0 0.0
        %2521 = vmatpush1.msra.mxu0 0.0
        %2522 = vmatprep.subr.mxu0 0.0
        %2523 = vmatpush1.msra.mxu0 0.0
        %2524 = vmatprep.subr.mxu0 0.0
        %2525 = vmatpush1.msra.mxu0 0.0
        %2526 = vmatprep.subr.mxu0 0.0
        %2527 = vmatpush1.msra.mxu0 0.0
        %2528 = vmatprep.subr.mxu0 0.0
        %2529 = vmatpush1.msra.mxu0 0.0
        %2530 = vmatprep.subr.mxu0 0.0
        %2531 = vmatpush1.msra.mxu0 0.0
        %2532 = vmatprep.subr.mxu0 0.0
        %2533 = vmatpush1.msra.mxu0 0.0
        %2534 = vmatprep.subr.mxu0 0.0
        %2535 = vmatpush1.msra.mxu0 0.0
        %2536 = vmatprep.subr.mxu0 0.0
        %2537 = vmatpush1.msra.mxu0 0.0
        %2538 = vmatprep.subr.mxu0 0.0
        %2539 = vmatpush1.msra.mxu0 0.0
        %2540 = vmatprep.subr.mxu0 0.0
        %2541 = vmatpush1.msra.mxu0 0.0
        %2542 = vmatprep.subr.mxu0 0.0
        %2543 = vmatpush1.msra.mxu0 0.0
        %2544 = vmatprep.subr.mxu0 0.0
        %2545 = vmatpush1.msra.mxu0 0.0
        %2546 = vmatprep.subr.mxu0 0.0
        %2547 = vmatpush1.msra.mxu0 0.0
        %2548 = vmatprep.subr.mxu0 0.0
        %2549 = vmatpush1.msra.mxu0 0.0
        %2550 = vmatprep.subr.mxu0 0.0
        %2551 = vmatpush1.msra.mxu0 0.0
        %2552 = vmatprep.subr.mxu0 0.0
        %2553 = vmatpush1.msra.mxu0 0.0
        %2554 = vmatprep.subr.mxu0 0.0
        %2555 = vmatpush1.msra.mxu0 0.0
        %2556 = vmatprep.subr.mxu0 0.0
        %2557 = vmatpush1.msra.mxu0 0.0
        %2558 = vmatprep.mubr.f32.mxu0 0.0
        %2559 = vmatmul.mubr.f32.gmra.mrb[0].mxu0 %v2486
        %v2560 = vpop.f32.mrb[0].mxu0
        %v2561 = vadd.f32 0.0, %v2560
        %v2562 = vpop.f32.mrb[0].mxu0
        %2563 = vmatprep.mubr.f32.mxu0 0.0
        %2564 = vmatmul.mubr.f32.gmra.mrb[0].mxu0 %v2489
        %v2565 = vpop.f32.mrb[0].mxu0
        %v2566 = vadd.f32 0.0, %v2565
        %v2567 = vpop.f32.mrb[0].mxu0
        %2568 = vdwg.mxu0
        %v2570 = vsel %vm2226, %v2314, 0
        %v2573 = vsel %vm2226, %v2315, 0
        %v2576 = vsel %vm2322, %v1866, 0
        %2578 = vmatprep.subr.mxu0 0.0
        %2579 = vmatpush1.msra.mxu0 %v1861
        %2580 = vmatprep.subr.mxu0 0.0
        %2581 = vmatpush1.msra.mxu0 %v2576
        %2582 = vmatprep.subr.mxu0 0.0
        %2583 = vmatpush1.msra.mxu0 0.0
        %2584 = vmatprep.subr.mxu0 0.0
        %2585 = vmatpush1.msra.mxu0 0.0
        %2586 = vmatprep.subr.mxu0 0.0
        %2587 = vmatpush1.msra.mxu0 0.0
        %2588 = vmatprep.subr.mxu0 0.0
        %2589 = vmatpush1.msra.mxu0 0.0
        %2590 = vmatprep.subr.mxu0 0.0
        %2591 = vmatpush1.msra.mxu0 0.0
        %2592 = vmatprep.subr.mxu0 0.0
        %2593 = vmatpush1.msra.mxu0 0.0
        %2594 = vmatprep.subr.mxu0 0.0
        %2595 = vmatpush1.msra.mxu0 0.0
        %2596 = vmatprep.subr.mxu0 0.0
        %2597 = vmatpush1.msra.mxu0 0.0
        %2598 = vmatprep.subr.mxu0 0.0
        %2599 = vmatpush1.msra.mxu0 0.0
        %2600 = vmatprep.subr.mxu0 0.0
        %2601 = vmatpush1.msra.mxu0 0.0
        %2602 = vmatprep.subr.mxu0 0.0
        %2603 = vmatpush1.msra.mxu0 0.0
        %2604 = vmatprep.subr.mxu0 0.0
        %2605 = vmatpush1.msra.mxu0 0.0
        %2606 = vmatprep.subr.mxu0 0.0
        %2607 = vmatpush1.msra.mxu0 0.0
        %2608 = vmatprep.subr.mxu0 0.0
        %2609 = vmatpush1.msra.mxu0 0.0
        %2610 = vmatprep.subr.mxu0 0.0
        %2611 = vmatpush1.msra.mxu0 0.0
        %2612 = vmatprep.subr.mxu0 0.0
        %2613 = vmatpush1.msra.mxu0 0.0
        %2614 = vmatprep.subr.mxu0 0.0
        %2615 = vmatpush1.msra.mxu0 0.0
        %2616 = vmatprep.subr.mxu0 0.0
        %2617 = vmatpush1.msra.mxu0 0.0
        %2618 = vmatprep.subr.mxu0 0.0
        %2619 = vmatpush1.msra.mxu0 0.0
        %2620 = vmatprep.subr.mxu0 0.0
        %2621 = vmatpush1.msra.mxu0 0.0
        %2622 = vmatprep.subr.mxu0 0.0
        %2623 = vmatpush1.msra.mxu0 0.0
        %2624 = vmatprep.subr.mxu0 0.0
        %2625 = vmatpush1.msra.mxu0 0.0
        %2626 = vmatprep.subr.mxu0 0.0
        %2627 = vmatpush1.msra.mxu0 0.0
        %2628 = vmatprep.subr.mxu0 0.0
        %2629 = vmatpush1.msra.mxu0 0.0
        %2630 = vmatprep.subr.mxu0 0.0
        %2631 = vmatpush1.msra.mxu0 0.0
        %2632 = vmatprep.subr.mxu0 0.0
        %2633 = vmatpush1.msra.mxu0 0.0
        %2634 = vmatprep.subr.mxu0 0.0
        %2635 = vmatpush1.msra.mxu0 0.0
        %2636 = vmatprep.subr.mxu0 0.0
        %2637 = vmatpush1.msra.mxu0 0.0
        %2638 = vmatprep.subr.mxu0 0.0
        %2639 = vmatpush1.msra.mxu0 0.0
        %2640 = vmatprep.subr.mxu0 0.0
        %2641 = vmatpush1.msra.mxu0 0.0
        %2642 = vmatprep.mubr.f32.mxu0 0.0
        %2643 = vmatmul.mubr.f32.gmra.mrb[0].mxu0 %v2570
        %v2644 = vpop.f32.mrb[0].mxu0
        %v2645 = vadd.f32 0.0, %v2644
        %v2646 = vpop.f32.mrb[0].mxu0
        %2647 = vmatprep.mubr.f32.mxu0 0.0
        %2648 = vmatmul.mubr.f32.gmra.mrb[0].mxu0 %v2573
        %v2649 = vpop.f32.mrb[0].mxu0
        %v2650 = vadd.f32 0.0, %v2649
        %v2651 = vpop.f32.mrb[0].mxu0
        %2652 = vdwg.mxu0
        %v2653 = vld [vmem:[%s747] sm:$0xff]
        %v2654 = vld [vmem:[%s747 + $0x8] sm:$0xff]
        %v2655 = vld [vmem:[%s747 + $0x10] sm:$0xff]
        %v2656 = vld [vmem:[%s747 + $0x18] sm:$0xff]
        %v2658 = vsel %vm1869, %v2393, 0
        %v2661 = vsel %vm1869, %v2398, 0
        %2663 = vmatprep.subr.mxu0 0.0
        %2664 = vmatpush1.msra.mxu0 %v2653
        %2665 = vmatprep.subr.mxu0 0.0
        %2666 = vmatpush1.msra.mxu0 0.0
        %2667 = vmatprep.subr.mxu0 0.0
        %2668 = vmatpush1.msra.mxu0 0.0
        %2669 = vmatprep.subr.mxu0 0.0
        %2670 = vmatpush1.msra.mxu0 0.0
        %2671 = vmatprep.subr.mxu0 0.0
        %2672 = vmatpush1.msra.mxu0 0.0
        %2673 = vmatprep.subr.mxu0 0.0
        %2674 = vmatpush1.msra.mxu0 0.0
        %2675 = vmatprep.subr.mxu0 0.0
        %2676 = vmatpush1.msra.mxu0 0.0
        %2677 = vmatprep.subr.mxu0 0.0
        %2678 = vmatpush1.msra.mxu0 0.0
        %2679 = vmatprep.subr.mxu0 0.0
        %2680 = vmatpush1.msra.mxu0 0.0
        %2681 = vmatprep.subr.mxu0 0.0
        %2682 = vmatpush1.msra.mxu0 0.0
        %2683 = vmatprep.subr.mxu0 0.0
        %2684 = vmatpush1.msra.mxu0 0.0
        %2685 = vmatprep.subr.mxu0 0.0
        %2686 = vmatpush1.msra.mxu0 0.0
        %2687 = vmatprep.subr.mxu0 0.0
        %2688 = vmatpush1.msra.mxu0 0.0
        %2689 = vmatprep.subr.mxu0 0.0
        %2690 = vmatpush1.msra.mxu0 0.0
        %2691 = vmatprep.subr.mxu0 0.0
        %2692 = vmatpush1.msra.mxu0 0.0
        %2693 = vmatprep.subr.mxu0 0.0
        %2694 = vmatpush1.msra.mxu0 0.0
        %2695 = vmatprep.subr.mxu0 0.0
        %2696 = vmatpush1.msra.mxu0 0.0
        %2697 = vmatprep.subr.mxu0 0.0
        %2698 = vmatpush1.msra.mxu0 0.0
        %2699 = vmatprep.subr.mxu0 0.0
        %2700 = vmatpush1.msra.mxu0 0.0
        %2701 = vmatprep.subr.mxu0 0.0
        %2702 = vmatpush1.msra.mxu0 0.0
        %2703 = vmatprep.subr.mxu0 0.0
        %2704 = vmatpush1.msra.mxu0 0.0
        %2705 = vmatprep.subr.mxu0 0.0
        %2706 = vmatpush1.msra.mxu0 0.0
        %2707 = vmatprep.subr.mxu0 0.0
        %2708 = vmatpush1.msra.mxu0 0.0
        %2709 = vmatprep.subr.mxu0 0.0
        %2710 = vmatpush1.msra.mxu0 0.0
        %2711 = vmatprep.subr.mxu0 0.0
        %2712 = vmatpush1.msra.mxu0 0.0
        %2713 = vmatprep.subr.mxu0 0.0
        %2714 = vmatpush1.msra.mxu0 0.0
        %2715 = vmatprep.subr.mxu0 0.0
        %2716 = vmatpush1.msra.mxu0 0.0
        %2717 = vmatprep.subr.mxu0 0.0
        %2718 = vmatpush1.msra.mxu0 0.0
        %2719 = vmatprep.subr.mxu0 0.0
        %2720 = vmatpush1.msra.mxu0 0.0
        %2721 = vmatprep.subr.mxu0 0.0
        %2722 = vmatpush1.msra.mxu0 0.0
        %2723 = vmatprep.subr.mxu0 0.0
        %2724 = vmatpush1.msra.mxu0 0.0
        %2725 = vmatprep.subr.mxu0 0.0
        %2726 = vmatpush1.msra.mxu0 0.0
        %2727 = vmatprep.mubr.f32.mxu0 0.0
        %2728 = vmatmul.mubr.f32.gmra.mrb[0].mxu0 %v2658
        %v2729 = vpop.f32.mrb[0].mxu0
        %v2730 = vadd.f32 0.0, %v2729
        %v2731 = vpop.f32.mrb[0].mxu0
        %2732 = vmatprep.mubr.f32.mxu0 0.0
        %2733 = vmatmul.mubr.f32.gmra.mrb[0].mxu0 %v2661
        %v2734 = vpop.f32.mrb[0].mxu0
        %v2735 = vadd.f32 0.0, %v2734
        %v2736 = vpop.f32.mrb[0].mxu0
        %2737 = vdwg.mxu0
        %v2739 = vsel %vm1869, %v2477, 0
        %v2742 = vsel %vm1869, %v2482, 0
        %2744 = vmatprep.subr.mxu0 0.0
        %2745 = vmatpush1.msra.mxu0 %v2654
        %2746 = vmatprep.subr.mxu0 0.0
        %2747 = vmatpush1.msra.mxu0 0.0
        %2748 = vmatprep.subr.mxu0 0.0
        %2749 = vmatpush1.msra.mxu0 0.0
        %2750 = vmatprep.subr.mxu0 0.0
        %2751 = vmatpush1.msra.mxu0 0.0
        %2752 = vmatprep.subr.mxu0 0.0
        %2753 = vmatpush1.msra.mxu0 0.0
        %2754 = vmatprep.subr.mxu0 0.0
        %2755 = vmatpush1.msra.mxu0 0.0
        %2756 = vmatprep.subr.mxu0 0.0
        %2757 = vmatpush1.msra.mxu0 0.0
        %2758 = vmatprep.subr.mxu0 0.0
        %2759 = vmatpush1.msra.mxu0 0.0
        %2760 = vmatprep.subr.mxu0 0.0
        %2761 = vmatpush1.msra.mxu0 0.0
        %2762 = vmatprep.subr.mxu0 0.0
        %2763 = vmatpush1.msra.mxu0 0.0
        %2764 = vmatprep.subr.mxu0 0.0
        %2765 = vmatpush1.msra.mxu0 0.0
        %2766 = vmatprep.subr.mxu0 0.0
        %2767 = vmatpush1.msra.mxu0 0.0
        %2768 = vmatprep.subr.mxu0 0.0
        %2769 = vmatpush1.msra.mxu0 0.0
        %2770 = vmatprep.subr.mxu0 0.0
        %2771 = vmatpush1.msra.mxu0 0.0
        %2772 = vmatprep.subr.mxu0 0.0
        %2773 = vmatpush1.msra.mxu0 0.0
        %2774 = vmatprep.subr.mxu0 0.0
        %2775 = vmatpush1.msra.mxu0 0.0
        %2776 = vmatprep.subr.mxu0 0.0
        %2777 = vmatpush1.msra.mxu0 0.0
        %2778 = vmatprep.subr.mxu0 0.0
        %2779 = vmatpush1.msra.mxu0 0.0
        %2780 = vmatprep.subr.mxu0 0.0
        %2781 = vmatpush1.msra.mxu0 0.0
        %2782 = vmatprep.subr.mxu0 0.0
        %2783 = vmatpush1.msra.mxu0 0.0
        %2784 = vmatprep.subr.mxu0 0.0
        %2785 = vmatpush1.msra.mxu0 0.0
        %2786 = vmatprep.subr.mxu0 0.0
        %2787 = vmatpush1.msra.mxu0 0.0
        %2788 = vmatprep.subr.mxu0 0.0
        %2789 = vmatpush1.msra.mxu0 0.0
        %2790 = vmatprep.subr.mxu0 0.0
        %2791 = vmatpush1.msra.mxu0 0.0
        %2792 = vmatprep.subr.mxu0 0.0
        %2793 = vmatpush1.msra.mxu0 0.0
        %2794 = vmatprep.subr.mxu0 0.0
        %2795 = vmatpush1.msra.mxu0 0.0
        %2796 = vmatprep.subr.mxu0 0.0
        %2797 = vmatpush1.msra.mxu0 0.0
        %2798 = vmatprep.subr.mxu0 0.0
        %2799 = vmatpush1.msra.mxu0 0.0
        %2800 = vmatprep.subr.mxu0 0.0
        %2801 = vmatpush1.msra.mxu0 0.0
        %2802 = vmatprep.subr.mxu0 0.0
        %2803 = vmatpush1.msra.mxu0 0.0
        %2804 = vmatprep.subr.mxu0 0.0
        %2805 = vmatpush1.msra.mxu0 0.0
        %2806 = vmatprep.subr.mxu0 0.0
        %2807 = vmatpush1.msra.mxu0 0.0
        %2808 = vmatprep.mubr.f32.mxu0 0.0
        %2809 = vmatmul.mubr.f32.gmra.mrb[0].mxu0 %v2739
        %v2810 = vpop.f32.mrb[0].mxu0
        %v2811 = vadd.f32 0.0, %v2810
        %v2812 = vpop.f32.mrb[0].mxu0
        %2813 = vmatprep.mubr.f32.mxu0 0.0
        %2814 = vmatmul.mubr.f32.gmra.mrb[0].mxu0 %v2742
        %v2815 = vpop.f32.mrb[0].mxu0
        %v2816 = vadd.f32 0.0, %v2815
        %v2817 = vpop.f32.mrb[0].mxu0
        %2818 = vdwg.mxu0
        %v2820 = vsel %vm1869, %v2561, 0
        %v2823 = vsel %vm1869, %v2566, 0
        %2825 = vmatprep.subr.mxu0 0.0
        %2826 = vmatpush1.msra.mxu0 %v2655
        %2827 = vmatprep.subr.mxu0 0.0
        %2828 = vmatpush1.msra.mxu0 0.0
        %2829 = vmatprep.subr.mxu0 0.0
        %2830 = vmatpush1.msra.mxu0 0.0
        %2831 = vmatprep.subr.mxu0 0.0
        %2832 = vmatpush1.msra.mxu0 0.0
        %2833 = vmatprep.subr.mxu0 0.0
        %2834 = vmatpush1.msra.mxu0 0.0
        %2835 = vmatprep.subr.mxu0 0.0
        %2836 = vmatpush1.msra.mxu0 0.0
        %2837 = vmatprep.subr.mxu0 0.0
        %2838 = vmatpush1.msra.mxu0 0.0
        %2839 = vmatprep.subr.mxu0 0.0
        %2840 = vmatpush1.msra.mxu0 0.0
        %2841 = vmatprep.subr.mxu0 0.0
        %2842 = vmatpush1.msra.mxu0 0.0
        %2843 = vmatprep.subr.mxu0 0.0
        %2844 = vmatpush1.msra.mxu0 0.0
        %2845 = vmatprep.subr.mxu0 0.0
        %2846 = vmatpush1.msra.mxu0 0.0
        %2847 = vmatprep.subr.mxu0 0.0
        %2848 = vmatpush1.msra.mxu0 0.0
        %2849 = vmatprep.subr.mxu0 0.0
        %2850 = vmatpush1.msra.mxu0 0.0
        %2851 = vmatprep.subr.mxu0 0.0
        %2852 = vmatpush1.msra.mxu0 0.0
        %2853 = vmatprep.subr.mxu0 0.0
        %2854 = vmatpush1.msra.mxu0 0.0
        %2855 = vmatprep.subr.mxu0 0.0
        %2856 = vmatpush1.msra.mxu0 0.0
        %2857 = vmatprep.subr.mxu0 0.0
        %2858 = vmatpush1.msra.mxu0 0.0
        %2859 = vmatprep.subr.mxu0 0.0
        %2860 = vmatpush1.msra.mxu0 0.0
        %2861 = vmatprep.subr.mxu0 0.0
        %2862 = vmatpush1.msra.mxu0 0.0
        %2863 = vmatprep.subr.mxu0 0.0
        %2864 = vmatpush1.msra.mxu0 0.0
        %2865 = vmatprep.subr.mxu0 0.0
        %2866 = vmatpush1.msra.mxu0 0.0
        %2867 = vmatprep.subr.mxu0 0.0
        %2868 = vmatpush1.msra.mxu0 0.0
        %2869 = vmatprep.subr.mxu0 0.0
        %2870 = vmatpush1.msra.mxu0 0.0
        %2871 = vmatprep.subr.mxu0 0.0
        %2872 = vmatpush1.msra.mxu0 0.0
        %2873 = vmatprep.subr.mxu0 0.0
        %2874 = vmatpush1.msra.mxu0 0.0
        %2875 = vmatprep.subr.mxu0 0.0
        %2876 = vmatpush1.msra.mxu0 0.0
        %2877 = vmatprep.subr.mxu0 0.0
        %2878 = vmatpush1.msra.mxu0 0.0
        %2879 = vmatprep.subr.mxu0 0.0
        %2880 = vmatpush1.msra.mxu0 0.0
        %2881 = vmatprep.subr.mxu0 0.0
        %2882 = vmatpush1.msra.mxu0 0.0
        %2883 = vmatprep.subr.mxu0 0.0
        %2884 = vmatpush1.msra.mxu0 0.0
        %2885 = vmatprep.subr.mxu0 0.0
        %2886 = vmatpush1.msra.mxu0 0.0
        %2887 = vmatprep.subr.mxu0 0.0
        %2888 = vmatpush1.msra.mxu0 0.0
        %2889 = vmatprep.mubr.f32.mxu0 0.0
        %2890 = vmatmul.mubr.f32.gmra.mrb[0].mxu0 %v2820
        %v2891 = vpop.f32.mrb[0].mxu0
        %v2892 = vadd.f32 0.0, %v2891
        %v2893 = vpop.f32.mrb[0].mxu0
        %2894 = vmatprep.mubr.f32.mxu0 0.0
        %2895 = vmatmul.mubr.f32.gmra.mrb[0].mxu0 %v2823
        %v2896 = vpop.f32.mrb[0].mxu0
        %v2897 = vadd.f32 0.0, %v2896
        %v2898 = vpop.f32.mrb[0].mxu0
        %2899 = vdwg.mxu0
        %v2901 = vsel %vm1869, %v2645, 0
        %v2904 = vsel %vm1869, %v2650, 0
        %2906 = vmatprep.subr.mxu0 0.0
        %2907 = vmatpush1.msra.mxu0 %v2656
        %2908 = vmatprep.subr.mxu0 0.0
        %2909 = vmatpush1.msra.mxu0 0.0
        %2910 = vmatprep.subr.mxu0 0.0
        %2911 = vmatpush1.msra.mxu0 0.0
        %2912 = vmatprep.subr.mxu0 0.0
        %2913 = vmatpush1.msra.mxu0 0.0
        %2914 = vmatprep.subr.mxu0 0.0
        %2915 = vmatpush1.msra.mxu0 0.0
        %2916 = vmatprep.subr.mxu0 0.0
        %2917 = vmatpush1.msra.mxu0 0.0
        %2918 = vmatprep.subr.mxu0 0.0
        %2919 = vmatpush1.msra.mxu0 0.0
        %2920 = vmatprep.subr.mxu0 0.0
        %2921 = vmatpush1.msra.mxu0 0.0
        %2922 = vmatprep.subr.mxu0 0.0
        %2923 = vmatpush1.msra.mxu0 0.0
        %2924 = vmatprep.subr.mxu0 0.0
        %2925 = vmatpush1.msra.mxu0 0.0
        %2926 = vmatprep.subr.mxu0 0.0
        %2927 = vmatpush1.msra.mxu0 0.0
        %2928 = vmatprep.subr.mxu0 0.0
        %2929 = vmatpush1.msra.mxu0 0.0
        %2930 = vmatprep.subr.mxu0 0.0
        %2931 = vmatpush1.msra.mxu0 0.0
        %2932 = vmatprep.subr.mxu0 0.0
        %2933 = vmatpush1.msra.mxu0 0.0
        %2934 = vmatprep.subr.mxu0 0.0
        %2935 = vmatpush1.msra.mxu0 0.0
        %2936 = vmatprep.subr.mxu0 0.0
        %2937 = vmatpush1.msra.mxu0 0.0
        %2938 = vmatprep.subr.mxu0 0.0
        %2939 = vmatpush1.msra.mxu0 0.0
        %2940 = vmatprep.subr.mxu0 0.0
        %2941 = vmatpush1.msra.mxu0 0.0
        %2942 = vmatprep.subr.mxu0 0.0
        %2943 = vmatpush1.msra.mxu0 0.0
        %2944 = vmatprep.subr.mxu0 0.0
        %2945 = vmatpush1.msra.mxu0 0.0
        %2946 = vmatprep.subr.mxu0 0.0
        %2947 = vmatpush1.msra.mxu0 0.0
        %2948 = vmatprep.subr.mxu0 0.0
        %2949 = vmatpush1.msra.mxu0 0.0
        %2950 = vmatprep.subr.mxu0 0.0
        %2951 = vmatpush1.msra.mxu0 0.0
        %2952 = vmatprep.subr.mxu0 0.0
        %2953 = vmatpush1.msra.mxu0 0.0
        %2954 = vmatprep.subr.mxu0 0.0
        %2955 = vmatpush1.msra.mxu0 0.0
        %2956 = vmatprep.subr.mxu0 0.0
        %2957 = vmatpush1.msra.mxu0 0.0
        %2958 = vmatprep.subr.mxu0 0.0
        %2959 = vmatpush1.msra.mxu0 0.0
        %2960 = vmatprep.subr.mxu0 0.0
        %2961 = vmatpush1.msra.mxu0 0.0
        %2962 = vmatprep.subr.mxu0 0.0
        %2963 = vmatpush1.msra.mxu0 0.0
        %2964 = vmatprep.subr.mxu0 0.0
        %2965 = vmatpush1.msra.mxu0 0.0
        %2966 = vmatprep.subr.mxu0 0.0
        %2967 = vmatpush1.msra.mxu0 0.0
        %2968 = vmatprep.subr.mxu0 0.0
        %2969 = vmatpush1.msra.mxu0 0.0
        %2970 = vmatprep.mubr.f32.mxu0 0.0
        %2971 = vmatmul.mubr.f32.gmra.mrb[0].mxu0 %v2901
        %v2972 = vpop.f32.mrb[0].mxu0
        %v2973 = vadd.f32 0.0, %v2972
        %v2974 = vpop.f32.mrb[0].mxu0
        %2975 = vmatprep.mubr.f32.mxu0 0.0
        %2976 = vmatmul.mubr.f32.gmra.mrb[0].mxu0 %v2904
        %v2977 = vpop.f32.mrb[0].mxu0
        %v2978 = vadd.f32 0.0, %v2977
        %v2979 = vpop.f32.mrb[0].mxu0
        %2980 = vdwg.mxu0
        %v2981 = vsel %vm870, %v2730, 0.0
        %v2982 = vsel %vm870, %v2811, 0.0
        %v2983 = vadd.f32 %v2981, %v2982
        %v2984 = vsel %vm870, %v2892, 0.0
        %v2985 = vadd.f32 %v2983, %v2984
        %v2986 = vsel %vm870, %v2973, 0.0
        %v2987 = vadd.f32 %v2985, %v2986
        %v2988 = vsel %vm874, %v2735, 0.0
        %v2989 = vsel %vm874, %v2816, 0.0
        %v2990 = vadd.f32 %v2988, %v2989
        %v2991 = vsel %vm874, %v2897, 0.0
        %v2992 = vadd.f32 %v2990, %v2991
        %v2993 = vsel %vm874, %v2978, 0.0
        %v2994 = vadd.f32 %v2992, %v2993
        %v2995 = vadd.f32 %v866, %v2987
        %v2996 = vadd.f32 %v867, %v2994
        %v2997 = vld [vmem:[%s750] sm:$0x1]
        %v2999 = vlaneseq
        %v3000 = vshrl.u32 %v2999, 7
        %v3001 = vsub.s32 0, %v3000
        %v3002 = vrot.slane %v2997, %v3001
        %v3004 = vadd.f32 %v2995, %v3002
        %v3005 = vadd.f32 %v2996, %v3002
        %v3006 = vld [vmem:[%s753] sm:$0x1]
        %v3007 = vld [vmem:[%s756] sm:$0x1]
        %v3008 = vsel %vm870, %v3004, 0.0
        %3009 = vadd.xlane.f32.xlu0 %v3008
        %v3010 = vpop.xlane.xlu0 %3009
        %v3011 = vsel %vm874, %v3005, 0.0
        %3012 = vadd.xlane.f32.xlu0 %v3011
        %v3013 = vpop.xlane.xlu0 %3012
        %v3014 = vmul.f32 %v3010, %v878
        %v3015 = vmul.f32 %v3013, %v878
        %v3016 = vsub.f32 %v3004, %v3014
        %v3017 = vsub.f32 %v3005, %v3015
        %v3018 = vmul.f32 %v3016, %v3016
        %v3019 = vmul.f32 %v3017, %v3017
        %v3020 = vsel %vm870, %v3018, 0.0
        %3021 = vadd.xlane.f32.xlu0 %v3020
        %v3022 = vpop.xlane.xlu0 %3021
        %v3023 = vsel %vm874, %v3019, 0.0
        %3024 = vadd.xlane.f32.xlu0 %v3023
        %v3025 = vpop.xlane.xlu0 %3024
        %v3026 = vmul.f32 %v3022, %v878
        %v3027 = vmul.f32 %v3025, %v878
        %v3028 = vadd.f32 %v3026, 1e-05
        %v3029 = vadd.f32 %v3027, 1e-05
        %v3030 = vrsqrt.pop %v3028
        %v3031 = vrsqrt.pop %v3029
        %v3032 = vmul.f32 %v3016, %v3030
        %v3033 = vmul.f32 %v3017, %v3031
        %v3035 = vlaneseq
        %v3036 = vshrl.u32 %v3035, 7
        %v3037 = vsub.s32 0, %v3036
        %v3038 = vrot.slane %v3006, %v3037
        %v3040 = vmul.f32 %v3032, %v3038
        %v3041 = vmul.f32 %v3033, %v3038
        %v3043 = vlaneseq
        %v3044 = vshrl.u32 %v3043, 7
        %v3045 = vsub.s32 0, %v3044
        %v3046 = vrot.slane %v3007, %v3045
        %v3048 = vadd.f32 %v3040, %v3046
        %v3049 = vadd.f32 %v3041, %v3046
        %v3050 = vld [vmem:[%s761] sm:$0xff]
        %v3051 = vld [vmem:[%s761 + $0x8] sm:$0xff]
        %v3052 = vld [vmem:[%s761 + $0x10] sm:$0xff]
        %v3053 = vld [vmem:[%s761 + $0x18] sm:$0xff]
        %v3054 = vld [vmem:[%s764] sm:$0x1]
        %v3056 = vlaneseq
        %v3057 = vshrl.u32 %v3056, 7
        %v3058 = vsub.s32 0, %v3057
        %v3059 = vrot.slane %v3054, %v3058
        %v3062 = vsel %vm870, %v3048, 0
        %v3065 = vsel %vm870, %v3049, 0
        %3067 = vmatprep.subr.mxu0 0.0
        %3068 = vmatpush1.msra.mxu0 %v3050
        %3069 = vmatprep.subr.mxu0 0.0
        %3070 = vmatpush1.msra.mxu0 %v3051
        %3071 = vmatprep.subr.mxu0 0.0
        %3072 = vmatpush1.msra.mxu0 %v3052
        %3073 = vmatprep.subr.mxu0 0.0
        %3074 = vmatpush1.msra.mxu0 %v3053
        %3075 = vmatprep.subr.mxu0 0.0
        %3076 = vmatpush1.msra.mxu0 0.0
        %3077 = vmatprep.subr.mxu0 0.0
        %3078 = vmatpush1.msra.mxu0 0.0
        %3079 = vmatprep.subr.mxu0 0.0
        %3080 = vmatpush1.msra.mxu0 0.0
        %3081 = vmatprep.subr.mxu0 0.0
        %3082 = vmatpush1.msra.mxu0 0.0
        %3083 = vmatprep.subr.mxu0 0.0
        %3084 = vmatpush1.msra.mxu0 0.0
        %3085 = vmatprep.subr.mxu0 0.0
        %3086 = vmatpush1.msra.mxu0 0.0
        %3087 = vmatprep.subr.mxu0 0.0
        %3088 = vmatpush1.msra.mxu0 0.0
        %3089 = vmatprep.subr.mxu0 0.0
        %3090 = vmatpush1.msra.mxu0 0.0
        %3091 = vmatprep.subr.mxu0 0.0
        %3092 = vmatpush1.msra.mxu0 0.0
        %3093 = vmatprep.subr.mxu0 0.0
        %3094 = vmatpush1.msra.mxu0 0.0
        %3095 = vmatprep.subr.mxu0 0.0
        %3096 = vmatpush1.msra.mxu0 0.0
        %3097 = vmatprep.subr.mxu0 0.0
        %3098 = vmatpush1.msra.mxu0 0.0
        %3099 = vmatprep.subr.mxu0 0.0
        %3100 = vmatpush1.msra.mxu0 0.0
        %3101 = vmatprep.subr.mxu0 0.0
        %3102 = vmatpush1.msra.mxu0 0.0
        %3103 = vmatprep.subr.mxu0 0.0
        %3104 = vmatpush1.msra.mxu0 0.0
        %3105 = vmatprep.subr.mxu0 0.0
        %3106 = vmatpush1.msra.mxu0 0.0
        %3107 = vmatprep.subr.mxu0 0.0
        %3108 = vmatpush1.msra.mxu0 0.0
        %3109 = vmatprep.subr.mxu0 0.0
        %3110 = vmatpush1.msra.mxu0 0.0
        %3111 = vmatprep.subr.mxu0 0.0
        %3112 = vmatpush1.msra.mxu0 0.0
        %3113 = vmatprep.subr.mxu0 0.0
        %3114 = vmatpush1.msra.mxu0 0.0
        %3115 = vmatprep.subr.mxu0 0.0
        %3116 = vmatpush1.msra.mxu0 0.0
        %3117 = vmatprep.subr.mxu0 0.0
        %3118 = vmatpush1.msra.mxu0 0.0
        %3119 = vmatprep.subr.mxu0 0.0
        %3120 = vmatpush1.msra.mxu0 0.0
        %3121 = vmatprep.subr.mxu0 0.0
        %3122 = vmatpush1.msra.mxu0 0.0
        %3123 = vmatprep.subr.mxu0 0.0
        %3124 = vmatpush1.msra.mxu0 0.0
        %3125 = vmatprep.subr.mxu0 0.0
        %3126 = vmatpush1.msra.mxu0 0.0
        %3127 = vmatprep.subr.mxu0 0.0
        %3128 = vmatpush1.msra.mxu0 0.0
        %3129 = vmatprep.subr.mxu0 0.0
        %3130 = vmatpush1.msra.mxu0 0.0
        %3131 = vmatprep.mubr.f32.mxu0 0.0
        %3132 = vmatmul.mubr.f32.gmra.mrb[0].mxu0 %v3062
        %v3133 = vpop.f32.mrb[0].mxu0
        %v3134 = vadd.f32 %v3059, %v3133
        %v3135 = vpop.f32.mrb[0].mxu0
        %3136 = vmatprep.mubr.f32.mxu0 0.0
        %3137 = vmatmul.mubr.f32.gmra.mrb[0].mxu0 %v3065
        %v3138 = vpop.f32.mrb[0].mxu0
        %v3139 = vadd.f32 %v3059, %v3138
        %v3140 = vpop.f32.mrb[0].mxu0
        %3141 = vdwg.mxu0
        %v3142 = vmax.f32 %v3134, 0.0
        %v3143 = vmax.f32 %v3139, 0.0
        %v3144 = vld [vmem:[%s769] sm:$0xff]
        %v3145 = vld [vmem:[%s769 + $0x8] sm:$0xff]
        %v3146 = vld [vmem:[%s769 + $0x10] sm:$0xff]
        %v3147 = vld [vmem:[%s769 + $0x18] sm:$0xff]
        %v3148 = vld [vmem:[%s769 + $0x20] sm:$0xff]
        %v3149 = vld [vmem:[%s769 + $0x28] sm:$0xff]
        %v3150 = vld [vmem:[%s769 + $0x30] sm:$0xff]
        %v3151 = vld [vmem:[%s769 + $0x38] sm:$0xff]
        %v3152 = vld [vmem:[%s772] sm:$0x1]
        %v3154 = vlaneseq
        %v3155 = vshrl.u32 %v3154, 7
        %v3156 = vsub.s32 0, %v3155
        %v3157 = vrot.slane %v3152, %v3156
        %vm3159 = vcmask 523264
        %v3161 = vsel %vm3159, %v3142, 0
        %v3164 = vsel %vm3159, %v3143, 0
        %3166 = vmatprep.subr.mxu0 0.0
        %3167 = vmatpush1.msra.mxu0 %v3144
        %3168 = vmatprep.subr.mxu0 0.0
        %3169 = vmatpush1.msra.mxu0 %v3145
        %3170 = vmatprep.subr.mxu0 0.0
        %3171 = vmatpush1.msra.mxu0 %v3146
        %3172 = vmatprep.subr.mxu0 0.0
        %3173 = vmatpush1.msra.mxu0 %v3147
        %3174 = vmatprep.subr.mxu0 0.0
        %3175 = vmatpush1.msra.mxu0 %v3148
        %3176 = vmatprep.subr.mxu0 0.0
        %3177 = vmatpush1.msra.mxu0 %v3149
        %3178 = vmatprep.subr.mxu0 0.0
        %3179 = vmatpush1.msra.mxu0 %v3150
        %3180 = vmatprep.subr.mxu0 0.0
        %3181 = vmatpush1.msra.mxu0 %v3151
        %3182 = vmatprep.subr.mxu0 0.0
        %3183 = vmatpush1.msra.mxu0 0.0
        %3184 = vmatprep.subr.mxu0 0.0
        %3185 = vmatpush1.msra.mxu0 0.0
        %3186 = vmatprep.subr.mxu0 0.0
        %3187 = vmatpush1.msra.mxu0 0.0
        %3188 = vmatprep.subr.mxu0 0.0
        %3189 = vmatpush1.msra.mxu0 0.0
        %3190 = vmatprep.subr.mxu0 0.0
        %3191 = vmatpush1.msra.mxu0 0.0
        %3192 = vmatprep.subr.mxu0 0.0
        %3193 = vmatpush1.msra.mxu0 0.0
        %3194 = vmatprep.subr.mxu0 0.0
        %3195 = vmatpush1.msra.mxu0 0.0
        %3196 = vmatprep.subr.mxu0 0.0
        %3197 = vmatpush1.msra.mxu0 0.0
        %3198 = vmatprep.subr.mxu0 0.0
        %3199 = vmatpush1.msra.mxu0 0.0
        %3200 = vmatprep.subr.mxu0 0.0
        %3201 = vmatpush1.msra.mxu0 0.0
        %3202 = vmatprep.subr.mxu0 0.0
        %3203 = vmatpush1.msra.mxu0 0.0
        %3204 = vmatprep.subr.mxu0 0.0
        %3205 = vmatpush1.msra.mxu0 0.0
        %3206 = vmatprep.subr.mxu0 0.0
        %3207 = vmatpush1.msra.mxu0 0.0
        %3208 = vmatprep.subr.mxu0 0.0
        %3209 = vmatpush1.msra.mxu0 0.0
        %3210 = vmatprep.subr.mxu0 0.0
        %3211 = vmatpush1.msra.mxu0 0.0
        %3212 = vmatprep.subr.mxu0 0.0
        %3213 = vmatpush1.msra.mxu0 0.0
        %3214 = vmatprep.subr.mxu0 0.0
        %3215 = vmatpush1.msra.mxu0 0.0
        %3216 = vmatprep.subr.mxu0 0.0
        %3217 = vmatpush1.msra.mxu0 0.0
        %3218 = vmatprep.subr.mxu0 0.0
        %3219 = vmatpush1.msra.mxu0 0.0
        %3220 = vmatprep.subr.mxu0 0.0
        %3221 = vmatpush1.msra.mxu0 0.0
        %3222 = vmatprep.subr.mxu0 0.0
        %3223 = vmatpush1.msra.mxu0 0.0
        %3224 = vmatprep.subr.mxu0 0.0
        %3225 = vmatpush1.msra.mxu0 0.0
        %3226 = vmatprep.subr.mxu0 0.0
        %3227 = vmatpush1.msra.mxu0 0.0
        %3228 = vmatprep.subr.mxu0 0.0
        %3229 = vmatpush1.msra.mxu0 0.0
        %3230 = vmatprep.mubr.f32.mxu0 0.0
        %3231 = vmatmul.mubr.f32.gmra.mrb[0].mxu0 %v3161
        %v3232 = vpop.f32.mrb[0].mxu0
        %v3233 = vadd.f32 %v3157, %v3232
        %v3234 = vpop.f32.mrb[0].mxu0
        %3235 = vmatprep.mubr.f32.mxu0 0.0
        %3236 = vmatmul.mubr.f32.gmra.mrb[0].mxu0 %v3164
        %v3237 = vpop.f32.mrb[0].mxu0
        %v3238 = vadd.f32 %v3157, %v3237
        %v3239 = vpop.f32.mrb[0].mxu0
        %3240 = vdwg.mxu0
        %v3241 = vadd.f32 %v3004, %v3233
        %v3242 = vadd.f32 %v3005, %v3238
        %3243 = vst.msk [vmem:[#allocation2] sm:$0xff] %vm870, %v3241
        %3244 = vst.msk [vmem:[#allocation2 + $0x8] sm:$0x1] %vm874, %v3242
        %p3245 = scmp.eq.s32.totalorder %s36, 1
        // Predicated region
        $region93: #{tpu_custom_call.1} parent=87 // pred_check
          %p3246 = pneg %p3245
        $region94: #{tpu_custom_call.1} parent=87 // pred_check_branch
          %3248 = sbr.rel (%p3246) target = $region96
        $region95: #{tpu_custom_call.1} parent=87 // pred_region
          %3249 = vst.msk [vmem:[%s717] sm:$0x1] %vm874, %v3241
        $region96: #{tpu_custom_call.1} parent=87 // pred_fallthru
          _
        %s3250 = sand.u32 %s478, 1
        %s3251 = scalar_lea.sflag [#allocation4], %s3250
        %s3252 = sand.u32 %s478, 1
        %s3253 = scalar_lea.vmem [#allocation3], %s3252
        // Predicated region
        $region97: #{tpu_custom_call.1} parent=87 // pred_check
          %p3254 = pneg %p488
        $region98: #{tpu_custom_call.1} parent=87 // pred_check_branch
          %3256 = sbr.rel (%p3254) target = $region100
        $region99: #{tpu_custom_call.1} parent=87 // pred_region
          %s3258 = ssub.s32 16, 16
          %3259 = vsyncadd %s3251, %s3258
          %s3260 = smul.addr %s35, 16
          %s3261 = scalar_lea.hbm %s17, %s3260
          %s3263 = sshll.u32 %s3253, 4
          %s3264 = int_to_ptr.vmem [resolvable:$true] %s3263
          %3266 = dma.vmem_to_hbm [thread:$0]  %s3264, 16, %s3261, %s3251
        $region100: #{tpu_custom_call.1} parent=87 // pred_fallthru
          _
      $region88: #{tpu_custom_call.1} parent=5 // pred_fallthru
        _
      %p3267 = scmp.le.s32.totalorder 2, %s26
      // Predicated region
      $region101: #{tpu_custom_call.1} parent=5 // pred_check
        %p3268 = pneg %p3267
      $region102: #{tpu_custom_call.1} parent=5 // pred_check_branch
        %3270 = sbr.rel (%p3268) target = $region104
      $region103: #{tpu_custom_call.1} parent=5 // pred_region
        %s3271 = ssub.s32 %s26, 2
        // Predicated region
        $region105: #{tpu_custom_call.1} parent=103 // pred_check
          %p3272 = pneg %p494
        $region106: #{tpu_custom_call.1} parent=103 // pred_check_branch
          %3274 = sbr.rel (%p3272) target = $region108
        $region107: #{tpu_custom_call.1} parent=103 // pred_region
          %s3275 = sand.u32 %s479, 1
          %s3276 = scalar_lea.sflag [#allocation4], %s3275
          %s3277 = sand.u32 %s479, 1
          %s3278 = scalar_lea.vmem [#allocation3], %s3277
          %3279 = dma.done %s3276, 16
        $region108: #{tpu_custom_call.1} parent=103 // pred_fallthru
          _
      $region104: #{tpu_custom_call.1} parent=5 // pred_fallthru
        _
    $region6: #{tpu_custom_call.1} parent=1 // loop_footer
      %s30 = sadd.s32 1, %s26
    $region7: #{tpu_custom_call.1} parent=1 // loop_footer_branch
      %25 = sbr.rel target = $region3
    $region8: #{tpu_custom_call.1} parent=1 // loop_exit
      _
    %3280 = vsyncpa [#allocation4], 1
    %s3281 = scalar_lea.sflag [#allocation4], 1
    %3282 = vsyncpa %s3281, 1

</llo_original>
